<compile_context>
chip_gen: v6e
topology: v6e:2x2x1
jax: 0.10.0
libtpu: 0.0.40
codegen_flags: <defaults>
</compile_context>

<pallas_src>
import jax
import jax.numpy as jnp
from jax.experimental import pallas as pl
from jax.experimental.pallas import tpu as pltpu


def _sdf_min_kernel(xyp_ref, cprj_ref, w2_ref, b2_ref, w3r_ref, b3_ref, out_ref):
    # xyp_ref : (NXY_T, H)     shared xy projection (+ b1) for this nxy tile
    # cprj_ref: (C_BLK, H)     per-curve layer-1 projection for this block
    # out_ref : (1, NXY_T) f32 running min; resident across the curve-block
    #                          axis because its index_map ignores k.
    k = pl.program_id(3)

    @pl.when(k == 0)
    def _init():
        out_ref[...] = jnp.full(out_ref.shape, jnp.inf, dtype=out_ref.dtype)

    # Layer 1: shared xy projection + per-curve offset, ReLU.  Runs in the
    # dtype the wrapper chose (bf16 on v6e/v7x, f32 on v5e).
    h1 = jnp.maximum(xyp_ref[...][None, :, :] + cprj_ref[...][:, None, :], 0)
    c_blk, nxy_t, hid = h1.shape

    # Layer 2: one big (C_BLK*NXY_T, H) @ (H, H) bf16 MXU matmul, f32 acc.
    h1_2d = h1.reshape(c_blk * nxy_t, hid).astype(w2_ref.dtype)  # no-op if bf16
    h2 = jnp.dot(h1_2d, w2_ref[...], preferred_element_type=jnp.float32)
    h2 = jnp.maximum(h2 + b2_ref[...], 0.0)

    # Layer 3 as a VPU multiply + lane reduce -> lane-dense (C_BLK, NXY_T).
    # TODO(synk): if bundle dumps show the XLU binding after the bf16 change,
    # switch to the transposed layer-2 formulation (sublane reduce instead).
    h2_3d = h2.reshape(c_blk, nxy_t, hid)
    d = jnp.sum(h2_3d * w3r_ref[...], axis=-1) + b3_ref[...]

    # Fold this curve block's min into the resident output block.
    out_ref[...] = jnp.minimum(out_ref[...], jnp.min(d, axis=0, keepdims=True))


def _vpu_has_bf16():
    """bf16 VALUs exist on v6e/v7x; v5e and earlier must stay f32 elementwise."""
    try:
        kind = jax.devices()[0].device_kind.lower()
    except Exception:
        return False
    return not any(v in kind for v in ("v2", "v3", "v4", "v5"))


def _round_up(x, m):
    return ((x + m - 1) // m) * m


def distance_calculator_forward(curves, xy, params):
    """Pallas implementation of DistanceCalculator.forward (return_mask=False)."""
    b, p, c, pts = curves.shape
    _, nxy, dxy = xy.shape
    if c < 1:
        raise ValueError("DistanceCalculator requires at least one curve (c >= 1).")

    w1, b1, w2, b2, w3, b3 = params
    hidden = w1.shape[1]

    use_bf16_ew = _vpu_has_bf16()
    ew_dtype = jnp.bfloat16 if use_bf16_ew else jnp.float32

    # ---- hoisted layer-1 halves (shared / precomputed outside the kernel) ---
    w1_xy = w1[:dxy].astype(jnp.float32)
    w1_cv = w1[dxy:].astype(jnp.float32)
    xyp = jnp.dot(xy.astype(jnp.float32), w1_xy,
                  precision=jax.lax.Precision.HIGHEST) + b1          # (b, nxy, H)
    cprj = jnp.dot(curves.astype(jnp.float32), w1_cv,
                   precision=jax.lax.Precision.HIGHEST)              # (b, p, c, H)

    # ---- padding: lane-dense nxy (multiple of 128) ---------------------------
    nxy_p = _round_up(nxy, 128)
    if nxy_p != nxy:
        xyp = jnp.pad(xyp, ((0, 0), (0, nxy_p - nxy), (0, 0)))

    # nxy tile: full (padded) extent when small, 128-multiple lane tiles when big.
    if nxy_p <= 512:
        nxy_t = nxy_p
    else:
        nxy_t = 128
        for t in (512, 256, 128):
            if nxy_p % t == 0:
                nxy_t = t
                break

    # Per-step row budget (c_blk * nxy_t): large enough to amortize the
    # ~0.35 us per-step grid overhead, small enough that h1/h2 transients stay
    # well inside scoped VMEM on every generation (v7x: 64 MiB physical).
    bytes_per_row = hidden * (8 if use_bf16_ew else 12)   # h1 (+cast) + h2
    max_rows = max(512, min(8192, (10 * 1024 * 1024) // max(bytes_per_row, 1)))

    c_blk = min(_round_up(c, 16), max(16, (max_rows // nxy_t) // 16 * 16))
    c_p = _round_up(c, c_blk)
    if c_p != c:
        # Replicate the last curve's projection: min over curves is idempotent.
        cprj = jnp.pad(cprj, ((0, 0), (0, 0), (0, c_p - c), (0, 0)), mode="edge")

    xyp = xyp.astype(ew_dtype)
    cprj = cprj.astype(ew_dtype)
    w2_b = w2.astype(jnp.bfloat16)                                   # MXU operand
    b2_f = jnp.reshape(b2, (1, hidden)).astype(jnp.float32)
    w3_row = jnp.reshape(w3, (1, hidden)).astype(jnp.float32)
    b3_f = jnp.reshape(b3, (1, 1)).astype(jnp.float32)

    # NOTE: on v7x with fully degenerate parallel extents (b = p = 1 and a
    # single nxy tile) one TensorCore idles; such shapes would need the curve
    # axis split into an extra parallel-of-2 axis + trailing jnp.minimum.
    grid = (b, nxy_p // nxy_t, p, c_p // c_blk)

    flops = int(2 * b * p * c_p * nxy_p * (hidden * hidden + hidden)
                + 4 * b * p * c_p * nxy_p * hidden)
    bytes_accessed = int(xyp.size * xyp.dtype.itemsize
                         + cprj.size * cprj.dtype.itemsize * (nxy_p // nxy_t)
                         + w2_b.size * 2
                         + (b2_f.size + w3_row.size + b3_f.size) * 4
                         + b * p * nxy_p * 4)

    out = pl.pallas_call(
        _sdf_min_kernel,
        out_shape=jax.ShapeDtypeStruct((b, p, 1, nxy_p), jnp.float32),
        grid=grid,
        in_specs=[
            # Shared xy projection: constant across (p, curve-block) -> resident.
            pl.BlockSpec((None, nxy_t, hidden), lambda i, t, j, k: (i, t, 0)),
            # Per-curve layer-1 projection block for this (b, p, curve-block).
            pl.BlockSpec((None, None, c_blk, hidden),
                         lambda i, t, j, k: (i, j, k, 0)),
            # Weights / biases: fetched once, stay resident.
            pl.BlockSpec((hidden, hidden), lambda i, t, j, k: (0, 0)),
            pl.BlockSpec((1, hidden), lambda i, t, j, k: (0, 0)),
            pl.BlockSpec((1, hidden), lambda i, t, j, k: (0, 0)),
            pl.BlockSpec((1, 1), lambda i, t, j, k: (0, 0)),
        ],
        out_specs=pl.BlockSpec((None, None, 1, nxy_t),
                               lambda i, t, j, k: (i, j, 0, t)),
        compiler_params=pltpu.CompilerParams(
            dimension_semantics=("parallel", "parallel", "parallel", "arbitrary"),
            vmem_limit_bytes=48 * 1024 * 1024),
        cost_estimate=pl.CostEstimate(flops=flops, transcendentals=0,
                                      bytes_accessed=bytes_accessed),
    )(xyp, cprj, w2_b, b2_f, w3_row, b3_f)

    return out[:, :, 0, :nxy]                                        # (b, p, nxy)


def reference_forward(curves, xy, params):
    """Pure-JAX reference mirroring the PyTorch repeat/rearrange/reduce chain."""
    b, p, c, pts = curves.shape
    _, nxy, dxy = xy.shape
    w1, b1, w2, b2, w3, b3 = params
    xy_b = jnp.broadcast_to(xy[:, None, None, :, :], (b, p, c, nxy, dxy))
    cv_b = jnp.broadcast_to(curves[:, :, :, None, :], (b, p, c, nxy, pts))
    feat = jnp.concatenate([xy_b, cv_b], axis=-1)
    hi = jax.lax.Precision.HIGHEST
    h = jnp.maximum(jnp.dot(feat, w1, precision=hi) + b1, 0.0)
    h = jnp.maximum(jnp.dot(h, w2, precision=hi) + b2, 0.0)
    d = (jnp.dot(h, w3, precision=hi) + b3)[..., 0]    # (b, p, c, nxy)
    return jnp.min(d, axis=2)                          # (b, p, nxy)


def init_params(key, d_in, hidden):
    ks = jax.random.split(key, 3)
    w1 = 0.3 * jax.random.normal(ks[0], (d_in, hidden), jnp.float32)
    b1 = jnp.zeros((1, hidden), jnp.float32)
    w2 = 0.3 * jax.random.normal(ks[1], (hidden, hidden), jnp.float32)
    b2 = jnp.zeros((1, hidden), jnp.float32)
    w3 = 0.3 * jax.random.normal(ks[2], (hidden, 1), jnp.float32)
    b3 = jnp.zeros((1, 1), jnp.float32)
    return (w1, b1, w2, b2, w3, b3)


def _check(curves, xy, params, shape):
    dis = jax.block_until_ready(distance_calculator_forward(curves, xy, params))
    ref = reference_forward(curves, xy, params)
    assert dis.shape == shape, dis.shape
    # bf16 layer-1 / layer-2 path vs f32 HIGHEST reference -> loose tolerance.
    assert jnp.allclose(dis, ref, rtol=5e-2, atol=5e-2), (
        float(jnp.max(jnp.abs(dis - ref))))


if __name__ == "__main__":
    key = jax.random.PRNGKey(0)

    # Case 1: cubic Bezier curves in 2D (pts = 4 control points * 2 coords = 8),
    # 2D query points — small toy shapes.
    b, p, c, pts = 2, 3, 4, 8
    nxy, dxy = 16, 2
    hidden = 32
    k1, k2, k3, k4, k5, k6 = jax.random.split(key, 6)
    curves = jax.random.uniform(k1, (b, p, c, pts), jnp.float32, -1.0, 1.0)
    xy = jax.random.uniform(k2, (b, nxy, dxy), jnp.float32, -1.0, 1.0)
    params = init_params(k3, dxy + pts, hidden)
    _check(curves, xy, params, (b, p, nxy))

    # Case 2: exercises curve-axis padding + multiple curve-block reduction
    # steps and a non-128 query count.
    b2_, p2_, c2_, nxy2 = 1, 2, 20, 300
    hidden2 = 64
    curves2 = jax.random.uniform(k4, (b2_, p2_, c2_, pts), jnp.float32, -1.0, 1.0)
    xy2 = jax.random.uniform(k5, (b2_, nxy2, dxy), jnp.float32, -1.0, 1.0)
    params2 = init_params(k6, dxy + pts, hidden2)
    _check(curves2, xy2, params2, (b2_, p2_, nxy2))

    print("KERNEL_OK")
</pallas_src>

<mosaic_0001>
module attributes {stable_mosaic.version = 11 : i64} {
  func.func @_sdf_min_kernel(%arg0: i32, %arg1: i32, %arg2: i32, %arg3: i32, %arg4: memref<1x128x32xbf16, #tpu.memory_space<vmem>>, %arg5: memref<1x1x16x32xbf16, #tpu.memory_space<vmem>>, %arg6: memref<32x32xbf16, #tpu.memory_space<vmem>>, %arg7: memref<1x32xf32, #tpu.memory_space<vmem>>, %arg8: memref<1x32xf32, #tpu.memory_space<vmem>>, %arg9: memref<1x1xf32, #tpu.memory_space<vmem>>, %arg10: memref<1x1x1x128xf32, #tpu.memory_space<vmem>>) attributes {dimension_semantics = [#tpu.dimension_semantics<parallel>, #tpu.dimension_semantics<parallel>, #tpu.dimension_semantics<parallel>, #tpu.dimension_semantics<arbitrary>], iteration_bounds = array<i64: 2, 1, 3, 1>, scalar_prefetch = 0 : i64, scratch_operands = 0 : i64, tpu.core_type = #tpu.core_type<tc>, window_params = [{transform_indices = @transform_0, window_bounds = array<i64: 1, 128, 32>}, {transform_indices = @transform_1, window_bounds = array<i64: 1, 1, 16, 32>}, {pipeline_mode = #tpu.pipeline_mode<synchronous>, transform_indices = @transform_2, window_bounds = array<i64: 32, 32>}, {pipeline_mode = #tpu.pipeline_mode<synchronous>, transform_indices = @transform_3, window_bounds = array<i64: 1, 32>}, {pipeline_mode = #tpu.pipeline_mode<synchronous>, transform_indices = @transform_4, window_bounds = array<i64: 1, 32>}, {pipeline_mode = #tpu.pipeline_mode<synchronous>, transform_indices = @transform_5, window_bounds = array<i64: 1, 1>}, {transform_indices = @transform_6, window_bounds = array<i64: 1, 1, 1, 128>}]} {
    %c0_i32 = arith.constant 0 : i32
    %0 = arith.cmpi eq, %arg3, %c0_i32 : i32
    %1 = arith.extui %0 : i1 to i32
    %c0_i32_0 = arith.constant 0 : i32
    %2 = arith.cmpi ne, %1, %c0_i32_0 : i32
    scf.if %2 {
      %cst_27 = arith.constant 0x7F800000 : f32
      %39 = vector.broadcast %cst_27 : f32 to vector<1x128xf32>
      %c0_28 = arith.constant 0 : index
      %c0_29 = arith.constant 0 : index
      %c0_30 = arith.constant 0 : index
      %c0_31 = arith.constant 0 : index
      %40 = vector.load %arg10[%c0_28, %c0_29, %c0_30, %c0_31] : memref<1x1x1x128xf32, #tpu.memory_space<vmem>>, vector<1x1x1x128xf32>
      %41 = vector.shape_cast %40 : vector<1x1x1x128xf32> to vector<1x128xf32>
      %42 = vector.shape_cast %39 : vector<1x128xf32> to vector<1x1x1x128xf32>
      tpu.vector_store %arg10[%c0_28, %c0_29, %c0_30, %c0_31], %42 {strides = array<i32>} : memref<1x1x1x128xf32, #tpu.memory_space<vmem>>, vector<1x1x1x128xf32>,
    } else {
    }
    %c0 = arith.constant 0 : index
    %c0_1 = arith.constant 0 : index
    %c0_2 = arith.constant 0 : index
    %3 = vector.load %arg4[%c0, %c0_1, %c0_2] : memref<1x128x32xbf16, #tpu.memory_space<vmem>>, vector<1x128x32xbf16>
    %4 = vector.shape_cast %3 : vector<1x128x32xbf16> to vector<128x32xbf16>
    %5 = vector.shape_cast %4 : vector<128x32xbf16> to vector<1x128x32xbf16>
    %c0_3 = arith.constant 0 : index
    %c0_4 = arith.constant 0 : index
    %c0_5 = arith.constant 0 : index
    %c0_6 = arith.constant 0 : index
    %6 = vector.load %arg5[%c0_3, %c0_4, %c0_5, %c0_6] : memref<1x1x16x32xbf16, #tpu.memory_space<vmem>>, vector<1x1x16x32xbf16>
    %7 = vector.shape_cast %6 : vector<1x1x16x32xbf16> to vector<16x32xbf16>
    %8 = vector.shape_cast %7 : vector<16x32xbf16> to vector<16x1x32xbf16>
    %9 = vector.broadcast %5 : vector<1x128x32xbf16> to vector<16x128x32xbf16>
    %10 = vector.broadcast %8 : vector<16x1x32xbf16> to vector<16x128x32xbf16>
    %11 = arith.addf %9, %10 : vector<16x128x32xbf16>
    %cst = arith.constant 0.000000e+00 : bf16
    %12 = vector.broadcast %cst : bf16 to vector<16x128x32xbf16>
    %13 = arith.maximumf %11, %12 : vector<16x128x32xbf16>
    %14 = vector.shape_cast %13 : vector<16x128x32xbf16> to vector<2048x32xbf16>
    %c0_7 = arith.constant 0 : index
    %c0_8 = arith.constant 0 : index
    %15 = vector.load %arg6[%c0_7, %c0_8] : memref<32x32xbf16, #tpu.memory_space<vmem>>, vector<32x32xbf16>
    %cst_9 = arith.constant dense<0.000000e+00> : vector<2048x32xf32>
    %16 = tpu.matmul %14, %15, %cst_9 {dimension_numbers = #tpu.dot_dimension_numbers<[1], [0], [0], [1], [0, 0, 1, 1], [], []>} : vector<2048x32xbf16>, vector<32x32xbf16>, vector<2048x32xf32> -> vector<2048x32xf32>
    %c0_10 = arith.constant 0 : index
    %c0_11 = arith.constant 0 : index
    %17 = vector.load %arg7[%c0_10, %c0_11] : memref<1x32xf32, #tpu.memory_space<vmem>>, vector<1x32xf32>
    %18 = vector.broadcast %17 : vector<1x32xf32> to vector<2048x32xf32>
    %19 = arith.addf %16, %18 : vector<2048x32xf32>
    %cst_12 = arith.constant 0.000000e+00 : f32
    %20 = vector.broadcast %cst_12 : f32 to vector<2048x32xf32>
    %21 = arith.maximumf %19, %20 : vector<2048x32xf32>
    %22 = vector.shape_cast %21 : vector<2048x32xf32> to vector<16x128x32xf32>
    %c0_13 = arith.constant 0 : index
    %c0_14 = arith.constant 0 : index
    %23 = vector.load %arg8[%c0_13, %c0_14] : memref<1x32xf32, #tpu.memory_space<vmem>>, vector<1x32xf32>
    %24 = vector.shape_cast %23 : vector<1x32xf32> to vector<1x1x32xf32>
    %25 = vector.broadcast %24 : vector<1x1x32xf32> to vector<16x128x32xf32>
    %26 = arith.mulf %22, %25 : vector<16x128x32xf32>
    %cst_15 = arith.constant dense<0.000000e+00> : vector<16x128xf32>
    %27 = vector.multi_reduction <add>, %26, %cst_15 [2] : vector<16x128x32xf32> to vector<16x128xf32>
    %c0_16 = arith.constant 0 : index
    %c0_17 = arith.constant 0 : index
    %28 = vector.load %arg9[%c0_16, %c0_17] : memref<1x1xf32, #tpu.memory_space<vmem>>, vector<1x1xf32>
    %29 = vector.broadcast %28 : vector<1x1xf32> to vector<16x128xf32>
    %30 = arith.addf %27, %29 : vector<16x128xf32>
    %c0_18 = arith.constant 0 : index
    %c0_19 = arith.constant 0 : index
    %c0_20 = arith.constant 0 : index
    %c0_21 = arith.constant 0 : index
    %31 = vector.load %arg10[%c0_18, %c0_19, %c0_20, %c0_21] : memref<1x1x1x128xf32, #tpu.memory_space<vmem>>, vector<1x1x1x128xf32>
    %32 = vector.shape_cast %31 : vector<1x1x1x128xf32> to vector<1x128xf32>
    %cst_22 = arith.constant dense<0x7F800000> : vector<128xf32>
    %33 = vector.multi_reduction <minimumf>, %30, %cst_22 [0] : vector<16x128xf32> to vector<128xf32>
    %34 = vector.shape_cast %33 : vector<128xf32> to vector<1x128xf32>
    %35 = arith.minimumf %32, %34 : vector<1x128xf32>
    %c0_23 = arith.constant 0 : index
    %c0_24 = arith.constant 0 : index
    %c0_25 = arith.constant 0 : index
    %c0_26 = arith.constant 0 : index
    %36 = vector.load %arg10[%c0_23, %c0_24, %c0_25, %c0_26] : memref<1x1x1x128xf32, #tpu.memory_space<vmem>>, vector<1x1x1x128xf32>
    %37 = vector.shape_cast %36 : vector<1x1x1x128xf32> to vector<1x128xf32>
    %38 = vector.shape_cast %35 : vector<1x128xf32> to vector<1x1x1x128xf32>
    tpu.vector_store %arg10[%c0_23, %c0_24, %c0_25, %c0_26], %38 {strides = array<i32>} : memref<1x1x1x128xf32, #tpu.memory_space<vmem>>, vector<1x1x1x128xf32>,
    return
  }
  func.func @transform_0(%arg0: i32, %arg1: i32, %arg2: i32, %arg3: i32) -> (i32, i32, i32) {
    %c0_i32 = arith.constant 0 : i32
    %c0_i32_0 = arith.constant 0 : i32
    return %arg0, %arg1, %c0_i32 : i32, i32, i32
  }
  func.func @transform_1(%arg0: i32, %arg1: i32, %arg2: i32, %arg3: i32) -> (i32, i32, i32, i32) {
    %c0_i32 = arith.constant 0 : i32
    %c0_i32_0 = arith.constant 0 : i32
    return %arg0, %arg2, %arg3, %c0_i32 : i32, i32, i32, i32
  }
  func.func @transform_2(%arg0: i32, %arg1: i32, %arg2: i32, %arg3: i32) -> (i32, i32) {
    %c0_i32 = arith.constant 0 : i32
    %c0_i32_0 = arith.constant 0 : i32
    %c0_i32_1 = arith.constant 0 : i32
    return %c0_i32, %c0_i32_0 : i32, i32
  }
  func.func @transform_3(%arg0: i32, %arg1: i32, %arg2: i32, %arg3: i32) -> (i32, i32) {
    %c0_i32 = arith.constant 0 : i32
    %c0_i32_0 = arith.constant 0 : i32
    %c0_i32_1 = arith.constant 0 : i32
    return %c0_i32, %c0_i32_0 : i32, i32
  }
  func.func @transform_4(%arg0: i32, %arg1: i32, %arg2: i32, %arg3: i32) -> (i32, i32) {
    %c0_i32 = arith.constant 0 : i32
    %c0_i32_0 = arith.constant 0 : i32
    %c0_i32_1 = arith.constant 0 : i32
    return %c0_i32, %c0_i32_0 : i32, i32
  }
  func.func @transform_5(%arg0: i32, %arg1: i32, %arg2: i32, %arg3: i32) -> (i32, i32) {
    %c0_i32 = arith.constant 0 : i32
    %c0_i32_0 = arith.constant 0 : i32
    %c0_i32_1 = arith.constant 0 : i32
    return %c0_i32, %c0_i32_0 : i32, i32
  }
  func.func @transform_6(%arg0: i32, %arg1: i32, %arg2: i32, %arg3: i32) -> (i32, i32, i32, i32) {
    %c0_i32 = arith.constant 0 : i32
    %c0_i32_0 = arith.constant 0 : i32
    return %arg0, %arg2, %c0_i32, %arg1 : i32, i32, i32, i32
  }
}

</mosaic_0001>

<llo_original>
// kernel: tpu_custom_call.1
$region0: #{tpu_custom_call.1}
  #allocation0 [shape = 'u32[]', space=smem, size = 0x4, offset = 0x4, fixed_abs, tag = 'smem constant byte address 0x4 - core index']
  #allocation1 [shape = 'u32[144,128]{1,0:T(1,128)}', space=vmem, size = 0x12000, scoped, tag = 'internal scratch']
  #allocation2 [shape = 'f32[1,1]{1,0:T(1,128)S(1)}', space=vmem, size = 0x200, scoped, tag = 'scoped memory for tpu_custom_call.1']
  %s0 = inlined_call_operand.vmem [shape: bf16[2,128,32], index: 0, kind: input, shape index: {}]
  %s1 = inlined_call_operand.vmem [shape: bf16[2,3,16,32], index: 1, kind: input, shape index: {}]
  %s2 = inlined_call_operand.vmem [shape: bf16[32,32], index: 2, kind: input, shape index: {}]
  %s3 = inlined_call_operand.vmem [shape: f32[1,32], index: 3, kind: input, shape index: {}]
  %s4 = inlined_call_operand.vmem [shape: f32[1,32], index: 4, kind: input, shape index: {}]
  %s5 = inlined_call_operand.<no memory space> [shape: f32[1,1], index: 5, kind: input, shape index: {}]
  %s6 = inlined_call_operand.hbm [shape: f32[2,3,1,128], index: 6, kind: output, shape index: {}]
  %s7 = sld [smem:[#allocation0]]
  $region61: #{tpu_custom_call.1} parent=0
    _
  %s9 = ssub.s32 1, %s7
  %s10 = scalar_select 0, %s9, %s7
  %v11 = vstv %s5
  %12 = vst [vmem:[#allocation2] sm:$0x1] %v11
  $region1: #{tpu_custom_call.1} parent=0
    #allocation3 [shape = 'u8[1024]{0}', space=vmem, size = 0x400, scoped, tag = 'output window, operand 0']
    #allocation4 [shape = 's32[2]{0}', space=sflag, size = 0x8, scoped, tag = 'scoped memory for tpu_custom_call.1']
    %13 = vsyncpa [#allocation4], 0
    %s14 = scalar_lea.sflag [#allocation4], 1
    %15 = vsyncpa %s14, 0
    loop: start=0, step=1, limit=8
    $region2: #{tpu_custom_call.1} parent=1 // loop_pre_header
      _
    $region3: #{tpu_custom_call.1} parent=1 // loop_header
      %s17 = sphi 0, %s21
      %p18 = scmp.ge.s32.totalorder %s17, 8
      %s24 = sphi 0, %s50
      %s25 = sphi 0, %s46
      %s26 = sphi 0, %s42
      %s27 = sphi 0, %s38
      %s28 = sphi 0, %s24
      %s29 = sphi 0, %s25
      %s30 = sphi 0, %s26
      %s31 = sphi 0, %s27
      %s32 = sphi 0, %s28
      %s33 = sphi 0, %s29
      %s34 = sphi 0, %s30
      %s35 = sphi 0, %s31
      %s55 = sphi 0, %s57
      %s58 = sphi 0, %s55
      %s59 = sphi 0, %s58
      %s75 = sphi 0, %s59
      %s85 = sphi 0, %s87
      %s88 = sphi 0, %s85
      %s89 = sphi 0, %s88
      %s105 = sphi 0, %s89
      %s109 = sphi 0, %s109
      %s111 = sphi 0, %s109
      %s112 = sphi 0, %s111
      %s126 = sphi 0, %s112
      %s130 = sphi 0, %s130
      %s132 = sphi 0, %s130
      %s133 = sphi 0, %s132
      %s147 = sphi 0, %s133
      %s151 = sphi 0, %s151
      %s153 = sphi 0, %s151
      %s154 = sphi 0, %s153
      %s168 = sphi 0, %s154
      %s172 = sphi 0, %s172
      %s174 = sphi 0, %s172
      %s175 = sphi 0, %s174
      %s189 = sphi 0, %s175
      %s199 = sphi 0, %s201
      %s202 = sphi 0, %s199
      %s203 = sphi 0, %s202
      %s219 = sphi 0, %s203
    $region4: #{tpu_custom_call.1} parent=1 // loop_header_branch
      %20 = sbr.rel (%p18) target = $region8
    $region5: #{tpu_custom_call.1} parent=1 // loop_body
      %s22 = ssub.s32 %s17, 1
      %s23 = ssub.s32 %s17, 2
      %s36 = sadd.s32 1, %s27
      %p37 = scmp.ge.s32.totalorder %s36, 1
      %s38 = scalar_select %p37, 0, %s36
      %s39 = sadd.s32 1, %s26
      %s40 = scalar_select %p37, %s39, %s26
      %p41 = scmp.ge.s32.totalorder %s40, 3
      %s42 = scalar_select %p41, 0, %s40
      %s43 = sadd.s32 1, %s25
      %s44 = scalar_select %p41, %s43, %s25
      %p45 = scmp.ge.s32.totalorder %s44, 1
      %s46 = scalar_select %p45, 0, %s44
      %s47 = sadd.s32 1, %s24
      %s48 = scalar_select %p45, %s47, %s24
      %p49 = scmp.ge.s32.totalorder %s48, 2
      %s50 = scalar_select %p49, 0, %s48
      %s51 = ssub.s32 %s24, %s50
      %s52 = ssub.s32 %s25, %s46
      %s53 = sor.u32 %s51, %s52
      %p54 = scmp.eq.s32.totalorder %s53, 0
      %s56 = sadd.s32 %s55, 1
      %s57 = scalar_select %p54, %s55, %s56
      %p60 = pneg %p54
      %p61 = scmp.eq.s32.totalorder %s17, 5
      %p62 = por %p60, %p61
      %p63 = scmp.ne.s32.totalorder %s55, %s58
      %p64 = scmp.eq.s32.totalorder %s17, 0
      %p65 = por %p63, %p64
      %p66 = scmp.ne.s32.totalorder %s55, %s58
      %p67 = scmp.eq.s32.totalorder %s22, 5
      %p68 = por %p66, %p67
      %p69 = scmp.ne.s32.totalorder %s58, %s59
      %p70 = scmp.eq.s32.totalorder %s22, 0
      %p71 = por %p69, %p70
      %p72 = scmp.ne.s32.totalorder %s58, %s59
      %p73 = scmp.eq.s32.totalorder %s23, 5
      %p74 = por %p72, %p73
      %p76 = scmp.ne.s32.totalorder %s59, %s75
      %p77 = scmp.eq.s32.totalorder %s23, 0
      %p78 = por %p76, %p77
      %s79 = ssub.s32 %s24, %s50
      %s80 = ssub.s32 %s26, %s42
      %s81 = sor.u32 %s79, %s80
      %s82 = ssub.s32 %s27, %s38
      %s83 = sor.u32 %s81, %s82
      %p84 = scmp.eq.s32.totalorder %s83, 0
      %s86 = sadd.s32 %s85, 1
      %s87 = scalar_select %p84, %s85, %s86
      %p90 = pneg %p84
      %p91 = scmp.eq.s32.totalorder %s17, 5
      %p92 = por %p90, %p91
      %p93 = scmp.ne.s32.totalorder %s85, %s88
      %p94 = scmp.eq.s32.totalorder %s17, 0
      %p95 = por %p93, %p94
      %p96 = scmp.ne.s32.totalorder %s85, %s88
      %p97 = scmp.eq.s32.totalorder %s22, 5
      %p98 = por %p96, %p97
      %p99 = scmp.ne.s32.totalorder %s88, %s89
      %p100 = scmp.eq.s32.totalorder %s22, 0
      %p101 = por %p99, %p100
      %p102 = scmp.ne.s32.totalorder %s88, %s89
      %p103 = scmp.eq.s32.totalorder %s23, 5
      %p104 = por %p102, %p103
      %p106 = scmp.ne.s32.totalorder %s89, %s105
      %p107 = scmp.eq.s32.totalorder %s23, 0
      %p108 = por %p106, %p107
      %s110 = sadd.s32 %s109, 1
      %p113 = scmp.eq.s32.totalorder %s17, 5
      %p114 = scmp.ne.s32.totalorder %s109, %s111
      %p115 = scmp.eq.s32.totalorder %s17, 0
      %p116 = por %p114, %p115
      %p117 = scmp.ne.s32.totalorder %s109, %s111
      %p118 = scmp.eq.s32.totalorder %s22, 5
      %p119 = por %p117, %p118
      %p120 = scmp.ne.s32.totalorder %s111, %s112
      %p121 = scmp.eq.s32.totalorder %s22, 0
      %p122 = por %p120, %p121
      %p123 = scmp.ne.s32.totalorder %s111, %s112
      %p124 = scmp.eq.s32.totalorder %s23, 5
      %p125 = por %p123, %p124
      %p127 = scmp.ne.s32.totalorder %s112, %s126
      %p128 = scmp.eq.s32.totalorder %s23, 0
      %p129 = por %p127, %p128
      %s131 = sadd.s32 %s130, 1
      %p134 = scmp.eq.s32.totalorder %s17, 5
      %p135 = scmp.ne.s32.totalorder %s130, %s132
      %p136 = scmp.eq.s32.totalorder %s17, 0
      %p137 = por %p135, %p136
      %p138 = scmp.ne.s32.totalorder %s130, %s132
      %p139 = scmp.eq.s32.totalorder %s22, 5
      %p140 = por %p138, %p139
      %p141 = scmp.ne.s32.totalorder %s132, %s133
      %p142 = scmp.eq.s32.totalorder %s22, 0
      %p143 = por %p141, %p142
      %p144 = scmp.ne.s32.totalorder %s132, %s133
      %p145 = scmp.eq.s32.totalorder %s23, 5
      %p146 = por %p144, %p145
      %p148 = scmp.ne.s32.totalorder %s133, %s147
      %p149 = scmp.eq.s32.totalorder %s23, 0
      %p150 = por %p148, %p149
      %s152 = sadd.s32 %s151, 1
      %p155 = scmp.eq.s32.totalorder %s17, 5
      %p156 = scmp.ne.s32.totalorder %s151, %s153
      %p157 = scmp.eq.s32.totalorder %s17, 0
      %p158 = por %p156, %p157
      %p159 = scmp.ne.s32.totalorder %s151, %s153
      %p160 = scmp.eq.s32.totalorder %s22, 5
      %p161 = por %p159, %p160
      %p162 = scmp.ne.s32.totalorder %s153, %s154
      %p163 = scmp.eq.s32.totalorder %s22, 0
      %p164 = por %p162, %p163
      %p165 = scmp.ne.s32.totalorder %s153, %s154
      %p166 = scmp.eq.s32.totalorder %s23, 5
      %p167 = por %p165, %p166
      %p169 = scmp.ne.s32.totalorder %s154, %s168
      %p170 = scmp.eq.s32.totalorder %s23, 0
      %p171 = por %p169, %p170
      %s173 = sadd.s32 %s172, 1
      %p176 = scmp.eq.s32.totalorder %s17, 5
      %p177 = scmp.ne.s32.totalorder %s172, %s174
      %p178 = scmp.eq.s32.totalorder %s17, 0
      %p179 = por %p177, %p178
      %p180 = scmp.ne.s32.totalorder %s172, %s174
      %p181 = scmp.eq.s32.totalorder %s22, 5
      %p182 = por %p180, %p181
      %p183 = scmp.ne.s32.totalorder %s174, %s175
      %p184 = scmp.eq.s32.totalorder %s22, 0
      %p185 = por %p183, %p184
      %p186 = scmp.ne.s32.totalorder %s174, %s175
      %p187 = scmp.eq.s32.totalorder %s23, 5
      %p188 = por %p186, %p187
      %p190 = scmp.ne.s32.totalorder %s175, %s189
      %p191 = scmp.eq.s32.totalorder %s23, 0
      %p192 = por %p190, %p191
      %s193 = ssub.s32 %s24, %s50
      %s194 = ssub.s32 %s26, %s42
      %s195 = sor.u32 %s193, %s194
      %s196 = ssub.s32 %s25, %s46
      %s197 = sor.u32 %s195, %s196
      %p198 = scmp.eq.s32.totalorder %s197, 0
      %s200 = sadd.s32 %s199, 1
      %s201 = scalar_select %p198, %s199, %s200
      %p204 = pneg %p198
      %p205 = scmp.eq.s32.totalorder %s17, 5
      %p206 = por %p204, %p205
      %p207 = scmp.ne.s32.totalorder %s199, %s202
      %p208 = scmp.eq.s32.totalorder %s17, 0
      %p209 = por %p207, %p208
      %p210 = scmp.ne.s32.totalorder %s199, %s202
      %p211 = scmp.eq.s32.totalorder %s22, 5
      %p212 = por %p210, %p211
      %p213 = scmp.ne.s32.totalorder %s202, %s203
      %p214 = scmp.eq.s32.totalorder %s22, 0
      %p215 = por %p213, %p214
      %p216 = scmp.ne.s32.totalorder %s202, %s203
      %p217 = scmp.eq.s32.totalorder %s23, 5
      %p218 = por %p216, %p217
      %p220 = scmp.ne.s32.totalorder %s203, %s219
      %p221 = scmp.eq.s32.totalorder %s23, 0
      %p222 = por %p220, %p221
      %p223 = scmp.le.s32.totalorder 1, %s17
      %p224 = scmp.lt.s32.totalorder %s17, 7
      %p225 = pnand %p223, %p224
      %p226 = pneg %p225
      // Predicated region
      $region9: #{tpu_custom_call.1} parent=5 // pred_check
        _
      $region10: #{tpu_custom_call.1} parent=5 // pred_check_branch
        %228 = sbr.rel (%p225) target = $region12
      $region11: #{tpu_custom_call.1} parent=5 // pred_region
        %s229 = ssub.s32 %s17, 1
        // Predicated region
        $region13: #{tpu_custom_call.1} parent=11 // pred_check
          %p230 = pneg %p122
        $region14: #{tpu_custom_call.1} parent=11 // pred_check_branch
          %232 = sbr.rel (%p230) target = $region16
        $region15: #{tpu_custom_call.1} parent=11 // pred_region
          _
        $region16: #{tpu_custom_call.1} parent=11 // pred_fallthru
          _
        // Predicated region
        $region17: #{tpu_custom_call.1} parent=11 // pred_check
          %p233 = pneg %p143
        $region18: #{tpu_custom_call.1} parent=11 // pred_check_branch
          %235 = sbr.rel (%p233) target = $region20
        $region19: #{tpu_custom_call.1} parent=11 // pred_region
          _
        $region20: #{tpu_custom_call.1} parent=11 // pred_fallthru
          _
        // Predicated region
        $region21: #{tpu_custom_call.1} parent=11 // pred_check
          %p236 = pneg %p164
        $region22: #{tpu_custom_call.1} parent=11 // pred_check_branch
          %238 = sbr.rel (%p236) target = $region24
        $region23: #{tpu_custom_call.1} parent=11 // pred_region
          _
        $region24: #{tpu_custom_call.1} parent=11 // pred_fallthru
          _
        // Predicated region
        $region25: #{tpu_custom_call.1} parent=11 // pred_check
          %p239 = pneg %p185
        $region26: #{tpu_custom_call.1} parent=11 // pred_check_branch
          %241 = sbr.rel (%p239) target = $region28
        $region27: #{tpu_custom_call.1} parent=11 // pred_region
          _
        $region28: #{tpu_custom_call.1} parent=11 // pred_fallthru
          _
      $region12: #{tpu_custom_call.1} parent=5 // pred_fallthru
        _
      %p242 = scmp.lt.s32.totalorder %s17, 6
      // Predicated region
      $region29: #{tpu_custom_call.1} parent=5 // pred_check
        %p243 = pneg %p242
      $region30: #{tpu_custom_call.1} parent=5 // pred_check_branch
        %245 = sbr.rel (%p243) target = $region32
      $region31: #{tpu_custom_call.1} parent=5 // pred_region
        // Predicated region
        $region33: #{tpu_custom_call.1} parent=31 // pred_check
          %p246 = pneg %p65
        $region34: #{tpu_custom_call.1} parent=31 // pred_check_branch
          %248 = sbr.rel (%p246) target = $region36
        $region35: #{tpu_custom_call.1} parent=31 // pred_region
          %s249 = smul.u32 16, %s25
          %p250 = scmp.lt.s32.totalorder %s24, 1
          %s251 = scalar_select %p250, %s24, 1
          %p252 = scmp.lt.s32.totalorder %s249, 15
          %s253 = scalar_select %p252, %s249, 15
          %s254 = smul.addr %s251, 16
          %s255 = sadd.s32 %s253, %s254
          %s256 = smul.addr %s255, 4
          %s257 = scalar_lea.vmem %s0, %s256
          %s258 = smul.u32 16, %s25
        $region36: #{tpu_custom_call.1} parent=31 // pred_fallthru
          _
        // Predicated region
        $region37: #{tpu_custom_call.1} parent=31 // pred_check
          %p259 = pneg %p95
        $region38: #{tpu_custom_call.1} parent=31 // pred_check_branch
          %261 = sbr.rel (%p259) target = $region40
        $region39: #{tpu_custom_call.1} parent=31 // pred_region
          %s262 = smul.u32 2, %s27
          %p263 = scmp.lt.s32.totalorder %s24, 1
          %s264 = scalar_select %p263, %s24, 1
          %p265 = scmp.lt.s32.totalorder %s26, 2
          %s266 = scalar_select %p265, %s26, 2
          %p267 = scmp.lt.s32.totalorder %s262, 1
          %s268 = scalar_select %p267, %s262, 1
          %s269 = smul.addr %s266, 2
          %s270 = sadd.s32 %s268, %s269
          %s271 = smul.addr %s264, 6
          %s272 = sadd.s32 %s270, %s271
          %s273 = smul.addr %s272, 4
          %s274 = scalar_lea.vmem %s1, %s273
          %s275 = smul.u32 2, %s27
        $region40: #{tpu_custom_call.1} parent=31 // pred_fallthru
          _
      $region32: #{tpu_custom_call.1} parent=5 // pred_fallthru
        _
      %p276 = scmp.le.s32.totalorder 1, %s17
      %p277 = scmp.lt.s32.totalorder %s17, 7
      %p278 = pnand %p276, %p277
      %p279 = pneg %p278
      // Predicated region
      $region41: #{tpu_custom_call.1} parent=5 // pred_check
        _
      $region42: #{tpu_custom_call.1} parent=5 // pred_check_branch
        %281 = sbr.rel (%p278) target = $region44
      $region43: #{tpu_custom_call.1} parent=5 // pred_region
        %s282 = ssub.s32 %s17, 1
        %s283 = smul.u32 16, %s29
        %p284 = scmp.lt.s32.totalorder %s28, 1
        %s285 = scalar_select %p284, %s28, 1
        %p286 = scmp.lt.s32.totalorder %s283, 15
        %s287 = scalar_select %p286, %s283, 15
        %s288 = smul.addr %s285, 16
        %s289 = sadd.s32 %s287, %s288
        %s290 = smul.addr %s289, 4
        %s291 = scalar_lea.vmem %s0, %s290
        %p292 = pneg %p71
        %p293 = pneg %p68
        %s294 = smul.u32 2, %s31
        %p295 = scmp.lt.s32.totalorder %s28, 1
        %s296 = scalar_select %p295, %s28, 1
        %p297 = scmp.lt.s32.totalorder %s30, 2
        %s298 = scalar_select %p297, %s30, 2
        %p299 = scmp.lt.s32.totalorder %s294, 1
        %s300 = scalar_select %p299, %s294, 1
        %s301 = smul.addr %s298, 2
        %s302 = sadd.s32 %s300, %s301
        %s303 = smul.addr %s296, 6
        %s304 = sadd.s32 %s302, %s303
        %s305 = smul.addr %s304, 4
        %s306 = scalar_lea.vmem %s1, %s305
        %p307 = pneg %p101
        %p308 = pneg %p98
        %p309 = pneg %p122
        %p310 = pneg %p119
        %p311 = pneg %p143
        %p312 = pneg %p140
        %p313 = pneg %p164
        %p314 = pneg %p161
        %p315 = pneg %p185
        %p316 = pneg %p182
        %p317 = pneg %p215
        %p318 = pneg %p212
        %s319 = sand.u32 %s202, 1
        %s320 = scalar_lea.sflag [#allocation4], %s319
        %s321 = sand.u32 %s202, 1
        %s322 = scalar_lea.vmem [#allocation3], %s321
        %s323 = smul.u32 16, %s29
        %p324 = scmp.lt.s32.totalorder %s28, 1
        %s325 = scalar_select %p324, %s28, 1
        %p326 = scmp.lt.s32.totalorder %s323, 15
        %s327 = scalar_select %p326, %s323, 15
        %s328 = smul.addr %s325, 16
        %s329 = sadd.s32 %s327, %s328
        %s330 = smul.addr %s329, 4
        %s331 = scalar_lea.vmem %s0, %s330
        %s332 = smul.u32 16, %s29
        %s333 = smul.u32 2, %s31
        %p334 = scmp.lt.s32.totalorder %s28, 1
        %s335 = scalar_select %p334, %s28, 1
        %p336 = scmp.lt.s32.totalorder %s30, 2
        %s337 = scalar_select %p336, %s30, 2
        %p338 = scmp.lt.s32.totalorder %s333, 1
        %s339 = scalar_select %p338, %s333, 1
        %s340 = smul.addr %s337, 2
        %s341 = sadd.s32 %s339, %s340
        %s342 = smul.addr %s335, 6
        %s343 = sadd.s32 %s341, %s342
        %s344 = smul.addr %s343, 4
        %s345 = scalar_lea.vmem %s1, %s344
        %s346 = smul.u32 2, %s31
        %p348 = scmp.eq.s32.totalorder %s31, 0
        // Predicated region
        $region45: #{tpu_custom_call.1} parent=43 // pred_check
          %p349 = pneg %p348
        $region46: #{tpu_custom_call.1} parent=43 // pred_check_branch
          %351 = sbr.rel (%p349) target = $region48
        $region47: #{tpu_custom_call.1} parent=43 // pred_region
          %352 = vst [vmem:[%s322] sm:$0x1] inf
        $region48: #{tpu_custom_call.1} parent=43 // pred_fallthru
          _
        %v353 = vld [vmem:[%s331] sm:$0xf]
        %v354 = vld [vmem:[%s331 + $0x4] sm:$0xf]
        %v355 = vld [vmem:[%s331 + $0x8] sm:$0xf]
        %v356 = vld [vmem:[%s331 + $0xc] sm:$0xf]
        %v357 = vld [vmem:[%s331 + $0x10] sm:$0xf]
        %v358 = vld [vmem:[%s331 + $0x14] sm:$0xf]
        %v359 = vld [vmem:[%s331 + $0x18] sm:$0xf]
        %v360 = vld [vmem:[%s331 + $0x1c] sm:$0xf]
        %v361 = vld [vmem:[%s331 + $0x20] sm:$0xf]
        %v362 = vld [vmem:[%s331 + $0x24] sm:$0xf]
        %v363 = vld [vmem:[%s331 + $0x28] sm:$0xf]
        %v364 = vld [vmem:[%s331 + $0x2c] sm:$0xf]
        %v365 = vld [vmem:[%s331 + $0x30] sm:$0xf]
        %v366 = vld [vmem:[%s331 + $0x34] sm:$0xf]
        %v367 = vld [vmem:[%s331 + $0x38] sm:$0xf]
        %v368 = vld [vmem:[%s331 + $0x3c] sm:$0xf]
        %v369 = vld [vmem:[%s345] sm:$0xf]
        %v370 = vld [vmem:[%s345 + $0x4] sm:$0xf]
        %v374 = vunpack.c.l.s4 1966171168
        %v375 = vunpack.c.0.s8 %v374
        %v376 = vlaneseq
        %v377 = vshrl.u32 %v376, 7
        %v378 = vsub.s32 %v375, %v377
        %v379 = vrot.slane %v369, %v378
        %v380 = vcombine.high %v379, %v379
        %v382 = vunpack.c.l.s4 1966171168
        %v383 = vunpack.c.0.s8 %v382
        %v384 = vlaneseq
        %v385 = vshrl.u32 %v384, 7
        %v386 = vsub.s32 %v383, %v385
        %v387 = vrot.slane %v379, %v386
        %v389 = vunpack.c.l.s4 1966171168
        %v390 = vunpack.c.0.s8 %v389
        %v391 = vlaneseq
        %v392 = vshrl.u32 %v391, 7
        %v393 = vsub.s32 %v390, %v392
        %v394 = vrot.slane %v380, %v393
        %v395 = vcombine.high %v387, %v387
        %v396 = vcombine.high %v394, %v394
        %v398 = vunpack.c.l.s4 1966171168
        %v399 = vunpack.c.0.s8 %v398
        %v400 = vlaneseq
        %v401 = vshrl.u32 %v400, 7
        %v402 = vsub.s32 %v399, %v401
        %v403 = vrot.slane %v370, %v402
        %v404 = vcombine.high %v403, %v403
        %v406 = vunpack.c.l.s4 1966171168
        %v407 = vunpack.c.0.s8 %v406
        %v408 = vlaneseq
        %v409 = vshrl.u32 %v408, 7
        %v410 = vsub.s32 %v407, %v409
        %v411 = vrot.slane %v403, %v410
        %v413 = vunpack.c.l.s4 1966171168
        %v414 = vunpack.c.0.s8 %v413
        %v415 = vlaneseq
        %v416 = vshrl.u32 %v415, 7
        %v417 = vsub.s32 %v414, %v416
        %v418 = vrot.slane %v404, %v417
        %v419 = vcombine.high %v411, %v411
        %v420 = vcombine.high %v418, %v418
        %v421 = vunpack.i.l.s16 %v387
        %v422 = vunpack.i.h.s16 %v387
        %v423 = vunpack.i.l.s16 %v394
        %v424 = vunpack.i.h.s16 %v394
        %v425 = vunpack.i.l.s16 %v395
        %v426 = vunpack.i.h.s16 %v395
        %v427 = vunpack.i.l.s16 %v396
        %v428 = vunpack.i.h.s16 %v396
        %v429 = vunpack.i.l.s16 %v411
        %v430 = vunpack.i.h.s16 %v411
        %v431 = vunpack.i.l.s16 %v418
        %v432 = vunpack.i.h.s16 %v418
        %v433 = vunpack.i.l.s16 %v419
        %v434 = vunpack.i.h.s16 %v419
        %v435 = vunpack.i.l.s16 %v420
        %v436 = vunpack.i.h.s16 %v420
        %v437 = vpack.i.b16 %v421, %v421
        %v438 = vpack.i.b16 %v422, %v422
        %v439 = vpack.i.b16 %v423, %v423
        %v440 = vpack.i.b16 %v424, %v424
        %v441 = vpack.i.b16 %v425, %v425
        %v442 = vpack.i.b16 %v426, %v426
        %v443 = vpack.i.b16 %v427, %v427
        %v444 = vpack.i.b16 %v428, %v428
        %v445 = vpack.i.b16 %v429, %v429
        %v446 = vpack.i.b16 %v430, %v430
        %v447 = vpack.i.b16 %v431, %v431
        %v448 = vpack.i.b16 %v432, %v432
        %v449 = vpack.i.b16 %v433, %v433
        %v450 = vpack.i.b16 %v434, %v434
        %v451 = vpack.i.b16 %v435, %v435
        %v452 = vpack.i.b16 %v436, %v436
        %v453 = vlaneseq
        %v454 = vshrl.u32 %v453, 7
        %v455 = vsub.s32 0, %v454
        %v456 = vrot.slane %v437, %v455
        %v457 = vlaneseq
        %v458 = vshrl.u32 %v457, 7
        %v459 = vsub.s32 0, %v458
        %v460 = vrot.slane %v438, %v459
        %v461 = vlaneseq
        %v462 = vshrl.u32 %v461, 7
        %v463 = vsub.s32 0, %v462
        %v464 = vrot.slane %v439, %v463
        %v465 = vlaneseq
        %v466 = vshrl.u32 %v465, 7
        %v467 = vsub.s32 0, %v466
        %v468 = vrot.slane %v440, %v467
        %v469 = vlaneseq
        %v470 = vshrl.u32 %v469, 7
        %v471 = vsub.s32 0, %v470
        %v472 = vrot.slane %v441, %v471
        %v473 = vlaneseq
        %v474 = vshrl.u32 %v473, 7
        %v475 = vsub.s32 0, %v474
        %v476 = vrot.slane %v442, %v475
        %v477 = vlaneseq
        %v478 = vshrl.u32 %v477, 7
        %v479 = vsub.s32 0, %v478
        %v480 = vrot.slane %v443, %v479
        %v481 = vlaneseq
        %v482 = vshrl.u32 %v481, 7
        %v483 = vsub.s32 0, %v482
        %v484 = vrot.slane %v444, %v483
        %v485 = vlaneseq
        %v486 = vshrl.u32 %v485, 7
        %v487 = vsub.s32 0, %v486
        %v488 = vrot.slane %v445, %v487
        %v489 = vlaneseq
        %v490 = vshrl.u32 %v489, 7
        %v491 = vsub.s32 0, %v490
        %v492 = vrot.slane %v446, %v491
        %v493 = vlaneseq
        %v494 = vshrl.u32 %v493, 7
        %v495 = vsub.s32 0, %v494
        %v496 = vrot.slane %v447, %v495
        %v497 = vlaneseq
        %v498 = vshrl.u32 %v497, 7
        %v499 = vsub.s32 0, %v498
        %v500 = vrot.slane %v448, %v499
        %v501 = vlaneseq
        %v502 = vshrl.u32 %v501, 7
        %v503 = vsub.s32 0, %v502
        %v504 = vrot.slane %v449, %v503
        %v505 = vlaneseq
        %v506 = vshrl.u32 %v505, 7
        %v507 = vsub.s32 0, %v506
        %v508 = vrot.slane %v450, %v507
        %v509 = vlaneseq
        %v510 = vshrl.u32 %v509, 7
        %v511 = vsub.s32 0, %v510
        %v512 = vrot.slane %v451, %v511
        %v513 = vlaneseq
        %v514 = vshrl.u32 %v513, 7
        %v515 = vsub.s32 0, %v514
        %v516 = vrot.slane %v452, %v515
        %v518 = vpack.i.b16 %v456, %v456
        %v520 = vlaneseq
        %v521 = vshrl.u32 %v520, 7
        %v522 = vsub.s32 0, %v521
        %v523 = vrot.slane %v518, %v522
        %v525 = vpack.i.b16 %v460, %v460
        %v527 = vlaneseq
        %v528 = vshrl.u32 %v527, 7
        %v529 = vsub.s32 0, %v528
        %v530 = vrot.slane %v525, %v529
        %v532 = vpack.i.b16 %v464, %v464
        %v534 = vlaneseq
        %v535 = vshrl.u32 %v534, 7
        %v536 = vsub.s32 0, %v535
        %v537 = vrot.slane %v532, %v536
        %v539 = vpack.i.b16 %v468, %v468
        %v541 = vlaneseq
        %v542 = vshrl.u32 %v541, 7
        %v543 = vsub.s32 0, %v542
        %v544 = vrot.slane %v539, %v543
        %v546 = vpack.i.b16 %v472, %v472
        %v548 = vlaneseq
        %v549 = vshrl.u32 %v548, 7
        %v550 = vsub.s32 0, %v549
        %v551 = vrot.slane %v546, %v550
        %v553 = vpack.i.b16 %v476, %v476
        %v555 = vlaneseq
        %v556 = vshrl.u32 %v555, 7
        %v557 = vsub.s32 0, %v556
        %v558 = vrot.slane %v553, %v557
        %v560 = vpack.i.b16 %v480, %v480
        %v562 = vlaneseq
        %v563 = vshrl.u32 %v562, 7
        %v564 = vsub.s32 0, %v563
        %v565 = vrot.slane %v560, %v564
        %v567 = vpack.i.b16 %v484, %v484
        %v569 = vlaneseq
        %v570 = vshrl.u32 %v569, 7
        %v571 = vsub.s32 0, %v570
        %v572 = vrot.slane %v567, %v571
        %v574 = vpack.i.b16 %v488, %v488
        %v576 = vlaneseq
        %v577 = vshrl.u32 %v576, 7
        %v578 = vsub.s32 0, %v577
        %v579 = vrot.slane %v574, %v578
        %v581 = vpack.i.b16 %v492, %v492
        %v583 = vlaneseq
        %v584 = vshrl.u32 %v583, 7
        %v585 = vsub.s32 0, %v584
        %v586 = vrot.slane %v581, %v585
        %v588 = vpack.i.b16 %v496, %v496
        %v590 = vlaneseq
        %v591 = vshrl.u32 %v590, 7
        %v592 = vsub.s32 0, %v591
        %v593 = vrot.slane %v588, %v592
        %v595 = vpack.i.b16 %v500, %v500
        %v597 = vlaneseq
        %v598 = vshrl.u32 %v597, 7
        %v599 = vsub.s32 0, %v598
        %v600 = vrot.slane %v595, %v599
        %v602 = vpack.i.b16 %v504, %v504
        %v604 = vlaneseq
        %v605 = vshrl.u32 %v604, 7
        %v606 = vsub.s32 0, %v605
        %v607 = vrot.slane %v602, %v606
        %v609 = vpack.i.b16 %v508, %v508
        %v611 = vlaneseq
        %v612 = vshrl.u32 %v611, 7
        %v613 = vsub.s32 0, %v612
        %v614 = vrot.slane %v609, %v613
        %v616 = vpack.i.b16 %v512, %v512
        %v618 = vlaneseq
        %v619 = vshrl.u32 %v618, 7
        %v620 = vsub.s32 0, %v619
        %v621 = vrot.slane %v616, %v620
        %v623 = vpack.i.b16 %v516, %v516
        %v625 = vlaneseq
        %v626 = vshrl.u32 %v625, 7
        %v627 = vsub.s32 0, %v626
        %v628 = vrot.slane %v623, %v627
        %v645 = vunpack.c.l.b16 %v523
        %v646 = vunpack.c.l.b16 %v530
        %v647 = vunpack.c.l.b16 %v537
        %v648 = vunpack.c.l.b16 %v544
        %v649 = vunpack.c.l.b16 %v551
        %v650 = vunpack.c.l.b16 %v558
        %v651 = vunpack.c.l.b16 %v565
        %v652 = vunpack.c.l.b16 %v572
        %v653 = vunpack.c.l.b16 %v579
        %v654 = vunpack.c.l.b16 %v586
        %v655 = vunpack.c.l.b16 %v593
        %v656 = vunpack.c.l.b16 %v600
        %v657 = vunpack.c.l.b16 %v607
        %v658 = vunpack.c.l.b16 %v614
        %v659 = vunpack.c.l.b16 %v621
        %v660 = vunpack.c.l.b16 %v628
        %v661 = vpack.c.b16 %v645, %v645
        %v662 = vpack.c.b16 %v646, %v646
        %v663 = vpack.c.b16 %v647, %v647
        %v664 = vpack.c.b16 %v648, %v648
        %v665 = vpack.c.b16 %v649, %v649
        %v666 = vpack.c.b16 %v650, %v650
        %v667 = vpack.c.b16 %v651, %v651
        %v668 = vpack.c.b16 %v652, %v652
        %v669 = vpack.c.b16 %v653, %v653
        %v670 = vpack.c.b16 %v654, %v654
        %v671 = vpack.c.b16 %v655, %v655
        %v672 = vpack.c.b16 %v656, %v656
        %v673 = vpack.c.b16 %v657, %v657
        %v674 = vpack.c.b16 %v658, %v658
        %v675 = vpack.c.b16 %v659, %v659
        %v676 = vpack.c.b16 %v660, %v660
        %v693 = vadd.bf16 %v353, %v661
        %v694 = vadd.bf16 %v354, %v661
        %v695 = vadd.bf16 %v355, %v661
        %v696 = vadd.bf16 %v356, %v661
        %v697 = vadd.bf16 %v357, %v661
        %v698 = vadd.bf16 %v358, %v661
        %v699 = vadd.bf16 %v359, %v661
        %v700 = vadd.bf16 %v360, %v661
        %v701 = vadd.bf16 %v361, %v661
        %v702 = vadd.bf16 %v362, %v661
        %v703 = vadd.bf16 %v363, %v661
        %v704 = vadd.bf16 %v364, %v661
        %v705 = vadd.bf16 %v365, %v661
        %v706 = vadd.bf16 %v366, %v661
        %v707 = vadd.bf16 %v367, %v661
        %v708 = vadd.bf16 %v368, %v661
        %v709 = vadd.bf16 %v353, %v662
        %v710 = vadd.bf16 %v354, %v662
        %v711 = vadd.bf16 %v355, %v662
        %v712 = vadd.bf16 %v356, %v662
        %v713 = vadd.bf16 %v357, %v662
        %v714 = vadd.bf16 %v358, %v662
        %v715 = vadd.bf16 %v359, %v662
        %v716 = vadd.bf16 %v360, %v662
        %v717 = vadd.bf16 %v361, %v662
        %v718 = vadd.bf16 %v362, %v662
        %v719 = vadd.bf16 %v363, %v662
        %v720 = vadd.bf16 %v364, %v662
        %v721 = vadd.bf16 %v365, %v662
        %v722 = vadd.bf16 %v366, %v662
        %v723 = vadd.bf16 %v367, %v662
        %v724 = vadd.bf16 %v368, %v662
        %v725 = vadd.bf16 %v353, %v663
        %v726 = vadd.bf16 %v354, %v663
        %v727 = vadd.bf16 %v355, %v663
        %v728 = vadd.bf16 %v356, %v663
        %v729 = vadd.bf16 %v357, %v663
        %v730 = vadd.bf16 %v358, %v663
        %v731 = vadd.bf16 %v359, %v663
        %v732 = vadd.bf16 %v360, %v663
        %v733 = vadd.bf16 %v361, %v663
        %v734 = vadd.bf16 %v362, %v663
        %v735 = vadd.bf16 %v363, %v663
        %v736 = vadd.bf16 %v364, %v663
        %v737 = vadd.bf16 %v365, %v663
        %v738 = vadd.bf16 %v366, %v663
        %v739 = vadd.bf16 %v367, %v663
        %v740 = vadd.bf16 %v368, %v663
        %v741 = vadd.bf16 %v353, %v664
        %v742 = vadd.bf16 %v354, %v664
        %v743 = vadd.bf16 %v355, %v664
        %v744 = vadd.bf16 %v356, %v664
        %v745 = vadd.bf16 %v357, %v664
        %v746 = vadd.bf16 %v358, %v664
        %v747 = vadd.bf16 %v359, %v664
        %v748 = vadd.bf16 %v360, %v664
        %v749 = vadd.bf16 %v361, %v664
        %v750 = vadd.bf16 %v362, %v664
        %v751 = vadd.bf16 %v363, %v664
        %v752 = vadd.bf16 %v364, %v664
        %v753 = vadd.bf16 %v365, %v664
        %v754 = vadd.bf16 %v366, %v664
        %v755 = vadd.bf16 %v367, %v664
        %v756 = vadd.bf16 %v368, %v664
        %v757 = vadd.bf16 %v353, %v665
        %v758 = vadd.bf16 %v354, %v665
        %v759 = vadd.bf16 %v355, %v665
        %v760 = vadd.bf16 %v356, %v665
        %v761 = vadd.bf16 %v357, %v665
        %v762 = vadd.bf16 %v358, %v665
        %v763 = vadd.bf16 %v359, %v665
        %v764 = vadd.bf16 %v360, %v665
        %v765 = vadd.bf16 %v361, %v665
        %v766 = vadd.bf16 %v362, %v665
        %v767 = vadd.bf16 %v363, %v665
        %v768 = vadd.bf16 %v364, %v665
        %v769 = vadd.bf16 %v365, %v665
        %v770 = vadd.bf16 %v366, %v665
        %v771 = vadd.bf16 %v367, %v665
        %v772 = vadd.bf16 %v368, %v665
        %v773 = vadd.bf16 %v353, %v666
        %v774 = vadd.bf16 %v354, %v666
        %v775 = vadd.bf16 %v355, %v666
        %v776 = vadd.bf16 %v356, %v666
        %v777 = vadd.bf16 %v357, %v666
        %v778 = vadd.bf16 %v358, %v666
        %v779 = vadd.bf16 %v359, %v666
        %v780 = vadd.bf16 %v360, %v666
        %v781 = vadd.bf16 %v361, %v666
        %v782 = vadd.bf16 %v362, %v666
        %v783 = vadd.bf16 %v363, %v666
        %v784 = vadd.bf16 %v364, %v666
        %v785 = vadd.bf16 %v365, %v666
        %v786 = vadd.bf16 %v366, %v666
        %v787 = vadd.bf16 %v367, %v666
        %v788 = vadd.bf16 %v368, %v666
        %v789 = vadd.bf16 %v353, %v667
        %v790 = vadd.bf16 %v354, %v667
        %v791 = vadd.bf16 %v355, %v667
        %v792 = vadd.bf16 %v356, %v667
        %v793 = vadd.bf16 %v357, %v667
        %v794 = vadd.bf16 %v358, %v667
        %v795 = vadd.bf16 %v359, %v667
        %v796 = vadd.bf16 %v360, %v667
        %v797 = vadd.bf16 %v361, %v667
        %v798 = vadd.bf16 %v362, %v667
        %v799 = vadd.bf16 %v363, %v667
        %v800 = vadd.bf16 %v364, %v667
        %v801 = vadd.bf16 %v365, %v667
        %v802 = vadd.bf16 %v366, %v667
        %v803 = vadd.bf16 %v367, %v667
        %v804 = vadd.bf16 %v368, %v667
        %v805 = vadd.bf16 %v353, %v668
        %v806 = vadd.bf16 %v354, %v668
        %v807 = vadd.bf16 %v355, %v668
        %v808 = vadd.bf16 %v356, %v668
        %v809 = vadd.bf16 %v357, %v668
        %v810 = vadd.bf16 %v358, %v668
        %v811 = vadd.bf16 %v359, %v668
        %v812 = vadd.bf16 %v360, %v668
        %v813 = vadd.bf16 %v361, %v668
        %v814 = vadd.bf16 %v362, %v668
        %v815 = vadd.bf16 %v363, %v668
        %v816 = vadd.bf16 %v364, %v668
        %v817 = vadd.bf16 %v365, %v668
        %v818 = vadd.bf16 %v366, %v668
        %v819 = vadd.bf16 %v367, %v668
        %v820 = vadd.bf16 %v368, %v668
        %v821 = vadd.bf16 %v353, %v669
        %v822 = vadd.bf16 %v354, %v669
        %v823 = vadd.bf16 %v355, %v669
        %v824 = vadd.bf16 %v356, %v669
        %v825 = vadd.bf16 %v357, %v669
        %v826 = vadd.bf16 %v358, %v669
        %v827 = vadd.bf16 %v359, %v669
        %v828 = vadd.bf16 %v360, %v669
        %v829 = vadd.bf16 %v361, %v669
        %v830 = vadd.bf16 %v362, %v669
        %v831 = vadd.bf16 %v363, %v669
        %v832 = vadd.bf16 %v364, %v669
        %v833 = vadd.bf16 %v365, %v669
        %v834 = vadd.bf16 %v366, %v669
        %v835 = vadd.bf16 %v367, %v669
        %v836 = vadd.bf16 %v368, %v669
        %v837 = vadd.bf16 %v353, %v670
        %v838 = vadd.bf16 %v354, %v670
        %v839 = vadd.bf16 %v355, %v670
        %v840 = vadd.bf16 %v356, %v670
        %v841 = vadd.bf16 %v357, %v670
        %v842 = vadd.bf16 %v358, %v670
        %v843 = vadd.bf16 %v359, %v670
        %v844 = vadd.bf16 %v360, %v670
        %v845 = vadd.bf16 %v361, %v670
        %v846 = vadd.bf16 %v362, %v670
        %v847 = vadd.bf16 %v363, %v670
        %v848 = vadd.bf16 %v364, %v670
        %v849 = vadd.bf16 %v365, %v670
        %v850 = vadd.bf16 %v366, %v670
        %v851 = vadd.bf16 %v367, %v670
        %v852 = vadd.bf16 %v368, %v670
        %v853 = vadd.bf16 %v353, %v671
        %v854 = vadd.bf16 %v354, %v671
        %v855 = vadd.bf16 %v355, %v671
        %v856 = vadd.bf16 %v356, %v671
        %v857 = vadd.bf16 %v357, %v671
        %v858 = vadd.bf16 %v358, %v671
        %v859 = vadd.bf16 %v359, %v671
        %v860 = vadd.bf16 %v360, %v671
        %v861 = vadd.bf16 %v361, %v671
        %v862 = vadd.bf16 %v362, %v671
        %v863 = vadd.bf16 %v363, %v671
        %v864 = vadd.bf16 %v364, %v671
        %v865 = vadd.bf16 %v365, %v671
        %v866 = vadd.bf16 %v366, %v671
        %v867 = vadd.bf16 %v367, %v671
        %v868 = vadd.bf16 %v368, %v671
        %v869 = vadd.bf16 %v353, %v672
        %v870 = vadd.bf16 %v354, %v672
        %v871 = vadd.bf16 %v355, %v672
        %v872 = vadd.bf16 %v356, %v672
        %v873 = vadd.bf16 %v357, %v672
        %v874 = vadd.bf16 %v358, %v672
        %v875 = vadd.bf16 %v359, %v672
        %v876 = vadd.bf16 %v360, %v672
        %v877 = vadd.bf16 %v361, %v672
        %v878 = vadd.bf16 %v362, %v672
        %v879 = vadd.bf16 %v363, %v672
        %v880 = vadd.bf16 %v364, %v672
        %v881 = vadd.bf16 %v365, %v672
        %v882 = vadd.bf16 %v366, %v672
        %v883 = vadd.bf16 %v367, %v672
        %v884 = vadd.bf16 %v368, %v672
        %v885 = vadd.bf16 %v353, %v673
        %v886 = vadd.bf16 %v354, %v673
        %v887 = vadd.bf16 %v355, %v673
        %v888 = vadd.bf16 %v356, %v673
        %v889 = vadd.bf16 %v357, %v673
        %v890 = vadd.bf16 %v358, %v673
        %v891 = vadd.bf16 %v359, %v673
        %v892 = vadd.bf16 %v360, %v673
        %v893 = vadd.bf16 %v361, %v673
        %v894 = vadd.bf16 %v362, %v673
        %v895 = vadd.bf16 %v363, %v673
        %v896 = vadd.bf16 %v364, %v673
        %v897 = vadd.bf16 %v365, %v673
        %v898 = vadd.bf16 %v366, %v673
        %v899 = vadd.bf16 %v367, %v673
        %v900 = vadd.bf16 %v368, %v673
        %v901 = vadd.bf16 %v353, %v674
        %v902 = vadd.bf16 %v354, %v674
        %v903 = vadd.bf16 %v355, %v674
        %v904 = vadd.bf16 %v356, %v674
        %v905 = vadd.bf16 %v357, %v674
        %v906 = vadd.bf16 %v358, %v674
        %v907 = vadd.bf16 %v359, %v674
        %v908 = vadd.bf16 %v360, %v674
        %v909 = vadd.bf16 %v361, %v674
        %v910 = vadd.bf16 %v362, %v674
        %v911 = vadd.bf16 %v363, %v674
        %v912 = vadd.bf16 %v364, %v674
        %v913 = vadd.bf16 %v365, %v674
        %v914 = vadd.bf16 %v366, %v674
        %v915 = vadd.bf16 %v367, %v674
        %v916 = vadd.bf16 %v368, %v674
        %v917 = vadd.bf16 %v353, %v675
        %v918 = vadd.bf16 %v354, %v675
        %v919 = vadd.bf16 %v355, %v675
        %v920 = vadd.bf16 %v356, %v675
        %v921 = vadd.bf16 %v357, %v675
        %v922 = vadd.bf16 %v358, %v675
        %v923 = vadd.bf16 %v359, %v675
        %v924 = vadd.bf16 %v360, %v675
        %v925 = vadd.bf16 %v361, %v675
        %v926 = vadd.bf16 %v362, %v675
        %v927 = vadd.bf16 %v363, %v675
        %v928 = vadd.bf16 %v364, %v675
        %v929 = vadd.bf16 %v365, %v675
        %v930 = vadd.bf16 %v366, %v675
        %v931 = vadd.bf16 %v367, %v675
        %v932 = vadd.bf16 %v368, %v675
        %v933 = vadd.bf16 %v353, %v676
        %v934 = vadd.bf16 %v354, %v676
        %v935 = vadd.bf16 %v355, %v676
        %v936 = vadd.bf16 %v356, %v676
        %v937 = vadd.bf16 %v357, %v676
        %v938 = vadd.bf16 %v358, %v676
        %v939 = vadd.bf16 %v359, %v676
        %v940 = vadd.bf16 %v360, %v676
        %v941 = vadd.bf16 %v361, %v676
        %v942 = vadd.bf16 %v362, %v676
        %v943 = vadd.bf16 %v363, %v676
        %v944 = vadd.bf16 %v364, %v676
        %v945 = vadd.bf16 %v365, %v676
        %v946 = vadd.bf16 %v366, %v676
        %v947 = vadd.bf16 %v367, %v676
        %v948 = vadd.bf16 %v368, %v676
        %v949 = vmax.bf16 %v693, 0
        %v950 = vmax.bf16 %v694, 0
        %v951 = vmax.bf16 %v695, 0
        %v952 = vmax.bf16 %v696, 0
        %v953 = vmax.bf16 %v697, 0
        %v954 = vmax.bf16 %v698, 0
        %v955 = vmax.bf16 %v699, 0
        %v956 = vmax.bf16 %v700, 0
        %v957 = vmax.bf16 %v701, 0
        %v958 = vmax.bf16 %v702, 0
        %v959 = vmax.bf16 %v703, 0
        %v960 = vmax.bf16 %v704, 0
        %v961 = vmax.bf16 %v705, 0
        %v962 = vmax.bf16 %v706, 0
        %v963 = vmax.bf16 %v707, 0
        %v964 = vmax.bf16 %v708, 0
        %v965 = vmax.bf16 %v709, 0
        %v966 = vmax.bf16 %v710, 0
        %v967 = vmax.bf16 %v711, 0
        %v968 = vmax.bf16 %v712, 0
        %v969 = vmax.bf16 %v713, 0
        %v970 = vmax.bf16 %v714, 0
        %v971 = vmax.bf16 %v715, 0
        %v972 = vmax.bf16 %v716, 0
        %v973 = vmax.bf16 %v717, 0
        %v974 = vmax.bf16 %v718, 0
        %v975 = vmax.bf16 %v719, 0
        %v976 = vmax.bf16 %v720, 0
        %v977 = vmax.bf16 %v721, 0
        %v978 = vmax.bf16 %v722, 0
        %v979 = vmax.bf16 %v723, 0
        %v980 = vmax.bf16 %v724, 0
        %v981 = vmax.bf16 %v725, 0
        %v982 = vmax.bf16 %v726, 0
        %v983 = vmax.bf16 %v727, 0
        %v984 = vmax.bf16 %v728, 0
        %v985 = vmax.bf16 %v729, 0
        %v986 = vmax.bf16 %v730, 0
        %v987 = vmax.bf16 %v731, 0
        %v988 = vmax.bf16 %v732, 0
        %v989 = vmax.bf16 %v733, 0
        %v990 = vmax.bf16 %v734, 0
        %v991 = vmax.bf16 %v735, 0
        %v992 = vmax.bf16 %v736, 0
        %v993 = vmax.bf16 %v737, 0
        %v994 = vmax.bf16 %v738, 0
        %v995 = vmax.bf16 %v739, 0
        %v996 = vmax.bf16 %v740, 0
        %v997 = vmax.bf16 %v741, 0
        %v998 = vmax.bf16 %v742, 0
        %v999 = vmax.bf16 %v743, 0
        %v1000 = vmax.bf16 %v744, 0
        %v1001 = vmax.bf16 %v745, 0
        %v1002 = vmax.bf16 %v746, 0
        %v1003 = vmax.bf16 %v747, 0
        %v1004 = vmax.bf16 %v748, 0
        %v1005 = vmax.bf16 %v749, 0
        %v1006 = vmax.bf16 %v750, 0
        %v1007 = vmax.bf16 %v751, 0
        %v1008 = vmax.bf16 %v752, 0
        %v1009 = vmax.bf16 %v753, 0
        %v1010 = vmax.bf16 %v754, 0
        %v1011 = vmax.bf16 %v755, 0
        %v1012 = vmax.bf16 %v756, 0
        %v1013 = vmax.bf16 %v757, 0
        %v1014 = vmax.bf16 %v758, 0
        %v1015 = vmax.bf16 %v759, 0
        %v1016 = vmax.bf16 %v760, 0
        %v1017 = vmax.bf16 %v761, 0
        %v1018 = vmax.bf16 %v762, 0
        %v1019 = vmax.bf16 %v763, 0
        %v1020 = vmax.bf16 %v764, 0
        %v1021 = vmax.bf16 %v765, 0
        %v1022 = vmax.bf16 %v766, 0
        %v1023 = vmax.bf16 %v767, 0
        %v1024 = vmax.bf16 %v768, 0
        %v1025 = vmax.bf16 %v769, 0
        %v1026 = vmax.bf16 %v770, 0
        %v1027 = vmax.bf16 %v771, 0
        %v1028 = vmax.bf16 %v772, 0
        %v1029 = vmax.bf16 %v773, 0
        %v1030 = vmax.bf16 %v774, 0
        %v1031 = vmax.bf16 %v775, 0
        %v1032 = vmax.bf16 %v776, 0
        %v1033 = vmax.bf16 %v777, 0
        %v1034 = vmax.bf16 %v778, 0
        %v1035 = vmax.bf16 %v779, 0
        %v1036 = vmax.bf16 %v780, 0
        %v1037 = vmax.bf16 %v781, 0
        %v1038 = vmax.bf16 %v782, 0
        %v1039 = vmax.bf16 %v783, 0
        %v1040 = vmax.bf16 %v784, 0
        %v1041 = vmax.bf16 %v785, 0
        %v1042 = vmax.bf16 %v786, 0
        %v1043 = vmax.bf16 %v787, 0
        %v1044 = vmax.bf16 %v788, 0
        %v1045 = vmax.bf16 %v789, 0
        %v1046 = vmax.bf16 %v790, 0
        %v1047 = vmax.bf16 %v791, 0
        %v1048 = vmax.bf16 %v792, 0
        %v1049 = vmax.bf16 %v793, 0
        %v1050 = vmax.bf16 %v794, 0
        %v1051 = vmax.bf16 %v795, 0
        %v1052 = vmax.bf16 %v796, 0
        %v1053 = vmax.bf16 %v797, 0
        %v1054 = vmax.bf16 %v798, 0
        %v1055 = vmax.bf16 %v799, 0
        %v1056 = vmax.bf16 %v800, 0
        %v1057 = vmax.bf16 %v801, 0
        %v1058 = vmax.bf16 %v802, 0
        %v1059 = vmax.bf16 %v803, 0
        %v1060 = vmax.bf16 %v804, 0
        %v1061 = vmax.bf16 %v805, 0
        %v1062 = vmax.bf16 %v806, 0
        %v1063 = vmax.bf16 %v807, 0
        %v1064 = vmax.bf16 %v808, 0
        %v1065 = vmax.bf16 %v809, 0
        %v1066 = vmax.bf16 %v810, 0
        %v1067 = vmax.bf16 %v811, 0
        %v1068 = vmax.bf16 %v812, 0
        %v1069 = vmax.bf16 %v813, 0
        %v1070 = vmax.bf16 %v814, 0
        %v1071 = vmax.bf16 %v815, 0
        %v1072 = vmax.bf16 %v816, 0
        %v1073 = vmax.bf16 %v817, 0
        %v1074 = vmax.bf16 %v818, 0
        %v1075 = vmax.bf16 %v819, 0
        %v1076 = vmax.bf16 %v820, 0
        %v1077 = vmax.bf16 %v821, 0
        %v1078 = vmax.bf16 %v822, 0
        %v1079 = vmax.bf16 %v823, 0
        %v1080 = vmax.bf16 %v824, 0
        %v1081 = vmax.bf16 %v825, 0
        %v1082 = vmax.bf16 %v826, 0
        %v1083 = vmax.bf16 %v827, 0
        %v1084 = vmax.bf16 %v828, 0
        %v1085 = vmax.bf16 %v829, 0
        %v1086 = vmax.bf16 %v830, 0
        %v1087 = vmax.bf16 %v831, 0
        %v1088 = vmax.bf16 %v832, 0
        %v1089 = vmax.bf16 %v833, 0
        %v1090 = vmax.bf16 %v834, 0
        %v1091 = vmax.bf16 %v835, 0
        %v1092 = vmax.bf16 %v836, 0
        %v1093 = vmax.bf16 %v837, 0
        %v1094 = vmax.bf16 %v838, 0
        %v1095 = vmax.bf16 %v839, 0
        %v1096 = vmax.bf16 %v840, 0
        %v1097 = vmax.bf16 %v841, 0
        %v1098 = vmax.bf16 %v842, 0
        %v1099 = vmax.bf16 %v843, 0
        %v1100 = vmax.bf16 %v844, 0
        %v1101 = vmax.bf16 %v845, 0
        %v1102 = vmax.bf16 %v846, 0
        %v1103 = vmax.bf16 %v847, 0
        %v1104 = vmax.bf16 %v848, 0
        %v1105 = vmax.bf16 %v849, 0
        %v1106 = vmax.bf16 %v850, 0
        %v1107 = vmax.bf16 %v851, 0
        %v1108 = vmax.bf16 %v852, 0
        %v1109 = vmax.bf16 %v853, 0
        %v1110 = vmax.bf16 %v854, 0
        %v1111 = vmax.bf16 %v855, 0
        %v1112 = vmax.bf16 %v856, 0
        %v1113 = vmax.bf16 %v857, 0
        %v1114 = vmax.bf16 %v858, 0
        %v1115 = vmax.bf16 %v859, 0
        %v1116 = vmax.bf16 %v860, 0
        %v1117 = vmax.bf16 %v861, 0
        %v1118 = vmax.bf16 %v862, 0
        %v1119 = vmax.bf16 %v863, 0
        %v1120 = vmax.bf16 %v864, 0
        %v1121 = vmax.bf16 %v865, 0
        %v1122 = vmax.bf16 %v866, 0
        %v1123 = vmax.bf16 %v867, 0
        %v1124 = vmax.bf16 %v868, 0
        %v1125 = vmax.bf16 %v869, 0
        %v1126 = vmax.bf16 %v870, 0
        %v1127 = vmax.bf16 %v871, 0
        %v1128 = vmax.bf16 %v872, 0
        %v1129 = vmax.bf16 %v873, 0
        %v1130 = vmax.bf16 %v874, 0
        %v1131 = vmax.bf16 %v875, 0
        %v1132 = vmax.bf16 %v876, 0
        %v1133 = vmax.bf16 %v877, 0
        %v1134 = vmax.bf16 %v878, 0
        %v1135 = vmax.bf16 %v879, 0
        %v1136 = vmax.bf16 %v880, 0
        %v1137 = vmax.bf16 %v881, 0
        %v1138 = vmax.bf16 %v882, 0
        %v1139 = vmax.bf16 %v883, 0
        %v1140 = vmax.bf16 %v884, 0
        %v1141 = vmax.bf16 %v885, 0
        %v1142 = vmax.bf16 %v886, 0
        %v1143 = vmax.bf16 %v887, 0
        %v1144 = vmax.bf16 %v888, 0
        %v1145 = vmax.bf16 %v889, 0
        %v1146 = vmax.bf16 %v890, 0
        %v1147 = vmax.bf16 %v891, 0
        %v1148 = vmax.bf16 %v892, 0
        %v1149 = vmax.bf16 %v893, 0
        %v1150 = vmax.bf16 %v894, 0
        %v1151 = vmax.bf16 %v895, 0
        %v1152 = vmax.bf16 %v896, 0
        %v1153 = vmax.bf16 %v897, 0
        %v1154 = vmax.bf16 %v898, 0
        %v1155 = vmax.bf16 %v899, 0
        %v1156 = vmax.bf16 %v900, 0
        %v1157 = vmax.bf16 %v901, 0
        %v1158 = vmax.bf16 %v902, 0
        %v1159 = vmax.bf16 %v903, 0
        %v1160 = vmax.bf16 %v904, 0
        %v1161 = vmax.bf16 %v905, 0
        %v1162 = vmax.bf16 %v906, 0
        %v1163 = vmax.bf16 %v907, 0
        %v1164 = vmax.bf16 %v908, 0
        %v1165 = vmax.bf16 %v909, 0
        %v1166 = vmax.bf16 %v910, 0
        %v1167 = vmax.bf16 %v911, 0
        %v1168 = vmax.bf16 %v912, 0
        %v1169 = vmax.bf16 %v913, 0
        %v1170 = vmax.bf16 %v914, 0
        %v1171 = vmax.bf16 %v915, 0
        %v1172 = vmax.bf16 %v916, 0
        %v1173 = vmax.bf16 %v917, 0
        %v1174 = vmax.bf16 %v918, 0
        %v1175 = vmax.bf16 %v919, 0
        %v1176 = vmax.bf16 %v920, 0
        %v1177 = vmax.bf16 %v921, 0
        %v1178 = vmax.bf16 %v922, 0
        %v1179 = vmax.bf16 %v923, 0
        %v1180 = vmax.bf16 %v924, 0
        %v1181 = vmax.bf16 %v925, 0
        %v1182 = vmax.bf16 %v926, 0
        %v1183 = vmax.bf16 %v927, 0
        %v1184 = vmax.bf16 %v928, 0
        %v1185 = vmax.bf16 %v929, 0
        %v1186 = vmax.bf16 %v930, 0
        %v1187 = vmax.bf16 %v931, 0
        %v1188 = vmax.bf16 %v932, 0
        %v1189 = vmax.bf16 %v933, 0
        %v1190 = vmax.bf16 %v934, 0
        %v1191 = vmax.bf16 %v935, 0
        %v1192 = vmax.bf16 %v936, 0
        %v1193 = vmax.bf16 %v937, 0
        %v1194 = vmax.bf16 %v938, 0
        %v1195 = vmax.bf16 %v939, 0
        %v1196 = vmax.bf16 %v940, 0
        %v1197 = vmax.bf16 %v941, 0
        %v1198 = vmax.bf16 %v942, 0
        %v1199 = vmax.bf16 %v943, 0
        %v1200 = vmax.bf16 %v944, 0
        %v1201 = vmax.bf16 %v945, 0
        %v1202 = vmax.bf16 %v946, 0
        %v1203 = vmax.bf16 %v947, 0
        %v1204 = vmax.bf16 %v948, 0
        %v1205 = vld [vmem:[%s2] sm:$0xf]
        %v1206 = vld [vmem:[%s2 + $0x4] sm:$0xf]
        %v1207 = vld [vmem:[%s2 + $0x8] sm:$0xf]
        %v1208 = vld [vmem:[%s2 + $0xc] sm:$0xf]
        %v1209 = vld [vmem:[%s3] sm:$0x1]
        %v1211 = vlaneseq
        %v1212 = vshrl.u32 %v1211, 7
        %v1213 = vsub.s32 0, %v1212
        %v1214 = vrot.slane %v1209, %v1213
        %v1472 = vunpack.c.l.b16 %v949
        %v1473 = vunpack.c.l.b16 %v950
        %v1474 = vunpack.c.l.b16 %v951
        %v1475 = vunpack.c.l.b16 %v952
        %v1476 = vunpack.c.l.b16 %v953
        %v1477 = vunpack.c.l.b16 %v954
        %v1478 = vunpack.c.l.b16 %v955
        %v1479 = vunpack.c.l.b16 %v956
        %v1480 = vunpack.c.l.b16 %v957
        %v1481 = vunpack.c.l.b16 %v958
        %v1482 = vunpack.c.l.b16 %v959
        %v1483 = vunpack.c.l.b16 %v960
        %v1484 = vunpack.c.l.b16 %v961
        %v1485 = vunpack.c.l.b16 %v962
        %v1486 = vunpack.c.l.b16 %v963
        %v1487 = vunpack.c.l.b16 %v964
        %v1488 = vunpack.c.l.b16 %v965
        %v1489 = vunpack.c.l.b16 %v966
        %v1490 = vunpack.c.l.b16 %v967
        %v1491 = vunpack.c.l.b16 %v968
        %v1492 = vunpack.c.l.b16 %v969
        %v1493 = vunpack.c.l.b16 %v970
        %v1494 = vunpack.c.l.b16 %v971
        %v1495 = vunpack.c.l.b16 %v972
        %v1496 = vunpack.c.l.b16 %v973
        %v1497 = vunpack.c.l.b16 %v974
        %v1498 = vunpack.c.l.b16 %v975
        %v1499 = vunpack.c.l.b16 %v976
        %v1500 = vunpack.c.l.b16 %v977
        %v1501 = vunpack.c.l.b16 %v978
        %v1502 = vunpack.c.l.b16 %v979
        %v1503 = vunpack.c.l.b16 %v980
        %v1504 = vunpack.c.l.b16 %v981
        %v1505 = vunpack.c.l.b16 %v982
        %v1506 = vunpack.c.l.b16 %v983
        %v1507 = vunpack.c.l.b16 %v984
        %v1508 = vunpack.c.l.b16 %v985
        %v1509 = vunpack.c.l.b16 %v986
        %v1510 = vunpack.c.l.b16 %v987
        %v1511 = vunpack.c.l.b16 %v988
        %v1512 = vunpack.c.l.b16 %v989
        %v1513 = vunpack.c.l.b16 %v990
        %v1514 = vunpack.c.l.b16 %v991
        %v1515 = vunpack.c.l.b16 %v992
        %v1516 = vunpack.c.l.b16 %v993
        %v1517 = vunpack.c.l.b16 %v994
        %v1518 = vunpack.c.l.b16 %v995
        %v1519 = vunpack.c.l.b16 %v996
        %v1520 = vunpack.c.l.b16 %v997
        %v1521 = vunpack.c.l.b16 %v998
        %v1522 = vunpack.c.l.b16 %v999
        %v1523 = vunpack.c.l.b16 %v1000
        %v1524 = vunpack.c.l.b16 %v1001
        %v1525 = vunpack.c.l.b16 %v1002
        %v1526 = vunpack.c.l.b16 %v1003
        %v1527 = vunpack.c.l.b16 %v1004
        %v1528 = vunpack.c.l.b16 %v1005
        %v1529 = vunpack.c.l.b16 %v1006
        %v1530 = vunpack.c.l.b16 %v1007
        %v1531 = vunpack.c.l.b16 %v1008
        %v1532 = vunpack.c.l.b16 %v1009
        %v1533 = vunpack.c.l.b16 %v1010
        %v1534 = vunpack.c.l.b16 %v1011
        %v1535 = vunpack.c.l.b16 %v1012
        %v1536 = vunpack.c.l.b16 %v1013
        %v1537 = vunpack.c.l.b16 %v1014
        %v1538 = vunpack.c.l.b16 %v1015
        %v1539 = vunpack.c.l.b16 %v1016
        %v1540 = vunpack.c.l.b16 %v1017
        %v1541 = vunpack.c.l.b16 %v1018
        %v1542 = vunpack.c.l.b16 %v1019
        %v1543 = vunpack.c.l.b16 %v1020
        %v1544 = vunpack.c.l.b16 %v1021
        %v1545 = vunpack.c.l.b16 %v1022
        %v1546 = vunpack.c.l.b16 %v1023
        %v1547 = vunpack.c.l.b16 %v1024
        %v1548 = vunpack.c.l.b16 %v1025
        %v1549 = vunpack.c.l.b16 %v1026
        %v1550 = vunpack.c.l.b16 %v1027
        %v1551 = vunpack.c.l.b16 %v1028
        %v1552 = vunpack.c.l.b16 %v1029
        %v1553 = vunpack.c.l.b16 %v1030
        %v1554 = vunpack.c.l.b16 %v1031
        %v1555 = vunpack.c.l.b16 %v1032
        %v1556 = vunpack.c.l.b16 %v1033
        %v1557 = vunpack.c.l.b16 %v1034
        %v1558 = vunpack.c.l.b16 %v1035
        %v1559 = vunpack.c.l.b16 %v1036
        %v1560 = vunpack.c.l.b16 %v1037
        %v1561 = vunpack.c.l.b16 %v1038
        %v1562 = vunpack.c.l.b16 %v1039
        %v1563 = vunpack.c.l.b16 %v1040
        %v1564 = vunpack.c.l.b16 %v1041
        %v1565 = vunpack.c.l.b16 %v1042
        %v1566 = vunpack.c.l.b16 %v1043
        %v1567 = vunpack.c.l.b16 %v1044
        %v1568 = vunpack.c.l.b16 %v1045
        %v1569 = vunpack.c.l.b16 %v1046
        %v1570 = vunpack.c.l.b16 %v1047
        %v1571 = vunpack.c.l.b16 %v1048
        %v1572 = vunpack.c.l.b16 %v1049
        %v1573 = vunpack.c.l.b16 %v1050
        %v1574 = vunpack.c.l.b16 %v1051
        %v1575 = vunpack.c.l.b16 %v1052
        %v1576 = vunpack.c.l.b16 %v1053
        %v1577 = vunpack.c.l.b16 %v1054
        %v1578 = vunpack.c.l.b16 %v1055
        %v1579 = vunpack.c.l.b16 %v1056
        %v1580 = vunpack.c.l.b16 %v1057
        %v1581 = vunpack.c.l.b16 %v1058
        %v1582 = vunpack.c.l.b16 %v1059
        %v1583 = vunpack.c.l.b16 %v1060
        %v1584 = vunpack.c.l.b16 %v1061
        %v1585 = vunpack.c.l.b16 %v1062
        %v1586 = vunpack.c.l.b16 %v1063
        %v1587 = vunpack.c.l.b16 %v1064
        %v1588 = vunpack.c.l.b16 %v1065
        %v1589 = vunpack.c.l.b16 %v1066
        %v1590 = vunpack.c.l.b16 %v1067
        %v1591 = vunpack.c.l.b16 %v1068
        %v1592 = vunpack.c.l.b16 %v1069
        %v1593 = vunpack.c.l.b16 %v1070
        %v1594 = vunpack.c.l.b16 %v1071
        %v1595 = vunpack.c.l.b16 %v1072
        %v1596 = vunpack.c.l.b16 %v1073
        %v1597 = vunpack.c.l.b16 %v1074
        %v1598 = vunpack.c.l.b16 %v1075
        %v1599 = vunpack.c.l.b16 %v1076
        %v1600 = vunpack.c.l.b16 %v1077
        %v1601 = vunpack.c.l.b16 %v1078
        %v1602 = vunpack.c.l.b16 %v1079
        %v1603 = vunpack.c.l.b16 %v1080
        %v1604 = vunpack.c.l.b16 %v1081
        %v1605 = vunpack.c.l.b16 %v1082
        %v1606 = vunpack.c.l.b16 %v1083
        %v1607 = vunpack.c.l.b16 %v1084
        %v1608 = vunpack.c.l.b16 %v1085
        %v1609 = vunpack.c.l.b16 %v1086
        %v1610 = vunpack.c.l.b16 %v1087
        %v1611 = vunpack.c.l.b16 %v1088
        %v1612 = vunpack.c.l.b16 %v1089
        %v1613 = vunpack.c.l.b16 %v1090
        %v1614 = vunpack.c.l.b16 %v1091
        %v1615 = vunpack.c.l.b16 %v1092
        %v1616 = vunpack.c.l.b16 %v1093
        %v1617 = vunpack.c.l.b16 %v1094
        %v1618 = vunpack.c.l.b16 %v1095
        %v1619 = vunpack.c.l.b16 %v1096
        %v1620 = vunpack.c.l.b16 %v1097
        %v1621 = vunpack.c.l.b16 %v1098
        %v1622 = vunpack.c.l.b16 %v1099
        %v1623 = vunpack.c.l.b16 %v1100
        %v1624 = vunpack.c.l.b16 %v1101
        %v1625 = vunpack.c.l.b16 %v1102
        %v1626 = vunpack.c.l.b16 %v1103
        %v1627 = vunpack.c.l.b16 %v1104
        %v1628 = vunpack.c.l.b16 %v1105
        %v1629 = vunpack.c.l.b16 %v1106
        %v1630 = vunpack.c.l.b16 %v1107
        %v1631 = vunpack.c.l.b16 %v1108
        %v1632 = vunpack.c.l.b16 %v1109
        %v1633 = vunpack.c.l.b16 %v1110
        %v1634 = vunpack.c.l.b16 %v1111
        %v1635 = vunpack.c.l.b16 %v1112
        %v1636 = vunpack.c.l.b16 %v1113
        %v1637 = vunpack.c.l.b16 %v1114
        %v1638 = vunpack.c.l.b16 %v1115
        %v1639 = vunpack.c.l.b16 %v1116
        %v1640 = vunpack.c.l.b16 %v1117
        %v1641 = vunpack.c.l.b16 %v1118
        %v1642 = vunpack.c.l.b16 %v1119
        %v1643 = vunpack.c.l.b16 %v1120
        %v1644 = vunpack.c.l.b16 %v1121
        %v1645 = vunpack.c.l.b16 %v1122
        %v1646 = vunpack.c.l.b16 %v1123
        %v1647 = vunpack.c.l.b16 %v1124
        %v1648 = vunpack.c.l.b16 %v1125
        %v1649 = vunpack.c.l.b16 %v1126
        %v1650 = vunpack.c.l.b16 %v1127
        %v1651 = vunpack.c.l.b16 %v1128
        %v1652 = vunpack.c.l.b16 %v1129
        %v1653 = vunpack.c.l.b16 %v1130
        %v1654 = vunpack.c.l.b16 %v1131
        %v1655 = vunpack.c.l.b16 %v1132
        %v1656 = vunpack.c.l.b16 %v1133
        %v1657 = vunpack.c.l.b16 %v1134
        %v1658 = vunpack.c.l.b16 %v1135
        %v1659 = vunpack.c.l.b16 %v1136
        %v1660 = vunpack.c.l.b16 %v1137
        %v1661 = vunpack.c.l.b16 %v1138
        %v1662 = vunpack.c.l.b16 %v1139
        %v1663 = vunpack.c.l.b16 %v1140
        %v1664 = vunpack.c.l.b16 %v1141
        %v1665 = vunpack.c.l.b16 %v1142
        %v1666 = vunpack.c.l.b16 %v1143
        %v1667 = vunpack.c.l.b16 %v1144
        %v1668 = vunpack.c.l.b16 %v1145
        %v1669 = vunpack.c.l.b16 %v1146
        %v1670 = vunpack.c.l.b16 %v1147
        %v1671 = vunpack.c.l.b16 %v1148
        %v1672 = vunpack.c.l.b16 %v1149
        %v1673 = vunpack.c.l.b16 %v1150
        %v1674 = vunpack.c.l.b16 %v1151
        %v1675 = vunpack.c.l.b16 %v1152
        %v1676 = vunpack.c.l.b16 %v1153
        %v1677 = vunpack.c.l.b16 %v1154
        %v1678 = vunpack.c.l.b16 %v1155
        %v1679 = vunpack.c.l.b16 %v1156
        %v1680 = vunpack.c.l.b16 %v1157
        %v1681 = vunpack.c.l.b16 %v1158
        %v1682 = vunpack.c.l.b16 %v1159
        %v1683 = vunpack.c.l.b16 %v1160
        %v1684 = vunpack.c.l.b16 %v1161
        %v1685 = vunpack.c.l.b16 %v1162
        %v1686 = vunpack.c.l.b16 %v1163
        %v1687 = vunpack.c.l.b16 %v1164
        %v1688 = vunpack.c.l.b16 %v1165
        %v1689 = vunpack.c.l.b16 %v1166
        %v1690 = vunpack.c.l.b16 %v1167
        %v1691 = vunpack.c.l.b16 %v1168
        %v1692 = vunpack.c.l.b16 %v1169
        %v1693 = vunpack.c.l.b16 %v1170
        %v1694 = vunpack.c.l.b16 %v1171
        %v1695 = vunpack.c.l.b16 %v1172
        %v1696 = vunpack.c.l.b16 %v1173
        %v1697 = vunpack.c.l.b16 %v1174
        %v1698 = vunpack.c.l.b16 %v1175
        %v1699 = vunpack.c.l.b16 %v1176
        %v1700 = vunpack.c.l.b16 %v1177
        %v1701 = vunpack.c.l.b16 %v1178
        %v1702 = vunpack.c.l.b16 %v1179
        %v1703 = vunpack.c.l.b16 %v1180
        %v1704 = vunpack.c.l.b16 %v1181
        %v1705 = vunpack.c.l.b16 %v1182
        %v1706 = vunpack.c.l.b16 %v1183
        %v1707 = vunpack.c.l.b16 %v1184
        %v1708 = vunpack.c.l.b16 %v1185
        %v1709 = vunpack.c.l.b16 %v1186
        %v1710 = vunpack.c.l.b16 %v1187
        %v1711 = vunpack.c.l.b16 %v1188
        %v1712 = vunpack.c.l.b16 %v1189
        %v1713 = vunpack.c.l.b16 %v1190
        %v1714 = vunpack.c.l.b16 %v1191
        %v1715 = vunpack.c.l.b16 %v1192
        %v1716 = vunpack.c.l.b16 %v1193
        %v1717 = vunpack.c.l.b16 %v1194
        %v1718 = vunpack.c.l.b16 %v1195
        %v1719 = vunpack.c.l.b16 %v1196
        %v1720 = vunpack.c.l.b16 %v1197
        %v1721 = vunpack.c.l.b16 %v1198
        %v1722 = vunpack.c.l.b16 %v1199
        %v1723 = vunpack.c.l.b16 %v1200
        %v1724 = vunpack.c.l.b16 %v1201
        %v1725 = vunpack.c.l.b16 %v1202
        %v1726 = vunpack.c.l.b16 %v1203
        %v1727 = vunpack.c.l.b16 %v1204
        %v1728 = vpack.c.b16 %v1473, %v1472
        %v1729 = vpack.c.b16 %v1475, %v1474
        %v1730 = vpack.c.b16 %v1477, %v1476
        %v1731 = vpack.c.b16 %v1479, %v1478
        %v1732 = vpack.c.b16 %v1481, %v1480
        %v1733 = vpack.c.b16 %v1483, %v1482
        %v1734 = vpack.c.b16 %v1485, %v1484
        %v1735 = vpack.c.b16 %v1487, %v1486
        %v1736 = vpack.c.b16 %v1489, %v1488
        %v1737 = vpack.c.b16 %v1491, %v1490
        %v1738 = vpack.c.b16 %v1493, %v1492
        %v1739 = vpack.c.b16 %v1495, %v1494
        %v1740 = vpack.c.b16 %v1497, %v1496
        %v1741 = vpack.c.b16 %v1499, %v1498
        %v1742 = vpack.c.b16 %v1501, %v1500
        %v1743 = vpack.c.b16 %v1503, %v1502
        %v1744 = vpack.c.b16 %v1505, %v1504
        %v1745 = vpack.c.b16 %v1507, %v1506
        %v1746 = vpack.c.b16 %v1509, %v1508
        %v1747 = vpack.c.b16 %v1511, %v1510
        %v1748 = vpack.c.b16 %v1513, %v1512
        %v1749 = vpack.c.b16 %v1515, %v1514
        %v1750 = vpack.c.b16 %v1517, %v1516
        %v1751 = vpack.c.b16 %v1519, %v1518
        %v1752 = vpack.c.b16 %v1521, %v1520
        %v1753 = vpack.c.b16 %v1523, %v1522
        %v1754 = vpack.c.b16 %v1525, %v1524
        %v1755 = vpack.c.b16 %v1527, %v1526
        %v1756 = vpack.c.b16 %v1529, %v1528
        %v1757 = vpack.c.b16 %v1531, %v1530
        %v1758 = vpack.c.b16 %v1533, %v1532
        %v1759 = vpack.c.b16 %v1535, %v1534
        %v1760 = vpack.c.b16 %v1537, %v1536
        %v1761 = vpack.c.b16 %v1539, %v1538
        %v1762 = vpack.c.b16 %v1541, %v1540
        %v1763 = vpack.c.b16 %v1543, %v1542
        %v1764 = vpack.c.b16 %v1545, %v1544
        %v1765 = vpack.c.b16 %v1547, %v1546
        %v1766 = vpack.c.b16 %v1549, %v1548
        %v1767 = vpack.c.b16 %v1551, %v1550
        %v1768 = vpack.c.b16 %v1553, %v1552
        %v1769 = vpack.c.b16 %v1555, %v1554
        %v1770 = vpack.c.b16 %v1557, %v1556
        %v1771 = vpack.c.b16 %v1559, %v1558
        %v1772 = vpack.c.b16 %v1561, %v1560
        %v1773 = vpack.c.b16 %v1563, %v1562
        %v1774 = vpack.c.b16 %v1565, %v1564
        %v1775 = vpack.c.b16 %v1567, %v1566
        %v1776 = vpack.c.b16 %v1569, %v1568
        %v1777 = vpack.c.b16 %v1571, %v1570
        %v1778 = vpack.c.b16 %v1573, %v1572
        %v1779 = vpack.c.b16 %v1575, %v1574
        %v1780 = vpack.c.b16 %v1577, %v1576
        %v1781 = vpack.c.b16 %v1579, %v1578
        %v1782 = vpack.c.b16 %v1581, %v1580
        %v1783 = vpack.c.b16 %v1583, %v1582
        %v1784 = vpack.c.b16 %v1585, %v1584
        %v1785 = vpack.c.b16 %v1587, %v1586
        %v1786 = vpack.c.b16 %v1589, %v1588
        %v1787 = vpack.c.b16 %v1591, %v1590
        %v1788 = vpack.c.b16 %v1593, %v1592
        %v1789 = vpack.c.b16 %v1595, %v1594
        %v1790 = vpack.c.b16 %v1597, %v1596
        %v1791 = vpack.c.b16 %v1599, %v1598
        %v1792 = vpack.c.b16 %v1601, %v1600
        %v1793 = vpack.c.b16 %v1603, %v1602
        %v1794 = vpack.c.b16 %v1605, %v1604
        %v1795 = vpack.c.b16 %v1607, %v1606
        %v1796 = vpack.c.b16 %v1609, %v1608
        %v1797 = vpack.c.b16 %v1611, %v1610
        %v1798 = vpack.c.b16 %v1613, %v1612
        %v1799 = vpack.c.b16 %v1615, %v1614
        %v1800 = vpack.c.b16 %v1617, %v1616
        %v1801 = vpack.c.b16 %v1619, %v1618
        %v1802 = vpack.c.b16 %v1621, %v1620
        %v1803 = vpack.c.b16 %v1623, %v1622
        %v1804 = vpack.c.b16 %v1625, %v1624
        %v1805 = vpack.c.b16 %v1627, %v1626
        %v1806 = vpack.c.b16 %v1629, %v1628
        %v1807 = vpack.c.b16 %v1631, %v1630
        %v1808 = vpack.c.b16 %v1633, %v1632
        %v1809 = vpack.c.b16 %v1635, %v1634
        %v1810 = vpack.c.b16 %v1637, %v1636
        %v1811 = vpack.c.b16 %v1639, %v1638
        %v1812 = vpack.c.b16 %v1641, %v1640
        %v1813 = vpack.c.b16 %v1643, %v1642
        %v1814 = vpack.c.b16 %v1645, %v1644
        %v1815 = vpack.c.b16 %v1647, %v1646
        %v1816 = vpack.c.b16 %v1649, %v1648
        %v1817 = vpack.c.b16 %v1651, %v1650
        %v1818 = vpack.c.b16 %v1653, %v1652
        %v1819 = vpack.c.b16 %v1655, %v1654
        %v1820 = vpack.c.b16 %v1657, %v1656
        %v1821 = vpack.c.b16 %v1659, %v1658
        %v1822 = vpack.c.b16 %v1661, %v1660
        %v1823 = vpack.c.b16 %v1663, %v1662
        %v1824 = vpack.c.b16 %v1665, %v1664
        %v1825 = vpack.c.b16 %v1667, %v1666
        %v1826 = vpack.c.b16 %v1669, %v1668
        %v1827 = vpack.c.b16 %v1671, %v1670
        %v1828 = vpack.c.b16 %v1673, %v1672
        %v1829 = vpack.c.b16 %v1675, %v1674
        %v1830 = vpack.c.b16 %v1677, %v1676
        %v1831 = vpack.c.b16 %v1679, %v1678
        %v1832 = vpack.c.b16 %v1681, %v1680
        %v1833 = vpack.c.b16 %v1683, %v1682
        %v1834 = vpack.c.b16 %v1685, %v1684
        %v1835 = vpack.c.b16 %v1687, %v1686
        %v1836 = vpack.c.b16 %v1689, %v1688
        %v1837 = vpack.c.b16 %v1691, %v1690
        %v1838 = vpack.c.b16 %v1693, %v1692
        %v1839 = vpack.c.b16 %v1695, %v1694
        %v1840 = vpack.c.b16 %v1697, %v1696
        %v1841 = vpack.c.b16 %v1699, %v1698
        %v1842 = vpack.c.b16 %v1701, %v1700
        %v1843 = vpack.c.b16 %v1703, %v1702
        %v1844 = vpack.c.b16 %v1705, %v1704
        %v1845 = vpack.c.b16 %v1707, %v1706
        %v1846 = vpack.c.b16 %v1709, %v1708
        %v1847 = vpack.c.b16 %v1711, %v1710
        %v1848 = vpack.c.b16 %v1713, %v1712
        %v1849 = vpack.c.b16 %v1715, %v1714
        %v1850 = vpack.c.b16 %v1717, %v1716
        %v1851 = vpack.c.b16 %v1719, %v1718
        %v1852 = vpack.c.b16 %v1721, %v1720
        %v1853 = vpack.c.b16 %v1723, %v1722
        %v1854 = vpack.c.b16 %v1725, %v1724
        %v1855 = vpack.c.b16 %v1727, %v1726
        %v1860 = vunpack.c.l.b16 %v1205
        %v1861 = vunpack.c.l.b16 %v1206
        %v1862 = vunpack.c.l.b16 %v1207
        %v1863 = vunpack.c.l.b16 %v1208
        %v1864 = vpack.c.b16 %v1861, %v1860
        %v1865 = vpack.c.b16 %v1863, %v1862
        %vm1868 = vcmask 261120
        %v1870 = vsel %vm1868, %v1728, 0
        %v1873 = vsel %vm1868, %v1729, 0
        %v1876 = vsel %vm1868, %v1730, 0
        %v1879 = vsel %vm1868, %v1731, 0
        %v1882 = vsel %vm1868, %v1732, 0
        %v1885 = vsel %vm1868, %v1733, 0
        %v1888 = vsel %vm1868, %v1734, 0
        %v1891 = vsel %vm1868, %v1735, 0
        %v1894 = vsel %vm1868, %v1736, 0
        %v1897 = vsel %vm1868, %v1737, 0
        %v1900 = vsel %vm1868, %v1738, 0
        %v1903 = vsel %vm1868, %v1739, 0
        %v1906 = vsel %vm1868, %v1740, 0
        %v1909 = vsel %vm1868, %v1741, 0
        %v1912 = vsel %vm1868, %v1742, 0
        %v1915 = vsel %vm1868, %v1743, 0
        %v1918 = vsel %vm1868, %v1744, 0
        %v1921 = vsel %vm1868, %v1745, 0
        %v1924 = vsel %vm1868, %v1746, 0
        %v1927 = vsel %vm1868, %v1747, 0
        %v1930 = vsel %vm1868, %v1748, 0
        %v1933 = vsel %vm1868, %v1749, 0
        %v1936 = vsel %vm1868, %v1750, 0
        %v1939 = vsel %vm1868, %v1751, 0
        %v1942 = vsel %vm1868, %v1752, 0
        %v1945 = vsel %vm1868, %v1753, 0
        %v1948 = vsel %vm1868, %v1754, 0
        %v1951 = vsel %vm1868, %v1755, 0
        %v1954 = vsel %vm1868, %v1756, 0
        %v1957 = vsel %vm1868, %v1757, 0
        %v1960 = vsel %vm1868, %v1758, 0
        %v1963 = vsel %vm1868, %v1759, 0
        %v1966 = vsel %vm1868, %v1760, 0
        %v1969 = vsel %vm1868, %v1761, 0
        %v1972 = vsel %vm1868, %v1762, 0
        %v1975 = vsel %vm1868, %v1763, 0
        %v1978 = vsel %vm1868, %v1764, 0
        %v1981 = vsel %vm1868, %v1765, 0
        %v1984 = vsel %vm1868, %v1766, 0
        %v1987 = vsel %vm1868, %v1767, 0
        %v1990 = vsel %vm1868, %v1768, 0
        %v1993 = vsel %vm1868, %v1769, 0
        %v1996 = vsel %vm1868, %v1770, 0
        %v1999 = vsel %vm1868, %v1771, 0
        %v2002 = vsel %vm1868, %v1772, 0
        %v2005 = vsel %vm1868, %v1773, 0
        %v2008 = vsel %vm1868, %v1774, 0
        %v2011 = vsel %vm1868, %v1775, 0
        %v2014 = vsel %vm1868, %v1776, 0
        %v2017 = vsel %vm1868, %v1777, 0
        %v2020 = vsel %vm1868, %v1778, 0
        %v2023 = vsel %vm1868, %v1779, 0
        %v2026 = vsel %vm1868, %v1780, 0
        %v2029 = vsel %vm1868, %v1781, 0
        %v2032 = vsel %vm1868, %v1782, 0
        %v2035 = vsel %vm1868, %v1783, 0
        %v2038 = vsel %vm1868, %v1784, 0
        %v2041 = vsel %vm1868, %v1785, 0
        %v2044 = vsel %vm1868, %v1786, 0
        %v2047 = vsel %vm1868, %v1787, 0
        %v2050 = vsel %vm1868, %v1788, 0
        %v2053 = vsel %vm1868, %v1789, 0
        %v2056 = vsel %vm1868, %v1790, 0
        %v2059 = vsel %vm1868, %v1791, 0
        %v2062 = vsel %vm1868, %v1792, 0
        %v2065 = vsel %vm1868, %v1793, 0
        %v2068 = vsel %vm1868, %v1794, 0
        %v2071 = vsel %vm1868, %v1795, 0
        %v2074 = vsel %vm1868, %v1796, 0
        %v2077 = vsel %vm1868, %v1797, 0
        %v2080 = vsel %vm1868, %v1798, 0
        %v2083 = vsel %vm1868, %v1799, 0
        %v2086 = vsel %vm1868, %v1800, 0
        %v2089 = vsel %vm1868, %v1801, 0
        %v2092 = vsel %vm1868, %v1802, 0
        %v2095 = vsel %vm1868, %v1803, 0
        %v2098 = vsel %vm1868, %v1804, 0
        %v2101 = vsel %vm1868, %v1805, 0
        %v2104 = vsel %vm1868, %v1806, 0
        %v2107 = vsel %vm1868, %v1807, 0
        %v2110 = vsel %vm1868, %v1808, 0
        %v2113 = vsel %vm1868, %v1809, 0
        %v2116 = vsel %vm1868, %v1810, 0
        %v2119 = vsel %vm1868, %v1811, 0
        %v2122 = vsel %vm1868, %v1812, 0
        %v2125 = vsel %vm1868, %v1813, 0
        %v2128 = vsel %vm1868, %v1814, 0
        %v2131 = vsel %vm1868, %v1815, 0
        %v2134 = vsel %vm1868, %v1816, 0
        %v2137 = vsel %vm1868, %v1817, 0
        %v2140 = vsel %vm1868, %v1818, 0
        %v2143 = vsel %vm1868, %v1819, 0
        %v2146 = vsel %vm1868, %v1820, 0
        %v2149 = vsel %vm1868, %v1821, 0
        %v2152 = vsel %vm1868, %v1822, 0
        %v2155 = vsel %vm1868, %v1823, 0
        %v2158 = vsel %vm1868, %v1824, 0
        %v2161 = vsel %vm1868, %v1825, 0
        %v2164 = vsel %vm1868, %v1826, 0
        %v2167 = vsel %vm1868, %v1827, 0
        %v2170 = vsel %vm1868, %v1828, 0
        %v2173 = vsel %vm1868, %v1829, 0
        %v2176 = vsel %vm1868, %v1830, 0
        %v2179 = vsel %vm1868, %v1831, 0
        %v2182 = vsel %vm1868, %v1832, 0
        %v2185 = vsel %vm1868, %v1833, 0
        %v2188 = vsel %vm1868, %v1834, 0
        %v2191 = vsel %vm1868, %v1835, 0
        %v2194 = vsel %vm1868, %v1836, 0
        %v2197 = vsel %vm1868, %v1837, 0
        %v2200 = vsel %vm1868, %v1838, 0
        %v2203 = vsel %vm1868, %v1839, 0
        %v2206 = vsel %vm1868, %v1840, 0
        %v2209 = vsel %vm1868, %v1841, 0
        %v2212 = vsel %vm1868, %v1842, 0
        %v2215 = vsel %vm1868, %v1843, 0
        %v2218 = vsel %vm1868, %v1844, 0
        %v2221 = vsel %vm1868, %v1845, 0
        %v2224 = vsel %vm1868, %v1846, 0
        %v2227 = vsel %vm1868, %v1847, 0
        %v2230 = vsel %vm1868, %v1848, 0
        %v2233 = vsel %vm1868, %v1849, 0
        %v2236 = vsel %vm1868, %v1850, 0
        %v2239 = vsel %vm1868, %v1851, 0
        %v2242 = vsel %vm1868, %v1852, 0
        %v2245 = vsel %vm1868, %v1853, 0
        %v2248 = vsel %vm1868, %v1854, 0
        %v2251 = vsel %vm1868, %v1855, 0
        %2253 = vmatprep.subr.bf16.mxu0 0
        %2254 = vmatpush1.bf16.msra.mxu0 0
        %2255 = vmatprep.subr.bf16.mxu0 0
        %2256 = vmatpush1.bf16.msra.mxu0 0
        %2257 = vmatprep.subr.bf16.mxu0 0
        %2258 = vmatpush1.bf16.msra.mxu0 0
        %2259 = vmatprep.subr.bf16.mxu0 0
        %2260 = vmatpush1.bf16.msra.mxu0 0
        %2261 = vmatprep.subr.bf16.mxu0 0
        %2262 = vmatpush1.bf16.msra.mxu0 0
        %2263 = vmatprep.subr.bf16.mxu0 0
        %2264 = vmatpush1.bf16.msra.mxu0 0
        %2265 = vmatprep.subr.bf16.mxu0 0
        %2266 = vmatpush1.bf16.msra.mxu0 %v1865
        %2267 = vmatprep.subr.bf16.mxu0 0
        %2268 = vmatpush1.bf16.msra.mxu0 %v1864
        %2269 = vmatprep.subr.bf16.mxu0 0
        %2270 = vmatpush2.bf16.msra.mxu0 0
        %2271 = vmatprep.subr.bf16.mxu0 0
        %2272 = vmatpush2.bf16.msra.mxu0 0
        %2273 = vmatprep.subr.bf16.mxu0 0
        %2274 = vmatpush2.bf16.msra.mxu0 0
        %2275 = vmatprep.subr.bf16.mxu0 0
        %2276 = vmatpush2.bf16.msra.mxu0 0
        %2277 = vmatprep.subr.bf16.mxu0 0
        %2278 = vmatpush2.bf16.msra.mxu0 0
        %2279 = vmatprep.subr.bf16.mxu0 0
        %2280 = vmatpush2.bf16.msra.mxu0 0
        %2281 = vmatprep.subr.bf16.mxu0 0
        %2282 = vmatpush2.bf16.msra.mxu0 0
        %2283 = vmatprep.subr.bf16.mxu0 0
        %2284 = vmatpush2.bf16.msra.mxu0 0
        %2285 = vmatprep.mubr.bf16.mxu0 0
        %2286 = vmatmul.mubr.bf16.gmra.mxu0 %v1870
        %v2287 = vpop.f32.mrf.mxu0
        %v2288 = vadd.f32 %v1214, %v2287
        %v2289 = vpop.f32.mrf.mxu0
        %v2290 = vpop.f32.mrf.mxu0
        %v2291 = vadd.f32 %v1214, %v2290
        %v2292 = vpop.f32.mrf.mxu0
        %2293 = vmatprep.mubr.bf16.mxu0 0
        %2294 = vmatmul.mubr.bf16.gmra.mxu0 %v1873
        %v2295 = vpop.f32.mrf.mxu0
        %v2296 = vadd.f32 %v1214, %v2295
        %v2297 = vpop.f32.mrf.mxu0
        %v2298 = vpop.f32.mrf.mxu0
        %v2299 = vadd.f32 %v1214, %v2298
        %v2300 = vpop.f32.mrf.mxu0
        %2301 = vmatprep.mubr.bf16.mxu0 0
        %2302 = vmatmul.mubr.bf16.gmra.mxu0 %v1876
        %v2303 = vpop.f32.mrf.mxu0
        %v2304 = vadd.f32 %v1214, %v2303
        %v2305 = vpop.f32.mrf.mxu0
        %v2306 = vpop.f32.mrf.mxu0
        %v2307 = vadd.f32 %v1214, %v2306
        %v2308 = vpop.f32.mrf.mxu0
        %2309 = vmatprep.mubr.bf16.mxu0 0
        %2310 = vmatmul.mubr.bf16.gmra.mxu0 %v1879
        %v2311 = vpop.f32.mrf.mxu0
        %v2312 = vadd.f32 %v1214, %v2311
        %v2313 = vpop.f32.mrf.mxu0
        %v2314 = vpop.f32.mrf.mxu0
        %v2315 = vadd.f32 %v1214, %v2314
        %v2316 = vpop.f32.mrf.mxu0
        %2317 = vmatprep.mubr.bf16.mxu0 0
        %2318 = vmatmul.mubr.bf16.gmra.mxu0 %v1882
        %v2319 = vpop.f32.mrf.mxu0
        %v2320 = vadd.f32 %v1214, %v2319
        %v2321 = vpop.f32.mrf.mxu0
        %v2322 = vpop.f32.mrf.mxu0
        %v2323 = vadd.f32 %v1214, %v2322
        %v2324 = vpop.f32.mrf.mxu0
        %2325 = vmatprep.mubr.bf16.mxu0 0
        %2326 = vmatmul.mubr.bf16.gmra.mxu0 %v1885
        %v2327 = vpop.f32.mrf.mxu0
        %v2328 = vadd.f32 %v1214, %v2327
        %v2329 = vpop.f32.mrf.mxu0
        %v2330 = vpop.f32.mrf.mxu0
        %v2331 = vadd.f32 %v1214, %v2330
        %v2332 = vpop.f32.mrf.mxu0
        %2333 = vmatprep.mubr.bf16.mxu0 0
        %2334 = vmatmul.mubr.bf16.gmra.mxu0 %v1888
        %v2335 = vpop.f32.mrf.mxu0
        %v2336 = vadd.f32 %v1214, %v2335
        %v2337 = vpop.f32.mrf.mxu0
        %v2338 = vpop.f32.mrf.mxu0
        %v2339 = vadd.f32 %v1214, %v2338
        %v2340 = vpop.f32.mrf.mxu0
        %2341 = vmatprep.mubr.bf16.mxu0 0
        %2342 = vmatmul.mubr.bf16.gmra.mxu0 %v1891
        %v2343 = vpop.f32.mrf.mxu0
        %v2344 = vadd.f32 %v1214, %v2343
        %v2345 = vpop.f32.mrf.mxu0
        %v2346 = vpop.f32.mrf.mxu0
        %v2347 = vadd.f32 %v1214, %v2346
        %v2348 = vpop.f32.mrf.mxu0
        %2349 = vmatprep.mubr.bf16.mxu0 0
        %2350 = vmatmul.mubr.bf16.gmra.mxu0 %v1894
        %v2351 = vpop.f32.mrf.mxu0
        %v2352 = vadd.f32 %v1214, %v2351
        %v2353 = vpop.f32.mrf.mxu0
        %v2354 = vpop.f32.mrf.mxu0
        %v2355 = vadd.f32 %v1214, %v2354
        %v2356 = vpop.f32.mrf.mxu0
        %2357 = vmatprep.mubr.bf16.mxu0 0
        %2358 = vmatmul.mubr.bf16.gmra.mxu0 %v1897
        %v2359 = vpop.f32.mrf.mxu0
        %v2360 = vadd.f32 %v1214, %v2359
        %v2361 = vpop.f32.mrf.mxu0
        %v2362 = vpop.f32.mrf.mxu0
        %v2363 = vadd.f32 %v1214, %v2362
        %v2364 = vpop.f32.mrf.mxu0
        %2365 = vmatprep.mubr.bf16.mxu0 0
        %2366 = vmatmul.mubr.bf16.gmra.mxu0 %v1900
        %v2367 = vpop.f32.mrf.mxu0
        %v2368 = vadd.f32 %v1214, %v2367
        %v2369 = vpop.f32.mrf.mxu0
        %v2370 = vpop.f32.mrf.mxu0
        %v2371 = vadd.f32 %v1214, %v2370
        %v2372 = vpop.f32.mrf.mxu0
        %2373 = vmatprep.mubr.bf16.mxu0 0
        %2374 = vmatmul.mubr.bf16.gmra.mxu0 %v1903
        %v2375 = vpop.f32.mrf.mxu0
        %v2376 = vadd.f32 %v1214, %v2375
        %v2377 = vpop.f32.mrf.mxu0
        %v2378 = vpop.f32.mrf.mxu0
        %v2379 = vadd.f32 %v1214, %v2378
        %v2380 = vpop.f32.mrf.mxu0
        %2381 = vmatprep.mubr.bf16.mxu0 0
        %2382 = vmatmul.mubr.bf16.gmra.mxu0 %v1906
        %v2383 = vpop.f32.mrf.mxu0
        %v2384 = vadd.f32 %v1214, %v2383
        %v2385 = vpop.f32.mrf.mxu0
        %v2386 = vpop.f32.mrf.mxu0
        %v2387 = vadd.f32 %v1214, %v2386
        %v2388 = vpop.f32.mrf.mxu0
        %2389 = vmatprep.mubr.bf16.mxu0 0
        %2390 = vmatmul.mubr.bf16.gmra.mxu0 %v1909
        %v2391 = vpop.f32.mrf.mxu0
        %v2392 = vadd.f32 %v1214, %v2391
        %v2393 = vpop.f32.mrf.mxu0
        %v2394 = vpop.f32.mrf.mxu0
        %v2395 = vadd.f32 %v1214, %v2394
        %v2396 = vpop.f32.mrf.mxu0
        %2397 = vmatprep.mubr.bf16.mxu0 0
        %2398 = vmatmul.mubr.bf16.gmra.mxu0 %v1912
        %v2399 = vpop.f32.mrf.mxu0
        %v2400 = vadd.f32 %v1214, %v2399
        %v2401 = vpop.f32.mrf.mxu0
        %v2402 = vpop.f32.mrf.mxu0
        %v2403 = vadd.f32 %v1214, %v2402
        %v2404 = vpop.f32.mrf.mxu0
        %2405 = vmatprep.mubr.bf16.mxu0 0
        %2406 = vmatmul.mubr.bf16.gmra.mxu0 %v1915
        %v2407 = vpop.f32.mrf.mxu0
        %v2408 = vadd.f32 %v1214, %v2407
        %v2409 = vpop.f32.mrf.mxu0
        %v2410 = vpop.f32.mrf.mxu0
        %v2411 = vadd.f32 %v1214, %v2410
        %v2412 = vpop.f32.mrf.mxu0
        %2413 = vmatprep.mubr.bf16.mxu0 0
        %2414 = vmatmul.mubr.bf16.gmra.mxu0 %v1918
        %v2415 = vpop.f32.mrf.mxu0
        %v2416 = vadd.f32 %v1214, %v2415
        %v2417 = vpop.f32.mrf.mxu0
        %v2418 = vpop.f32.mrf.mxu0
        %v2419 = vadd.f32 %v1214, %v2418
        %v2420 = vpop.f32.mrf.mxu0
        %2421 = vmatprep.mubr.bf16.mxu0 0
        %2422 = vmatmul.mubr.bf16.gmra.mxu0 %v1921
        %v2423 = vpop.f32.mrf.mxu0
        %v2424 = vadd.f32 %v1214, %v2423
        %v2425 = vpop.f32.mrf.mxu0
        %v2426 = vpop.f32.mrf.mxu0
        %v2427 = vadd.f32 %v1214, %v2426
        %v2428 = vpop.f32.mrf.mxu0
        %2429 = vmatprep.mubr.bf16.mxu0 0
        %2430 = vmatmul.mubr.bf16.gmra.mxu0 %v1924
        %v2431 = vpop.f32.mrf.mxu0
        %v2432 = vadd.f32 %v1214, %v2431
        %v2433 = vpop.f32.mrf.mxu0
        %v2434 = vpop.f32.mrf.mxu0
        %v2435 = vadd.f32 %v1214, %v2434
        %v2436 = vpop.f32.mrf.mxu0
        %2437 = vmatprep.mubr.bf16.mxu0 0
        %2438 = vmatmul.mubr.bf16.gmra.mxu0 %v1927
        %v2439 = vpop.f32.mrf.mxu0
        %v2440 = vadd.f32 %v1214, %v2439
        %v2441 = vpop.f32.mrf.mxu0
        %v2442 = vpop.f32.mrf.mxu0
        %v2443 = vadd.f32 %v1214, %v2442
        %v2444 = vpop.f32.mrf.mxu0
        %2445 = vmatprep.mubr.bf16.mxu0 0
        %2446 = vmatmul.mubr.bf16.gmra.mxu0 %v1930
        %v2447 = vpop.f32.mrf.mxu0
        %v2448 = vadd.f32 %v1214, %v2447
        %v2449 = vpop.f32.mrf.mxu0
        %v2450 = vpop.f32.mrf.mxu0
        %v2451 = vadd.f32 %v1214, %v2450
        %v2452 = vpop.f32.mrf.mxu0
        %2453 = vmatprep.mubr.bf16.mxu0 0
        %2454 = vmatmul.mubr.bf16.gmra.mxu0 %v1933
        %v2455 = vpop.f32.mrf.mxu0
        %v2456 = vadd.f32 %v1214, %v2455
        %v2457 = vpop.f32.mrf.mxu0
        %v2458 = vpop.f32.mrf.mxu0
        %v2459 = vadd.f32 %v1214, %v2458
        %v2460 = vpop.f32.mrf.mxu0
        %2461 = vmatprep.mubr.bf16.mxu0 0
        %2462 = vmatmul.mubr.bf16.gmra.mxu0 %v1936
        %v2463 = vpop.f32.mrf.mxu0
        %v2464 = vadd.f32 %v1214, %v2463
        %v2465 = vpop.f32.mrf.mxu0
        %v2466 = vpop.f32.mrf.mxu0
        %v2467 = vadd.f32 %v1214, %v2466
        %v2468 = vpop.f32.mrf.mxu0
        %2469 = vmatprep.mubr.bf16.mxu0 0
        %2470 = vmatmul.mubr.bf16.gmra.mxu0 %v1939
        %v2471 = vpop.f32.mrf.mxu0
        %v2472 = vadd.f32 %v1214, %v2471
        %v2473 = vpop.f32.mrf.mxu0
        %v2474 = vpop.f32.mrf.mxu0
        %v2475 = vadd.f32 %v1214, %v2474
        %v2476 = vpop.f32.mrf.mxu0
        %2477 = vmatprep.mubr.bf16.mxu0 0
        %2478 = vmatmul.mubr.bf16.gmra.mxu0 %v1942
        %v2479 = vpop.f32.mrf.mxu0
        %v2480 = vadd.f32 %v1214, %v2479
        %v2481 = vpop.f32.mrf.mxu0
        %v2482 = vpop.f32.mrf.mxu0
        %v2483 = vadd.f32 %v1214, %v2482
        %v2484 = vpop.f32.mrf.mxu0
        %2485 = vmatprep.mubr.bf16.mxu0 0
        %2486 = vmatmul.mubr.bf16.gmra.mxu0 %v1945
        %v2487 = vpop.f32.mrf.mxu0
        %v2488 = vadd.f32 %v1214, %v2487
        %v2489 = vpop.f32.mrf.mxu0
        %v2490 = vpop.f32.mrf.mxu0
        %v2491 = vadd.f32 %v1214, %v2490
        %v2492 = vpop.f32.mrf.mxu0
        %2493 = vmatprep.mubr.bf16.mxu0 0
        %2494 = vmatmul.mubr.bf16.gmra.mxu0 %v1948
        %v2495 = vpop.f32.mrf.mxu0
        %v2496 = vadd.f32 %v1214, %v2495
        %v2497 = vpop.f32.mrf.mxu0
        %v2498 = vpop.f32.mrf.mxu0
        %v2499 = vadd.f32 %v1214, %v2498
        %v2500 = vpop.f32.mrf.mxu0
        %2501 = vmatprep.mubr.bf16.mxu0 0
        %2502 = vmatmul.mubr.bf16.gmra.mxu0 %v1951
        %v2503 = vpop.f32.mrf.mxu0
        %v2504 = vadd.f32 %v1214, %v2503
        %v2505 = vpop.f32.mrf.mxu0
        %v2506 = vpop.f32.mrf.mxu0
        %v2507 = vadd.f32 %v1214, %v2506
        %v2508 = vpop.f32.mrf.mxu0
        %2509 = vmatprep.mubr.bf16.mxu0 0
        %2510 = vmatmul.mubr.bf16.gmra.mxu0 %v1954
        %v2511 = vpop.f32.mrf.mxu0
        %v2512 = vadd.f32 %v1214, %v2511
        %v2513 = vpop.f32.mrf.mxu0
        %v2514 = vpop.f32.mrf.mxu0
        %v2515 = vadd.f32 %v1214, %v2514
        %v2516 = vpop.f32.mrf.mxu0
        %2517 = vmatprep.mubr.bf16.mxu0 0
        %2518 = vmatmul.mubr.bf16.gmra.mxu0 %v1957
        %v2519 = vpop.f32.mrf.mxu0
        %v2520 = vadd.f32 %v1214, %v2519
        %v2521 = vpop.f32.mrf.mxu0
        %v2522 = vpop.f32.mrf.mxu0
        %v2523 = vadd.f32 %v1214, %v2522
        %v2524 = vpop.f32.mrf.mxu0
        %2525 = vmatprep.mubr.bf16.mxu0 0
        %2526 = vmatmul.mubr.bf16.gmra.mxu0 %v1960
        %v2527 = vpop.f32.mrf.mxu0
        %v2528 = vadd.f32 %v1214, %v2527
        %v2529 = vpop.f32.mrf.mxu0
        %v2530 = vpop.f32.mrf.mxu0
        %v2531 = vadd.f32 %v1214, %v2530
        %v2532 = vpop.f32.mrf.mxu0
        %2533 = vmatprep.mubr.bf16.mxu0 0
        %2534 = vmatmul.mubr.bf16.gmra.mxu0 %v1963
        %v2535 = vpop.f32.mrf.mxu0
        %v2536 = vadd.f32 %v1214, %v2535
        %v2537 = vpop.f32.mrf.mxu0
        %v2538 = vpop.f32.mrf.mxu0
        %v2539 = vadd.f32 %v1214, %v2538
        %v2540 = vpop.f32.mrf.mxu0
        %2541 = vmatprep.mubr.bf16.mxu0 0
        %2542 = vmatmul.mubr.bf16.gmra.mxu0 %v1966
        %v2543 = vpop.f32.mrf.mxu0
        %v2544 = vadd.f32 %v1214, %v2543
        %v2545 = vpop.f32.mrf.mxu0
        %v2546 = vpop.f32.mrf.mxu0
        %v2547 = vadd.f32 %v1214, %v2546
        %v2548 = vpop.f32.mrf.mxu0
        %2549 = vmatprep.mubr.bf16.mxu0 0
        %2550 = vmatmul.mubr.bf16.gmra.mxu0 %v1969
        %v2551 = vpop.f32.mrf.mxu0
        %v2552 = vadd.f32 %v1214, %v2551
        %v2553 = vpop.f32.mrf.mxu0
        %v2554 = vpop.f32.mrf.mxu0
        %v2555 = vadd.f32 %v1214, %v2554
        %v2556 = vpop.f32.mrf.mxu0
        %2557 = vmatprep.mubr.bf16.mxu0 0
        %2558 = vmatmul.mubr.bf16.gmra.mxu0 %v1972
        %v2559 = vpop.f32.mrf.mxu0
        %v2560 = vadd.f32 %v1214, %v2559
        %v2561 = vpop.f32.mrf.mxu0
        %v2562 = vpop.f32.mrf.mxu0
        %v2563 = vadd.f32 %v1214, %v2562
        %v2564 = vpop.f32.mrf.mxu0
        %2565 = vmatprep.mubr.bf16.mxu0 0
        %2566 = vmatmul.mubr.bf16.gmra.mxu0 %v1975
        %v2567 = vpop.f32.mrf.mxu0
        %v2568 = vadd.f32 %v1214, %v2567
        %v2569 = vpop.f32.mrf.mxu0
        %v2570 = vpop.f32.mrf.mxu0
        %v2571 = vadd.f32 %v1214, %v2570
        %v2572 = vpop.f32.mrf.mxu0
        %2573 = vmatprep.mubr.bf16.mxu0 0
        %2574 = vmatmul.mubr.bf16.gmra.mxu0 %v1978
        %v2575 = vpop.f32.mrf.mxu0
        %v2576 = vadd.f32 %v1214, %v2575
        %v2577 = vpop.f32.mrf.mxu0
        %v2578 = vpop.f32.mrf.mxu0
        %v2579 = vadd.f32 %v1214, %v2578
        %v2580 = vpop.f32.mrf.mxu0
        %2581 = vmatprep.mubr.bf16.mxu0 0
        %2582 = vmatmul.mubr.bf16.gmra.mxu0 %v1981
        %v2583 = vpop.f32.mrf.mxu0
        %v2584 = vadd.f32 %v1214, %v2583
        %v2585 = vpop.f32.mrf.mxu0
        %v2586 = vpop.f32.mrf.mxu0
        %v2587 = vadd.f32 %v1214, %v2586
        %v2588 = vpop.f32.mrf.mxu0
        %2589 = vmatprep.mubr.bf16.mxu0 0
        %2590 = vmatmul.mubr.bf16.gmra.mxu0 %v1984
        %v2591 = vpop.f32.mrf.mxu0
        %v2592 = vadd.f32 %v1214, %v2591
        %v2593 = vpop.f32.mrf.mxu0
        %v2594 = vpop.f32.mrf.mxu0
        %v2595 = vadd.f32 %v1214, %v2594
        %v2596 = vpop.f32.mrf.mxu0
        %2597 = vmatprep.mubr.bf16.mxu0 0
        %2598 = vmatmul.mubr.bf16.gmra.mxu0 %v1987
        %v2599 = vpop.f32.mrf.mxu0
        %v2600 = vadd.f32 %v1214, %v2599
        %v2601 = vpop.f32.mrf.mxu0
        %v2602 = vpop.f32.mrf.mxu0
        %v2603 = vadd.f32 %v1214, %v2602
        %v2604 = vpop.f32.mrf.mxu0
        %2605 = vmatprep.mubr.bf16.mxu0 0
        %2606 = vmatmul.mubr.bf16.gmra.mxu0 %v1990
        %v2607 = vpop.f32.mrf.mxu0
        %v2608 = vadd.f32 %v1214, %v2607
        %v2609 = vpop.f32.mrf.mxu0
        %v2610 = vpop.f32.mrf.mxu0
        %v2611 = vadd.f32 %v1214, %v2610
        %v2612 = vpop.f32.mrf.mxu0
        %2613 = vmatprep.mubr.bf16.mxu0 0
        %2614 = vmatmul.mubr.bf16.gmra.mxu0 %v1993
        %v2615 = vpop.f32.mrf.mxu0
        %v2616 = vadd.f32 %v1214, %v2615
        %v2617 = vpop.f32.mrf.mxu0
        %v2618 = vpop.f32.mrf.mxu0
        %v2619 = vadd.f32 %v1214, %v2618
        %v2620 = vpop.f32.mrf.mxu0
        %2621 = vmatprep.mubr.bf16.mxu0 0
        %2622 = vmatmul.mubr.bf16.gmra.mxu0 %v1996
        %v2623 = vpop.f32.mrf.mxu0
        %v2624 = vadd.f32 %v1214, %v2623
        %v2625 = vpop.f32.mrf.mxu0
        %v2626 = vpop.f32.mrf.mxu0
        %v2627 = vadd.f32 %v1214, %v2626
        %v2628 = vpop.f32.mrf.mxu0
        %2629 = vmatprep.mubr.bf16.mxu0 0
        %2630 = vmatmul.mubr.bf16.gmra.mxu0 %v1999
        %v2631 = vpop.f32.mrf.mxu0
        %v2632 = vadd.f32 %v1214, %v2631
        %v2633 = vpop.f32.mrf.mxu0
        %v2634 = vpop.f32.mrf.mxu0
        %v2635 = vadd.f32 %v1214, %v2634
        %v2636 = vpop.f32.mrf.mxu0
        %2637 = vmatprep.mubr.bf16.mxu0 0
        %2638 = vmatmul.mubr.bf16.gmra.mxu0 %v2002
        %v2639 = vpop.f32.mrf.mxu0
        %v2640 = vadd.f32 %v1214, %v2639
        %v2641 = vpop.f32.mrf.mxu0
        %v2642 = vpop.f32.mrf.mxu0
        %v2643 = vadd.f32 %v1214, %v2642
        %v2644 = vpop.f32.mrf.mxu0
        %2645 = vmatprep.mubr.bf16.mxu0 0
        %2646 = vmatmul.mubr.bf16.gmra.mxu0 %v2005
        %v2647 = vpop.f32.mrf.mxu0
        %v2648 = vadd.f32 %v1214, %v2647
        %v2649 = vpop.f32.mrf.mxu0
        %v2650 = vpop.f32.mrf.mxu0
        %v2651 = vadd.f32 %v1214, %v2650
        %v2652 = vpop.f32.mrf.mxu0
        %2653 = vmatprep.mubr.bf16.mxu0 0
        %2654 = vmatmul.mubr.bf16.gmra.mxu0 %v2008
        %v2655 = vpop.f32.mrf.mxu0
        %v2656 = vadd.f32 %v1214, %v2655
        %v2657 = vpop.f32.mrf.mxu0
        %v2658 = vpop.f32.mrf.mxu0
        %v2659 = vadd.f32 %v1214, %v2658
        %v2660 = vpop.f32.mrf.mxu0
        %2661 = vmatprep.mubr.bf16.mxu0 0
        %2662 = vmatmul.mubr.bf16.gmra.mxu0 %v2011
        %v2663 = vpop.f32.mrf.mxu0
        %v2664 = vadd.f32 %v1214, %v2663
        %v2665 = vpop.f32.mrf.mxu0
        %v2666 = vpop.f32.mrf.mxu0
        %v2667 = vadd.f32 %v1214, %v2666
        %v2668 = vpop.f32.mrf.mxu0
        %2669 = vmatprep.mubr.bf16.mxu0 0
        %2670 = vmatmul.mubr.bf16.gmra.mxu0 %v2014
        %v2671 = vpop.f32.mrf.mxu0
        %v2672 = vadd.f32 %v1214, %v2671
        %v2673 = vpop.f32.mrf.mxu0
        %v2674 = vpop.f32.mrf.mxu0
        %v2675 = vadd.f32 %v1214, %v2674
        %v2676 = vpop.f32.mrf.mxu0
        %2677 = vmatprep.mubr.bf16.mxu0 0
        %2678 = vmatmul.mubr.bf16.gmra.mxu0 %v2017
        %v2679 = vpop.f32.mrf.mxu0
        %v2680 = vadd.f32 %v1214, %v2679
        %v2681 = vpop.f32.mrf.mxu0
        %v2682 = vpop.f32.mrf.mxu0
        %v2683 = vadd.f32 %v1214, %v2682
        %v2684 = vpop.f32.mrf.mxu0
        %2685 = vmatprep.mubr.bf16.mxu0 0
        %2686 = vmatmul.mubr.bf16.gmra.mxu0 %v2020
        %v2687 = vpop.f32.mrf.mxu0
        %v2688 = vadd.f32 %v1214, %v2687
        %v2689 = vpop.f32.mrf.mxu0
        %v2690 = vpop.f32.mrf.mxu0
        %v2691 = vadd.f32 %v1214, %v2690
        %v2692 = vpop.f32.mrf.mxu0
        %2693 = vmatprep.mubr.bf16.mxu0 0
        %2694 = vmatmul.mubr.bf16.gmra.mxu0 %v2023
        %v2695 = vpop.f32.mrf.mxu0
        %v2696 = vadd.f32 %v1214, %v2695
        %v2697 = vpop.f32.mrf.mxu0
        %v2698 = vpop.f32.mrf.mxu0
        %v2699 = vadd.f32 %v1214, %v2698
        %v2700 = vpop.f32.mrf.mxu0
        %2701 = vmatprep.mubr.bf16.mxu0 0
        %2702 = vmatmul.mubr.bf16.gmra.mxu0 %v2026
        %v2703 = vpop.f32.mrf.mxu0
        %v2704 = vadd.f32 %v1214, %v2703
        %v2705 = vpop.f32.mrf.mxu0
        %v2706 = vpop.f32.mrf.mxu0
        %v2707 = vadd.f32 %v1214, %v2706
        %v2708 = vpop.f32.mrf.mxu0
        %2709 = vmatprep.mubr.bf16.mxu0 0
        %2710 = vmatmul.mubr.bf16.gmra.mxu0 %v2029
        %v2711 = vpop.f32.mrf.mxu0
        %v2712 = vadd.f32 %v1214, %v2711
        %v2713 = vpop.f32.mrf.mxu0
        %v2714 = vpop.f32.mrf.mxu0
        %v2715 = vadd.f32 %v1214, %v2714
        %v2716 = vpop.f32.mrf.mxu0
        %2717 = vmatprep.mubr.bf16.mxu0 0
        %2718 = vmatmul.mubr.bf16.gmra.mxu0 %v2032
        %v2719 = vpop.f32.mrf.mxu0
        %v2720 = vadd.f32 %v1214, %v2719
        %v2721 = vpop.f32.mrf.mxu0
        %v2722 = vpop.f32.mrf.mxu0
        %v2723 = vadd.f32 %v1214, %v2722
        %v2724 = vpop.f32.mrf.mxu0
        %2725 = vmatprep.mubr.bf16.mxu0 0
        %2726 = vmatmul.mubr.bf16.gmra.mxu0 %v2035
        %v2727 = vpop.f32.mrf.mxu0
        %v2728 = vadd.f32 %v1214, %v2727
        %v2729 = vpop.f32.mrf.mxu0
        %v2730 = vpop.f32.mrf.mxu0
        %v2731 = vadd.f32 %v1214, %v2730
        %v2732 = vpop.f32.mrf.mxu0
        %2733 = vmatprep.mubr.bf16.mxu0 0
        %2734 = vmatmul.mubr.bf16.gmra.mxu0 %v2038
        %v2735 = vpop.f32.mrf.mxu0
        %v2736 = vadd.f32 %v1214, %v2735
        %v2737 = vpop.f32.mrf.mxu0
        %v2738 = vpop.f32.mrf.mxu0
        %v2739 = vadd.f32 %v1214, %v2738
        %v2740 = vpop.f32.mrf.mxu0
        %2741 = vmatprep.mubr.bf16.mxu0 0
        %2742 = vmatmul.mubr.bf16.gmra.mxu0 %v2041
        %v2743 = vpop.f32.mrf.mxu0
        %v2744 = vadd.f32 %v1214, %v2743
        %v2745 = vpop.f32.mrf.mxu0
        %v2746 = vpop.f32.mrf.mxu0
        %v2747 = vadd.f32 %v1214, %v2746
        %v2748 = vpop.f32.mrf.mxu0
        %2749 = vmatprep.mubr.bf16.mxu0 0
        %2750 = vmatmul.mubr.bf16.gmra.mxu0 %v2044
        %v2751 = vpop.f32.mrf.mxu0
        %v2752 = vadd.f32 %v1214, %v2751
        %v2753 = vpop.f32.mrf.mxu0
        %v2754 = vpop.f32.mrf.mxu0
        %v2755 = vadd.f32 %v1214, %v2754
        %v2756 = vpop.f32.mrf.mxu0
        %2757 = vmatprep.mubr.bf16.mxu0 0
        %2758 = vmatmul.mubr.bf16.gmra.mxu0 %v2047
        %v2759 = vpop.f32.mrf.mxu0
        %v2760 = vadd.f32 %v1214, %v2759
        %v2761 = vpop.f32.mrf.mxu0
        %v2762 = vpop.f32.mrf.mxu0
        %v2763 = vadd.f32 %v1214, %v2762
        %v2764 = vpop.f32.mrf.mxu0
        %2765 = vmatprep.mubr.bf16.mxu0 0
        %2766 = vmatmul.mubr.bf16.gmra.mxu0 %v2050
        %v2767 = vpop.f32.mrf.mxu0
        %v2768 = vadd.f32 %v1214, %v2767
        %v2769 = vpop.f32.mrf.mxu0
        %v2770 = vpop.f32.mrf.mxu0
        %v2771 = vadd.f32 %v1214, %v2770
        %v2772 = vpop.f32.mrf.mxu0
        %2773 = vmatprep.mubr.bf16.mxu0 0
        %2774 = vmatmul.mubr.bf16.gmra.mxu0 %v2053
        %v2775 = vpop.f32.mrf.mxu0
        %v2776 = vadd.f32 %v1214, %v2775
        %v2777 = vpop.f32.mrf.mxu0
        %v2778 = vpop.f32.mrf.mxu0
        %v2779 = vadd.f32 %v1214, %v2778
        %v2780 = vpop.f32.mrf.mxu0
        %2781 = vmatprep.mubr.bf16.mxu0 0
        %2782 = vmatmul.mubr.bf16.gmra.mxu0 %v2056
        %v2783 = vpop.f32.mrf.mxu0
        %v2784 = vadd.f32 %v1214, %v2783
        %v2785 = vpop.f32.mrf.mxu0
        %v2786 = vpop.f32.mrf.mxu0
        %v2787 = vadd.f32 %v1214, %v2786
        %v2788 = vpop.f32.mrf.mxu0
        %2789 = vmatprep.mubr.bf16.mxu0 0
        %2790 = vmatmul.mubr.bf16.gmra.mxu0 %v2059
        %v2791 = vpop.f32.mrf.mxu0
        %v2792 = vadd.f32 %v1214, %v2791
        %v2793 = vpop.f32.mrf.mxu0
        %v2794 = vpop.f32.mrf.mxu0
        %v2795 = vadd.f32 %v1214, %v2794
        %v2796 = vpop.f32.mrf.mxu0
        %2797 = vmatprep.mubr.bf16.mxu0 0
        %2798 = vmatmul.mubr.bf16.gmra.mxu0 %v2062
        %v2799 = vpop.f32.mrf.mxu0
        %v2800 = vadd.f32 %v1214, %v2799
        %v2801 = vpop.f32.mrf.mxu0
        %v2802 = vpop.f32.mrf.mxu0
        %v2803 = vadd.f32 %v1214, %v2802
        %v2804 = vpop.f32.mrf.mxu0
        %2805 = vmatprep.mubr.bf16.mxu0 0
        %2806 = vmatmul.mubr.bf16.gmra.mxu0 %v2065
        %v2807 = vpop.f32.mrf.mxu0
        %v2808 = vadd.f32 %v1214, %v2807
        %v2809 = vpop.f32.mrf.mxu0
        %v2810 = vpop.f32.mrf.mxu0
        %v2811 = vadd.f32 %v1214, %v2810
        %v2812 = vpop.f32.mrf.mxu0
        %2813 = vmatprep.mubr.bf16.mxu0 0
        %2814 = vmatmul.mubr.bf16.gmra.mxu0 %v2068
        %v2815 = vpop.f32.mrf.mxu0
        %v2816 = vadd.f32 %v1214, %v2815
        %v2817 = vpop.f32.mrf.mxu0
        %v2818 = vpop.f32.mrf.mxu0
        %v2819 = vadd.f32 %v1214, %v2818
        %v2820 = vpop.f32.mrf.mxu0
        %2821 = vmatprep.mubr.bf16.mxu0 0
        %2822 = vmatmul.mubr.bf16.gmra.mxu0 %v2071
        %v2823 = vpop.f32.mrf.mxu0
        %v2824 = vadd.f32 %v1214, %v2823
        %v2825 = vpop.f32.mrf.mxu0
        %v2826 = vpop.f32.mrf.mxu0
        %v2827 = vadd.f32 %v1214, %v2826
        %v2828 = vpop.f32.mrf.mxu0
        %2829 = vmatprep.mubr.bf16.mxu0 0
        %2830 = vmatmul.mubr.bf16.gmra.mxu0 %v2074
        %v2831 = vpop.f32.mrf.mxu0
        %v2832 = vadd.f32 %v1214, %v2831
        %v2833 = vpop.f32.mrf.mxu0
        %v2834 = vpop.f32.mrf.mxu0
        %v2835 = vadd.f32 %v1214, %v2834
        %v2836 = vpop.f32.mrf.mxu0
        %2837 = vmatprep.mubr.bf16.mxu0 0
        %2838 = vmatmul.mubr.bf16.gmra.mxu0 %v2077
        %v2839 = vpop.f32.mrf.mxu0
        %v2840 = vadd.f32 %v1214, %v2839
        %v2841 = vpop.f32.mrf.mxu0
        %v2842 = vpop.f32.mrf.mxu0
        %v2843 = vadd.f32 %v1214, %v2842
        %v2844 = vpop.f32.mrf.mxu0
        %2845 = vmatprep.mubr.bf16.mxu0 0
        %2846 = vmatmul.mubr.bf16.gmra.mxu0 %v2080
        %v2847 = vpop.f32.mrf.mxu0
        %v2848 = vadd.f32 %v1214, %v2847
        %v2849 = vpop.f32.mrf.mxu0
        %v2850 = vpop.f32.mrf.mxu0
        %v2851 = vadd.f32 %v1214, %v2850
        %v2852 = vpop.f32.mrf.mxu0
        %2853 = vmatprep.mubr.bf16.mxu0 0
        %2854 = vmatmul.mubr.bf16.gmra.mxu0 %v2083
        %v2855 = vpop.f32.mrf.mxu0
        %v2856 = vadd.f32 %v1214, %v2855
        %v2857 = vpop.f32.mrf.mxu0
        %v2858 = vpop.f32.mrf.mxu0
        %v2859 = vadd.f32 %v1214, %v2858
        %v2860 = vpop.f32.mrf.mxu0
        %2861 = vmatprep.mubr.bf16.mxu0 0
        %2862 = vmatmul.mubr.bf16.gmra.mxu0 %v2086
        %v2863 = vpop.f32.mrf.mxu0
        %v2864 = vadd.f32 %v1214, %v2863
        %v2865 = vpop.f32.mrf.mxu0
        %v2866 = vpop.f32.mrf.mxu0
        %v2867 = vadd.f32 %v1214, %v2866
        %v2868 = vpop.f32.mrf.mxu0
        %2869 = vmatprep.mubr.bf16.mxu0 0
        %2870 = vmatmul.mubr.bf16.gmra.mxu0 %v2089
        %v2871 = vpop.f32.mrf.mxu0
        %v2872 = vadd.f32 %v1214, %v2871
        %v2873 = vpop.f32.mrf.mxu0
        %v2874 = vpop.f32.mrf.mxu0
        %v2875 = vadd.f32 %v1214, %v2874
        %v2876 = vpop.f32.mrf.mxu0
        %2877 = vmatprep.mubr.bf16.mxu0 0
        %2878 = vmatmul.mubr.bf16.gmra.mxu0 %v2092
        %v2879 = vpop.f32.mrf.mxu0
        %v2880 = vadd.f32 %v1214, %v2879
        %v2881 = vpop.f32.mrf.mxu0
        %v2882 = vpop.f32.mrf.mxu0
        %v2883 = vadd.f32 %v1214, %v2882
        %v2884 = vpop.f32.mrf.mxu0
        %2885 = vmatprep.mubr.bf16.mxu0 0
        %2886 = vmatmul.mubr.bf16.gmra.mxu0 %v2095
        %v2887 = vpop.f32.mrf.mxu0
        %v2888 = vadd.f32 %v1214, %v2887
        %v2889 = vpop.f32.mrf.mxu0
        %v2890 = vpop.f32.mrf.mxu0
        %v2891 = vadd.f32 %v1214, %v2890
        %v2892 = vpop.f32.mrf.mxu0
        %2893 = vmatprep.mubr.bf16.mxu0 0
        %2894 = vmatmul.mubr.bf16.gmra.mxu0 %v2098
        %v2895 = vpop.f32.mrf.mxu0
        %v2896 = vadd.f32 %v1214, %v2895
        %v2897 = vpop.f32.mrf.mxu0
        %v2898 = vpop.f32.mrf.mxu0
        %v2899 = vadd.f32 %v1214, %v2898
        %v2900 = vpop.f32.mrf.mxu0
        %2901 = vmatprep.mubr.bf16.mxu0 0
        %2902 = vmatmul.mubr.bf16.gmra.mxu0 %v2101
        %v2903 = vpop.f32.mrf.mxu0
        %v2904 = vadd.f32 %v1214, %v2903
        %v2905 = vpop.f32.mrf.mxu0
        %v2906 = vpop.f32.mrf.mxu0
        %v2907 = vadd.f32 %v1214, %v2906
        %v2908 = vpop.f32.mrf.mxu0
        %2909 = vmatprep.mubr.bf16.mxu0 0
        %2910 = vmatmul.mubr.bf16.gmra.mxu0 %v2104
        %v2911 = vpop.f32.mrf.mxu0
        %v2912 = vadd.f32 %v1214, %v2911
        %v2913 = vpop.f32.mrf.mxu0
        %v2914 = vpop.f32.mrf.mxu0
        %v2915 = vadd.f32 %v1214, %v2914
        %v2916 = vpop.f32.mrf.mxu0
        %2917 = vmatprep.mubr.bf16.mxu0 0
        %2918 = vmatmul.mubr.bf16.gmra.mxu0 %v2107
        %v2919 = vpop.f32.mrf.mxu0
        %v2920 = vadd.f32 %v1214, %v2919
        %v2921 = vpop.f32.mrf.mxu0
        %v2922 = vpop.f32.mrf.mxu0
        %v2923 = vadd.f32 %v1214, %v2922
        %v2924 = vpop.f32.mrf.mxu0
        %2925 = vmatprep.mubr.bf16.mxu0 0
        %2926 = vmatmul.mubr.bf16.gmra.mxu0 %v2110
        %v2927 = vpop.f32.mrf.mxu0
        %v2928 = vadd.f32 %v1214, %v2927
        %v2929 = vpop.f32.mrf.mxu0
        %v2930 = vpop.f32.mrf.mxu0
        %v2931 = vadd.f32 %v1214, %v2930
        %v2932 = vpop.f32.mrf.mxu0
        %2933 = vmatprep.mubr.bf16.mxu0 0
        %2934 = vmatmul.mubr.bf16.gmra.mxu0 %v2113
        %v2935 = vpop.f32.mrf.mxu0
        %v2936 = vadd.f32 %v1214, %v2935
        %v2937 = vpop.f32.mrf.mxu0
        %v2938 = vpop.f32.mrf.mxu0
        %v2939 = vadd.f32 %v1214, %v2938
        %v2940 = vpop.f32.mrf.mxu0
        %2941 = vmatprep.mubr.bf16.mxu0 0
        %2942 = vmatmul.mubr.bf16.gmra.mxu0 %v2116
        %v2943 = vpop.f32.mrf.mxu0
        %v2944 = vadd.f32 %v1214, %v2943
        %v2945 = vpop.f32.mrf.mxu0
        %v2946 = vpop.f32.mrf.mxu0
        %v2947 = vadd.f32 %v1214, %v2946
        %v2948 = vpop.f32.mrf.mxu0
        %2949 = vmatprep.mubr.bf16.mxu0 0
        %2950 = vmatmul.mubr.bf16.gmra.mxu0 %v2119
        %v2951 = vpop.f32.mrf.mxu0
        %v2952 = vadd.f32 %v1214, %v2951
        %v2953 = vpop.f32.mrf.mxu0
        %v2954 = vpop.f32.mrf.mxu0
        %v2955 = vadd.f32 %v1214, %v2954
        %v2956 = vpop.f32.mrf.mxu0
        %2957 = vmatprep.mubr.bf16.mxu0 0
        %2958 = vmatmul.mubr.bf16.gmra.mxu0 %v2122
        %v2959 = vpop.f32.mrf.mxu0
        %v2960 = vadd.f32 %v1214, %v2959
        %v2961 = vpop.f32.mrf.mxu0
        %v2962 = vpop.f32.mrf.mxu0
        %v2963 = vadd.f32 %v1214, %v2962
        %v2964 = vpop.f32.mrf.mxu0
        %2965 = vmatprep.mubr.bf16.mxu0 0
        %2966 = vmatmul.mubr.bf16.gmra.mxu0 %v2125
        %v2967 = vpop.f32.mrf.mxu0
        %v2968 = vadd.f32 %v1214, %v2967
        %v2969 = vpop.f32.mrf.mxu0
        %v2970 = vpop.f32.mrf.mxu0
        %v2971 = vadd.f32 %v1214, %v2970
        %v2972 = vpop.f32.mrf.mxu0
        %2973 = vmatprep.mubr.bf16.mxu0 0
        %2974 = vmatmul.mubr.bf16.gmra.mxu0 %v2128
        %v2975 = vpop.f32.mrf.mxu0
        %v2976 = vadd.f32 %v1214, %v2975
        %v2977 = vpop.f32.mrf.mxu0
        %v2978 = vpop.f32.mrf.mxu0
        %v2979 = vadd.f32 %v1214, %v2978
        %v2980 = vpop.f32.mrf.mxu0
        %2981 = vmatprep.mubr.bf16.mxu0 0
        %2982 = vmatmul.mubr.bf16.gmra.mxu0 %v2131
        %v2983 = vpop.f32.mrf.mxu0
        %v2984 = vadd.f32 %v1214, %v2983
        %v2985 = vpop.f32.mrf.mxu0
        %v2986 = vpop.f32.mrf.mxu0
        %v2987 = vadd.f32 %v1214, %v2986
        %v2988 = vpop.f32.mrf.mxu0
        %2989 = vmatprep.mubr.bf16.mxu0 0
        %2990 = vmatmul.mubr.bf16.gmra.mxu0 %v2134
        %v2991 = vpop.f32.mrf.mxu0
        %v2992 = vadd.f32 %v1214, %v2991
        %v2993 = vpop.f32.mrf.mxu0
        %v2994 = vpop.f32.mrf.mxu0
        %v2995 = vadd.f32 %v1214, %v2994
        %v2996 = vpop.f32.mrf.mxu0
        %2997 = vmatprep.mubr.bf16.mxu0 0
        %2998 = vmatmul.mubr.bf16.gmra.mxu0 %v2137
        %v2999 = vpop.f32.mrf.mxu0
        %v3000 = vadd.f32 %v1214, %v2999
        %v3001 = vpop.f32.mrf.mxu0
        %v3002 = vpop.f32.mrf.mxu0
        %v3003 = vadd.f32 %v1214, %v3002
        %v3004 = vpop.f32.mrf.mxu0
        %3005 = vmatprep.mubr.bf16.mxu0 0
        %3006 = vmatmul.mubr.bf16.gmra.mxu0 %v2140
        %v3007 = vpop.f32.mrf.mxu0
        %v3008 = vadd.f32 %v1214, %v3007
        %v3009 = vpop.f32.mrf.mxu0
        %v3010 = vpop.f32.mrf.mxu0
        %v3011 = vadd.f32 %v1214, %v3010
        %v3012 = vpop.f32.mrf.mxu0
        %3013 = vmatprep.mubr.bf16.mxu0 0
        %3014 = vmatmul.mubr.bf16.gmra.mxu0 %v2143
        %v3015 = vpop.f32.mrf.mxu0
        %v3016 = vadd.f32 %v1214, %v3015
        %v3017 = vpop.f32.mrf.mxu0
        %v3018 = vpop.f32.mrf.mxu0
        %v3019 = vadd.f32 %v1214, %v3018
        %v3020 = vpop.f32.mrf.mxu0
        %3021 = vmatprep.mubr.bf16.mxu0 0
        %3022 = vmatmul.mubr.bf16.gmra.mxu0 %v2146
        %v3023 = vpop.f32.mrf.mxu0
        %v3024 = vadd.f32 %v1214, %v3023
        %v3025 = vpop.f32.mrf.mxu0
        %v3026 = vpop.f32.mrf.mxu0
        %v3027 = vadd.f32 %v1214, %v3026
        %v3028 = vpop.f32.mrf.mxu0
        %3029 = vmatprep.mubr.bf16.mxu0 0
        %3030 = vmatmul.mubr.bf16.gmra.mxu0 %v2149
        %v3031 = vpop.f32.mrf.mxu0
        %v3032 = vadd.f32 %v1214, %v3031
        %v3033 = vpop.f32.mrf.mxu0
        %v3034 = vpop.f32.mrf.mxu0
        %v3035 = vadd.f32 %v1214, %v3034
        %v3036 = vpop.f32.mrf.mxu0
        %3037 = vmatprep.mubr.bf16.mxu0 0
        %3038 = vmatmul.mubr.bf16.gmra.mxu0 %v2152
        %v3039 = vpop.f32.mrf.mxu0
        %v3040 = vadd.f32 %v1214, %v3039
        %v3041 = vpop.f32.mrf.mxu0
        %v3042 = vpop.f32.mrf.mxu0
        %v3043 = vadd.f32 %v1214, %v3042
        %v3044 = vpop.f32.mrf.mxu0
        %3045 = vmatprep.mubr.bf16.mxu0 0
        %3046 = vmatmul.mubr.bf16.gmra.mxu0 %v2155
        %v3047 = vpop.f32.mrf.mxu0
        %v3048 = vadd.f32 %v1214, %v3047
        %v3049 = vpop.f32.mrf.mxu0
        %v3050 = vpop.f32.mrf.mxu0
        %v3051 = vadd.f32 %v1214, %v3050
        %v3052 = vpop.f32.mrf.mxu0
        %3053 = vmatprep.mubr.bf16.mxu0 0
        %3054 = vmatmul.mubr.bf16.gmra.mxu0 %v2158
        %v3055 = vpop.f32.mrf.mxu0
        %v3056 = vadd.f32 %v1214, %v3055
        %v3057 = vpop.f32.mrf.mxu0
        %v3058 = vpop.f32.mrf.mxu0
        %v3059 = vadd.f32 %v1214, %v3058
        %v3060 = vpop.f32.mrf.mxu0
        %3061 = vmatprep.mubr.bf16.mxu0 0
        %3062 = vmatmul.mubr.bf16.gmra.mxu0 %v2161
        %v3063 = vpop.f32.mrf.mxu0
        %v3064 = vadd.f32 %v1214, %v3063
        %v3065 = vpop.f32.mrf.mxu0
        %v3066 = vpop.f32.mrf.mxu0
        %v3067 = vadd.f32 %v1214, %v3066
        %v3068 = vpop.f32.mrf.mxu0
        %3069 = vmatprep.mubr.bf16.mxu0 0
        %3070 = vmatmul.mubr.bf16.gmra.mxu0 %v2164
        %v3071 = vpop.f32.mrf.mxu0
        %v3072 = vadd.f32 %v1214, %v3071
        %v3073 = vpop.f32.mrf.mxu0
        %v3074 = vpop.f32.mrf.mxu0
        %v3075 = vadd.f32 %v1214, %v3074
        %v3076 = vpop.f32.mrf.mxu0
        %3077 = vmatprep.mubr.bf16.mxu0 0
        %3078 = vmatmul.mubr.bf16.gmra.mxu0 %v2167
        %v3079 = vpop.f32.mrf.mxu0
        %v3080 = vadd.f32 %v1214, %v3079
        %v3081 = vpop.f32.mrf.mxu0
        %v3082 = vpop.f32.mrf.mxu0
        %v3083 = vadd.f32 %v1214, %v3082
        %v3084 = vpop.f32.mrf.mxu0
        %3085 = vmatprep.mubr.bf16.mxu0 0
        %3086 = vmatmul.mubr.bf16.gmra.mxu0 %v2170
        %v3087 = vpop.f32.mrf.mxu0
        %v3088 = vadd.f32 %v1214, %v3087
        %v3089 = vpop.f32.mrf.mxu0
        %v3090 = vpop.f32.mrf.mxu0
        %v3091 = vadd.f32 %v1214, %v3090
        %v3092 = vpop.f32.mrf.mxu0
        %3093 = vmatprep.mubr.bf16.mxu0 0
        %3094 = vmatmul.mubr.bf16.gmra.mxu0 %v2173
        %v3095 = vpop.f32.mrf.mxu0
        %v3096 = vadd.f32 %v1214, %v3095
        %v3097 = vpop.f32.mrf.mxu0
        %v3098 = vpop.f32.mrf.mxu0
        %v3099 = vadd.f32 %v1214, %v3098
        %v3100 = vpop.f32.mrf.mxu0
        %3101 = vmatprep.mubr.bf16.mxu0 0
        %3102 = vmatmul.mubr.bf16.gmra.mxu0 %v2176
        %v3103 = vpop.f32.mrf.mxu0
        %v3104 = vadd.f32 %v1214, %v3103
        %v3105 = vpop.f32.mrf.mxu0
        %v3106 = vpop.f32.mrf.mxu0
        %v3107 = vadd.f32 %v1214, %v3106
        %v3108 = vpop.f32.mrf.mxu0
        %3109 = vmatprep.mubr.bf16.mxu0 0
        %3110 = vmatmul.mubr.bf16.gmra.mxu0 %v2179
        %v3111 = vpop.f32.mrf.mxu0
        %v3112 = vadd.f32 %v1214, %v3111
        %v3113 = vpop.f32.mrf.mxu0
        %v3114 = vpop.f32.mrf.mxu0
        %v3115 = vadd.f32 %v1214, %v3114
        %v3116 = vpop.f32.mrf.mxu0
        %3117 = vmatprep.mubr.bf16.mxu0 0
        %3118 = vmatmul.mubr.bf16.gmra.mxu0 %v2182
        %v3119 = vpop.f32.mrf.mxu0
        %v3120 = vadd.f32 %v1214, %v3119
        %v3121 = vpop.f32.mrf.mxu0
        %v3122 = vpop.f32.mrf.mxu0
        %v3123 = vadd.f32 %v1214, %v3122
        %v3124 = vpop.f32.mrf.mxu0
        %3125 = vmatprep.mubr.bf16.mxu0 0
        %3126 = vmatmul.mubr.bf16.gmra.mxu0 %v2185
        %v3127 = vpop.f32.mrf.mxu0
        %v3128 = vadd.f32 %v1214, %v3127
        %v3129 = vpop.f32.mrf.mxu0
        %v3130 = vpop.f32.mrf.mxu0
        %v3131 = vadd.f32 %v1214, %v3130
        %v3132 = vpop.f32.mrf.mxu0
        %3133 = vmatprep.mubr.bf16.mxu0 0
        %3134 = vmatmul.mubr.bf16.gmra.mxu0 %v2188
        %v3135 = vpop.f32.mrf.mxu0
        %v3136 = vadd.f32 %v1214, %v3135
        %v3137 = vpop.f32.mrf.mxu0
        %v3138 = vpop.f32.mrf.mxu0
        %v3139 = vadd.f32 %v1214, %v3138
        %v3140 = vpop.f32.mrf.mxu0
        %3141 = vmatprep.mubr.bf16.mxu0 0
        %3142 = vmatmul.mubr.bf16.gmra.mxu0 %v2191
        %v3143 = vpop.f32.mrf.mxu0
        %v3144 = vadd.f32 %v1214, %v3143
        %v3145 = vpop.f32.mrf.mxu0
        %v3146 = vpop.f32.mrf.mxu0
        %v3147 = vadd.f32 %v1214, %v3146
        %v3148 = vpop.f32.mrf.mxu0
        %3149 = vmatprep.mubr.bf16.mxu0 0
        %3150 = vmatmul.mubr.bf16.gmra.mxu0 %v2194
        %v3151 = vpop.f32.mrf.mxu0
        %v3152 = vadd.f32 %v1214, %v3151
        %v3153 = vpop.f32.mrf.mxu0
        %v3154 = vpop.f32.mrf.mxu0
        %v3155 = vadd.f32 %v1214, %v3154
        %v3156 = vpop.f32.mrf.mxu0
        %3157 = vmatprep.mubr.bf16.mxu0 0
        %3158 = vmatmul.mubr.bf16.gmra.mxu0 %v2197
        %v3159 = vpop.f32.mrf.mxu0
        %v3160 = vadd.f32 %v1214, %v3159
        %v3161 = vpop.f32.mrf.mxu0
        %v3162 = vpop.f32.mrf.mxu0
        %v3163 = vadd.f32 %v1214, %v3162
        %v3164 = vpop.f32.mrf.mxu0
        %3165 = vmatprep.mubr.bf16.mxu0 0
        %3166 = vmatmul.mubr.bf16.gmra.mxu0 %v2200
        %v3167 = vpop.f32.mrf.mxu0
        %v3168 = vadd.f32 %v1214, %v3167
        %v3169 = vpop.f32.mrf.mxu0
        %v3170 = vpop.f32.mrf.mxu0
        %v3171 = vadd.f32 %v1214, %v3170
        %v3172 = vpop.f32.mrf.mxu0
        %3173 = vmatprep.mubr.bf16.mxu0 0
        %3174 = vmatmul.mubr.bf16.gmra.mxu0 %v2203
        %v3175 = vpop.f32.mrf.mxu0
        %v3176 = vadd.f32 %v1214, %v3175
        %v3177 = vpop.f32.mrf.mxu0
        %v3178 = vpop.f32.mrf.mxu0
        %v3179 = vadd.f32 %v1214, %v3178
        %v3180 = vpop.f32.mrf.mxu0
        %3181 = vmatprep.mubr.bf16.mxu0 0
        %3182 = vmatmul.mubr.bf16.gmra.mxu0 %v2206
        %v3183 = vpop.f32.mrf.mxu0
        %v3184 = vadd.f32 %v1214, %v3183
        %v3185 = vpop.f32.mrf.mxu0
        %v3186 = vpop.f32.mrf.mxu0
        %v3187 = vadd.f32 %v1214, %v3186
        %v3188 = vpop.f32.mrf.mxu0
        %3189 = vmatprep.mubr.bf16.mxu0 0
        %3190 = vmatmul.mubr.bf16.gmra.mxu0 %v2209
        %v3191 = vpop.f32.mrf.mxu0
        %v3192 = vadd.f32 %v1214, %v3191
        %v3193 = vpop.f32.mrf.mxu0
        %v3194 = vpop.f32.mrf.mxu0
        %v3195 = vadd.f32 %v1214, %v3194
        %v3196 = vpop.f32.mrf.mxu0
        %3197 = vmatprep.mubr.bf16.mxu0 0
        %3198 = vmatmul.mubr.bf16.gmra.mxu0 %v2212
        %v3199 = vpop.f32.mrf.mxu0
        %v3200 = vadd.f32 %v1214, %v3199
        %v3201 = vpop.f32.mrf.mxu0
        %v3202 = vpop.f32.mrf.mxu0
        %v3203 = vadd.f32 %v1214, %v3202
        %v3204 = vpop.f32.mrf.mxu0
        %3205 = vmatprep.mubr.bf16.mxu0 0
        %3206 = vmatmul.mubr.bf16.gmra.mxu0 %v2215
        %v3207 = vpop.f32.mrf.mxu0
        %v3208 = vadd.f32 %v1214, %v3207
        %v3209 = vpop.f32.mrf.mxu0
        %v3210 = vpop.f32.mrf.mxu0
        %v3211 = vadd.f32 %v1214, %v3210
        %v3212 = vpop.f32.mrf.mxu0
        %3213 = vmatprep.mubr.bf16.mxu0 0
        %3214 = vmatmul.mubr.bf16.gmra.mxu0 %v2218
        %v3215 = vpop.f32.mrf.mxu0
        %v3216 = vadd.f32 %v1214, %v3215
        %v3217 = vpop.f32.mrf.mxu0
        %v3218 = vpop.f32.mrf.mxu0
        %v3219 = vadd.f32 %v1214, %v3218
        %v3220 = vpop.f32.mrf.mxu0
        %3221 = vmatprep.mubr.bf16.mxu0 0
        %3222 = vmatmul.mubr.bf16.gmra.mxu0 %v2221
        %v3223 = vpop.f32.mrf.mxu0
        %v3224 = vadd.f32 %v1214, %v3223
        %v3225 = vpop.f32.mrf.mxu0
        %v3226 = vpop.f32.mrf.mxu0
        %v3227 = vadd.f32 %v1214, %v3226
        %v3228 = vpop.f32.mrf.mxu0
        %3229 = vmatprep.mubr.bf16.mxu0 0
        %3230 = vmatmul.mubr.bf16.gmra.mxu0 %v2224
        %v3231 = vpop.f32.mrf.mxu0
        %v3232 = vadd.f32 %v1214, %v3231
        %v3233 = vpop.f32.mrf.mxu0
        %v3234 = vpop.f32.mrf.mxu0
        %v3235 = vadd.f32 %v1214, %v3234
        %v3236 = vpop.f32.mrf.mxu0
        %3237 = vmatprep.mubr.bf16.mxu0 0
        %3238 = vmatmul.mubr.bf16.gmra.mxu0 %v2227
        %v3239 = vpop.f32.mrf.mxu0
        %v3240 = vadd.f32 %v1214, %v3239
        %v3241 = vpop.f32.mrf.mxu0
        %v3242 = vpop.f32.mrf.mxu0
        %v3243 = vadd.f32 %v1214, %v3242
        %v3244 = vpop.f32.mrf.mxu0
        %3245 = vmatprep.mubr.bf16.mxu0 0
        %3246 = vmatmul.mubr.bf16.gmra.mxu0 %v2230
        %v3247 = vpop.f32.mrf.mxu0
        %v3248 = vadd.f32 %v1214, %v3247
        %v3249 = vpop.f32.mrf.mxu0
        %v3250 = vpop.f32.mrf.mxu0
        %v3251 = vadd.f32 %v1214, %v3250
        %v3252 = vpop.f32.mrf.mxu0
        %3253 = vmatprep.mubr.bf16.mxu0 0
        %3254 = vmatmul.mubr.bf16.gmra.mxu0 %v2233
        %v3255 = vpop.f32.mrf.mxu0
        %v3256 = vadd.f32 %v1214, %v3255
        %v3257 = vpop.f32.mrf.mxu0
        %v3258 = vpop.f32.mrf.mxu0
        %v3259 = vadd.f32 %v1214, %v3258
        %v3260 = vpop.f32.mrf.mxu0
        %3261 = vmatprep.mubr.bf16.mxu0 0
        %3262 = vmatmul.mubr.bf16.gmra.mxu0 %v2236
        %v3263 = vpop.f32.mrf.mxu0
        %v3264 = vadd.f32 %v1214, %v3263
        %v3265 = vpop.f32.mrf.mxu0
        %v3266 = vpop.f32.mrf.mxu0
        %v3267 = vadd.f32 %v1214, %v3266
        %v3268 = vpop.f32.mrf.mxu0
        %3269 = vmatprep.mubr.bf16.mxu0 0
        %3270 = vmatmul.mubr.bf16.gmra.mxu0 %v2239
        %v3271 = vpop.f32.mrf.mxu0
        %v3272 = vadd.f32 %v1214, %v3271
        %v3273 = vpop.f32.mrf.mxu0
        %v3274 = vpop.f32.mrf.mxu0
        %v3275 = vadd.f32 %v1214, %v3274
        %v3276 = vpop.f32.mrf.mxu0
        %3277 = vmatprep.mubr.bf16.mxu0 0
        %3278 = vmatmul.mubr.bf16.gmra.mxu0 %v2242
        %v3279 = vpop.f32.mrf.mxu0
        %v3280 = vadd.f32 %v1214, %v3279
        %v3281 = vpop.f32.mrf.mxu0
        %v3282 = vpop.f32.mrf.mxu0
        %v3283 = vadd.f32 %v1214, %v3282
        %v3284 = vpop.f32.mrf.mxu0
        %3285 = vmatprep.mubr.bf16.mxu0 0
        %3286 = vmatmul.mubr.bf16.gmra.mxu0 %v2245
        %v3287 = vpop.f32.mrf.mxu0
        %v3288 = vadd.f32 %v1214, %v3287
        %v3289 = vpop.f32.mrf.mxu0
        %v3290 = vpop.f32.mrf.mxu0
        %v3291 = vadd.f32 %v1214, %v3290
        %v3292 = vpop.f32.mrf.mxu0
        %3293 = vmatprep.mubr.bf16.mxu0 0
        %3294 = vmatmul.mubr.bf16.gmra.mxu0 %v2248
        %v3295 = vpop.f32.mrf.mxu0
        %v3296 = vadd.f32 %v1214, %v3295
        %v3297 = vpop.f32.mrf.mxu0
        %v3298 = vpop.f32.mrf.mxu0
        %v3299 = vadd.f32 %v1214, %v3298
        %v3300 = vpop.f32.mrf.mxu0
        %3301 = vmatprep.mubr.bf16.mxu0 0
        %3302 = vmatmul.mubr.bf16.gmra.mxu0 %v2251
        %v3303 = vpop.f32.mrf.mxu0
        %v3304 = vadd.f32 %v1214, %v3303
        %v3305 = vpop.f32.mrf.mxu0
        %v3306 = vpop.f32.mrf.mxu0
        %v3307 = vadd.f32 %v1214, %v3306
        %v3308 = vpop.f32.mrf.mxu0
        %3309 = vdwg.mxu0
        %v3310 = vmax.f32 %v2288, 0.0
        %v3311 = vmax.f32 %v2291, 0.0
        %v3312 = vmax.f32 %v2296, 0.0
        %v3313 = vmax.f32 %v2299, 0.0
        %v3314 = vmax.f32 %v2304, 0.0
        %v3315 = vmax.f32 %v2307, 0.0
        %v3316 = vmax.f32 %v2312, 0.0
        %v3317 = vmax.f32 %v2315, 0.0
        %v3318 = vmax.f32 %v2320, 0.0
        %v3319 = vmax.f32 %v2323, 0.0
        %v3320 = vmax.f32 %v2328, 0.0
        %v3321 = vmax.f32 %v2331, 0.0
        %v3322 = vmax.f32 %v2336, 0.0
        %v3323 = vmax.f32 %v2339, 0.0
        %v3324 = vmax.f32 %v2344, 0.0
        %v3325 = vmax.f32 %v2347, 0.0
        %v3326 = vmax.f32 %v2352, 0.0
        %v3327 = vmax.f32 %v2355, 0.0
        %v3328 = vmax.f32 %v2360, 0.0
        %v3329 = vmax.f32 %v2363, 0.0
        %v3330 = vmax.f32 %v2368, 0.0
        %v3331 = vmax.f32 %v2371, 0.0
        %v3332 = vmax.f32 %v2376, 0.0
        %v3333 = vmax.f32 %v2379, 0.0
        %v3334 = vmax.f32 %v2384, 0.0
        %v3335 = vmax.f32 %v2387, 0.0
        %v3336 = vmax.f32 %v2392, 0.0
        %v3337 = vmax.f32 %v2395, 0.0
        %v3338 = vmax.f32 %v2400, 0.0
        %v3339 = vmax.f32 %v2403, 0.0
        %v3340 = vmax.f32 %v2408, 0.0
        %v3341 = vmax.f32 %v2411, 0.0
        %v3342 = vmax.f32 %v2416, 0.0
        %v3343 = vmax.f32 %v2419, 0.0
        %v3344 = vmax.f32 %v2424, 0.0
        %v3345 = vmax.f32 %v2427, 0.0
        %v3346 = vmax.f32 %v2432, 0.0
        %v3347 = vmax.f32 %v2435, 0.0
        %v3348 = vmax.f32 %v2440, 0.0
        %v3349 = vmax.f32 %v2443, 0.0
        %v3350 = vmax.f32 %v2448, 0.0
        %v3351 = vmax.f32 %v2451, 0.0
        %v3352 = vmax.f32 %v2456, 0.0
        %v3353 = vmax.f32 %v2459, 0.0
        %v3354 = vmax.f32 %v2464, 0.0
        %v3355 = vmax.f32 %v2467, 0.0
        %v3356 = vmax.f32 %v2472, 0.0
        %v3357 = vmax.f32 %v2475, 0.0
        %v3358 = vmax.f32 %v2480, 0.0
        %v3359 = vmax.f32 %v2483, 0.0
        %v3360 = vmax.f32 %v2488, 0.0
        %v3361 = vmax.f32 %v2491, 0.0
        %v3362 = vmax.f32 %v2496, 0.0
        %v3363 = vmax.f32 %v2499, 0.0
        %v3364 = vmax.f32 %v2504, 0.0
        %v3365 = vmax.f32 %v2507, 0.0
        %v3366 = vmax.f32 %v2512, 0.0
        %v3367 = vmax.f32 %v2515, 0.0
        %v3368 = vmax.f32 %v2520, 0.0
        %v3369 = vmax.f32 %v2523, 0.0
        %v3370 = vmax.f32 %v2528, 0.0
        %v3371 = vmax.f32 %v2531, 0.0
        %v3372 = vmax.f32 %v2536, 0.0
        %v3373 = vmax.f32 %v2539, 0.0
        %v3374 = vmax.f32 %v2544, 0.0
        %v3375 = vmax.f32 %v2547, 0.0
        %v3376 = vmax.f32 %v2552, 0.0
        %v3377 = vmax.f32 %v2555, 0.0
        %v3378 = vmax.f32 %v2560, 0.0
        %v3379 = vmax.f32 %v2563, 0.0
        %v3380 = vmax.f32 %v2568, 0.0
        %v3381 = vmax.f32 %v2571, 0.0
        %v3382 = vmax.f32 %v2576, 0.0
        %v3383 = vmax.f32 %v2579, 0.0
        %v3384 = vmax.f32 %v2584, 0.0
        %v3385 = vmax.f32 %v2587, 0.0
        %v3386 = vmax.f32 %v2592, 0.0
        %v3387 = vmax.f32 %v2595, 0.0
        %v3388 = vmax.f32 %v2600, 0.0
        %v3389 = vmax.f32 %v2603, 0.0
        %v3390 = vmax.f32 %v2608, 0.0
        %v3391 = vmax.f32 %v2611, 0.0
        %v3392 = vmax.f32 %v2616, 0.0
        %v3393 = vmax.f32 %v2619, 0.0
        %v3394 = vmax.f32 %v2624, 0.0
        %v3395 = vmax.f32 %v2627, 0.0
        %v3396 = vmax.f32 %v2632, 0.0
        %v3397 = vmax.f32 %v2635, 0.0
        %v3398 = vmax.f32 %v2640, 0.0
        %v3399 = vmax.f32 %v2643, 0.0
        %v3400 = vmax.f32 %v2648, 0.0
        %v3401 = vmax.f32 %v2651, 0.0
        %v3402 = vmax.f32 %v2656, 0.0
        %v3403 = vmax.f32 %v2659, 0.0
        %v3404 = vmax.f32 %v2664, 0.0
        %v3405 = vmax.f32 %v2667, 0.0
        %v3406 = vmax.f32 %v2672, 0.0
        %v3407 = vmax.f32 %v2675, 0.0
        %v3408 = vmax.f32 %v2680, 0.0
        %v3409 = vmax.f32 %v2683, 0.0
        %v3410 = vmax.f32 %v2688, 0.0
        %v3411 = vmax.f32 %v2691, 0.0
        %v3412 = vmax.f32 %v2696, 0.0
        %v3413 = vmax.f32 %v2699, 0.0
        %v3414 = vmax.f32 %v2704, 0.0
        %v3415 = vmax.f32 %v2707, 0.0
        %v3416 = vmax.f32 %v2712, 0.0
        %v3417 = vmax.f32 %v2715, 0.0
        %v3418 = vmax.f32 %v2720, 0.0
        %v3419 = vmax.f32 %v2723, 0.0
        %v3420 = vmax.f32 %v2728, 0.0
        %v3421 = vmax.f32 %v2731, 0.0
        %v3422 = vmax.f32 %v2736, 0.0
        %v3423 = vmax.f32 %v2739, 0.0
        %v3424 = vmax.f32 %v2744, 0.0
        %v3425 = vmax.f32 %v2747, 0.0
        %v3426 = vmax.f32 %v2752, 0.0
        %v3427 = vmax.f32 %v2755, 0.0
        %v3428 = vmax.f32 %v2760, 0.0
        %v3429 = vmax.f32 %v2763, 0.0
        %v3430 = vmax.f32 %v2768, 0.0
        %v3431 = vmax.f32 %v2771, 0.0
        %v3432 = vmax.f32 %v2776, 0.0
        %v3433 = vmax.f32 %v2779, 0.0
        %v3434 = vmax.f32 %v2784, 0.0
        %v3435 = vmax.f32 %v2787, 0.0
        %v3436 = vmax.f32 %v2792, 0.0
        %v3437 = vmax.f32 %v2795, 0.0
        %v3438 = vmax.f32 %v2800, 0.0
        %v3439 = vmax.f32 %v2803, 0.0
        %v3440 = vmax.f32 %v2808, 0.0
        %v3441 = vmax.f32 %v2811, 0.0
        %v3442 = vmax.f32 %v2816, 0.0
        %v3443 = vmax.f32 %v2819, 0.0
        %v3444 = vmax.f32 %v2824, 0.0
        %v3445 = vmax.f32 %v2827, 0.0
        %v3446 = vmax.f32 %v2832, 0.0
        %v3447 = vmax.f32 %v2835, 0.0
        %v3448 = vmax.f32 %v2840, 0.0
        %v3449 = vmax.f32 %v2843, 0.0
        %v3450 = vmax.f32 %v2848, 0.0
        %v3451 = vmax.f32 %v2851, 0.0
        %v3452 = vmax.f32 %v2856, 0.0
        %v3453 = vmax.f32 %v2859, 0.0
        %v3454 = vmax.f32 %v2864, 0.0
        %v3455 = vmax.f32 %v2867, 0.0
        %v3456 = vmax.f32 %v2872, 0.0
        %v3457 = vmax.f32 %v2875, 0.0
        %v3458 = vmax.f32 %v2880, 0.0
        %v3459 = vmax.f32 %v2883, 0.0
        %v3460 = vmax.f32 %v2888, 0.0
        %v3461 = vmax.f32 %v2891, 0.0
        %v3462 = vmax.f32 %v2896, 0.0
        %v3463 = vmax.f32 %v2899, 0.0
        %v3464 = vmax.f32 %v2904, 0.0
        %v3465 = vmax.f32 %v2907, 0.0
        %v3466 = vmax.f32 %v2912, 0.0
        %v3467 = vmax.f32 %v2915, 0.0
        %v3468 = vmax.f32 %v2920, 0.0
        %v3469 = vmax.f32 %v2923, 0.0
        %v3470 = vmax.f32 %v2928, 0.0
        %v3471 = vmax.f32 %v2931, 0.0
        %v3472 = vmax.f32 %v2936, 0.0
        %v3473 = vmax.f32 %v2939, 0.0
        %v3474 = vmax.f32 %v2944, 0.0
        %v3475 = vmax.f32 %v2947, 0.0
        %v3476 = vmax.f32 %v2952, 0.0
        %v3477 = vmax.f32 %v2955, 0.0
        %v3478 = vmax.f32 %v2960, 0.0
        %v3479 = vmax.f32 %v2963, 0.0
        %v3480 = vmax.f32 %v2968, 0.0
        %v3481 = vmax.f32 %v2971, 0.0
        %v3482 = vmax.f32 %v2976, 0.0
        %v3483 = vmax.f32 %v2979, 0.0
        %v3484 = vmax.f32 %v2984, 0.0
        %v3485 = vmax.f32 %v2987, 0.0
        %v3486 = vmax.f32 %v2992, 0.0
        %v3487 = vmax.f32 %v2995, 0.0
        %v3488 = vmax.f32 %v3000, 0.0
        %v3489 = vmax.f32 %v3003, 0.0
        %v3490 = vmax.f32 %v3008, 0.0
        %v3491 = vmax.f32 %v3011, 0.0
        %v3492 = vmax.f32 %v3016, 0.0
        %v3493 = vmax.f32 %v3019, 0.0
        %v3494 = vmax.f32 %v3024, 0.0
        %v3495 = vmax.f32 %v3027, 0.0
        %v3496 = vmax.f32 %v3032, 0.0
        %v3497 = vmax.f32 %v3035, 0.0
        %v3498 = vmax.f32 %v3040, 0.0
        %v3499 = vmax.f32 %v3043, 0.0
        %v3500 = vmax.f32 %v3048, 0.0
        %v3501 = vmax.f32 %v3051, 0.0
        %v3502 = vmax.f32 %v3056, 0.0
        %v3503 = vmax.f32 %v3059, 0.0
        %v3504 = vmax.f32 %v3064, 0.0
        %v3505 = vmax.f32 %v3067, 0.0
        %v3506 = vmax.f32 %v3072, 0.0
        %v3507 = vmax.f32 %v3075, 0.0
        %v3508 = vmax.f32 %v3080, 0.0
        %v3509 = vmax.f32 %v3083, 0.0
        %v3510 = vmax.f32 %v3088, 0.0
        %v3511 = vmax.f32 %v3091, 0.0
        %v3512 = vmax.f32 %v3096, 0.0
        %v3513 = vmax.f32 %v3099, 0.0
        %v3514 = vmax.f32 %v3104, 0.0
        %v3515 = vmax.f32 %v3107, 0.0
        %v3516 = vmax.f32 %v3112, 0.0
        %v3517 = vmax.f32 %v3115, 0.0
        %v3518 = vmax.f32 %v3120, 0.0
        %v3519 = vmax.f32 %v3123, 0.0
        %v3520 = vmax.f32 %v3128, 0.0
        %v3521 = vmax.f32 %v3131, 0.0
        %v3522 = vmax.f32 %v3136, 0.0
        %v3523 = vmax.f32 %v3139, 0.0
        %v3524 = vmax.f32 %v3144, 0.0
        %v3525 = vmax.f32 %v3147, 0.0
        %v3526 = vmax.f32 %v3152, 0.0
        %v3527 = vmax.f32 %v3155, 0.0
        %v3528 = vmax.f32 %v3160, 0.0
        %v3529 = vmax.f32 %v3163, 0.0
        %v3530 = vmax.f32 %v3168, 0.0
        %v3531 = vmax.f32 %v3171, 0.0
        %v3532 = vmax.f32 %v3176, 0.0
        %v3533 = vmax.f32 %v3179, 0.0
        %v3534 = vmax.f32 %v3184, 0.0
        %v3535 = vmax.f32 %v3187, 0.0
        %v3536 = vmax.f32 %v3192, 0.0
        %v3537 = vmax.f32 %v3195, 0.0
        %v3538 = vmax.f32 %v3200, 0.0
        %v3539 = vmax.f32 %v3203, 0.0
        %v3540 = vmax.f32 %v3208, 0.0
        %v3541 = vmax.f32 %v3211, 0.0
        %v3542 = vmax.f32 %v3216, 0.0
        %v3543 = vmax.f32 %v3219, 0.0
        %v3544 = vmax.f32 %v3224, 0.0
        %v3545 = vmax.f32 %v3227, 0.0
        %v3546 = vmax.f32 %v3232, 0.0
        %v3547 = vmax.f32 %v3235, 0.0
        %v3548 = vmax.f32 %v3240, 0.0
        %v3549 = vmax.f32 %v3243, 0.0
        %v3550 = vmax.f32 %v3248, 0.0
        %v3551 = vmax.f32 %v3251, 0.0
        %v3552 = vmax.f32 %v3256, 0.0
        %v3553 = vmax.f32 %v3259, 0.0
        %v3554 = vmax.f32 %v3264, 0.0
        %v3555 = vmax.f32 %v3267, 0.0
        %v3556 = vmax.f32 %v3272, 0.0
        %v3557 = vmax.f32 %v3275, 0.0
        %v3558 = vmax.f32 %v3280, 0.0
        %v3559 = vmax.f32 %v3283, 0.0
        %v3560 = vmax.f32 %v3288, 0.0
        %v3561 = vmax.f32 %v3291, 0.0
        %v3562 = vmax.f32 %v3296, 0.0
        %v3563 = vmax.f32 %v3299, 0.0
        %v3564 = vmax.f32 %v3304, 0.0
        %v3565 = vmax.f32 %v3307, 0.0
        %v3566 = vld [vmem:[%s4] sm:$0x1]
        %v3568 = vlaneseq
        %v3569 = vshrl.u32 %v3568, 7
        %v3570 = vsub.s32 0, %v3569
        %v3571 = vrot.slane %v3566, %v3570
        %v3573 = vmul.f32 %v3310, %v3571
        %v3574 = vmul.f32 %v3311, %v3571
        %v3575 = vmul.f32 %v3312, %v3571
        %v3576 = vmul.f32 %v3313, %v3571
        %v3577 = vmul.f32 %v3314, %v3571
        %v3578 = vmul.f32 %v3315, %v3571
        %v3579 = vmul.f32 %v3316, %v3571
        %v3580 = vmul.f32 %v3317, %v3571
        %v3581 = vmul.f32 %v3318, %v3571
        %v3582 = vmul.f32 %v3319, %v3571
        %v3583 = vmul.f32 %v3320, %v3571
        %v3584 = vmul.f32 %v3321, %v3571
        %v3585 = vmul.f32 %v3322, %v3571
        %v3586 = vmul.f32 %v3323, %v3571
        %v3587 = vmul.f32 %v3324, %v3571
        %v3588 = vmul.f32 %v3325, %v3571
        %v3589 = vmul.f32 %v3326, %v3571
        %v3590 = vmul.f32 %v3327, %v3571
        %v3591 = vmul.f32 %v3328, %v3571
        %v3592 = vmul.f32 %v3329, %v3571
        %v3593 = vmul.f32 %v3330, %v3571
        %v3594 = vmul.f32 %v3331, %v3571
        %v3595 = vmul.f32 %v3332, %v3571
        %v3596 = vmul.f32 %v3333, %v3571
        %v3597 = vmul.f32 %v3334, %v3571
        %v3598 = vmul.f32 %v3335, %v3571
        %v3599 = vmul.f32 %v3336, %v3571
        %v3600 = vmul.f32 %v3337, %v3571
        %v3601 = vmul.f32 %v3338, %v3571
        %v3602 = vmul.f32 %v3339, %v3571
        %v3603 = vmul.f32 %v3340, %v3571
        %v3604 = vmul.f32 %v3341, %v3571
        %v3605 = vmul.f32 %v3342, %v3571
        %v3606 = vmul.f32 %v3343, %v3571
        %v3607 = vmul.f32 %v3344, %v3571
        %v3608 = vmul.f32 %v3345, %v3571
        %v3609 = vmul.f32 %v3346, %v3571
        %v3610 = vmul.f32 %v3347, %v3571
        %v3611 = vmul.f32 %v3348, %v3571
        %v3612 = vmul.f32 %v3349, %v3571
        %v3613 = vmul.f32 %v3350, %v3571
        %v3614 = vmul.f32 %v3351, %v3571
        %v3615 = vmul.f32 %v3352, %v3571
        %v3616 = vmul.f32 %v3353, %v3571
        %v3617 = vmul.f32 %v3354, %v3571
        %v3618 = vmul.f32 %v3355, %v3571
        %v3619 = vmul.f32 %v3356, %v3571
        %v3620 = vmul.f32 %v3357, %v3571
        %v3621 = vmul.f32 %v3358, %v3571
        %v3622 = vmul.f32 %v3359, %v3571
        %v3623 = vmul.f32 %v3360, %v3571
        %v3624 = vmul.f32 %v3361, %v3571
        %v3625 = vmul.f32 %v3362, %v3571
        %v3626 = vmul.f32 %v3363, %v3571
        %v3627 = vmul.f32 %v3364, %v3571
        %v3628 = vmul.f32 %v3365, %v3571
        %v3629 = vmul.f32 %v3366, %v3571
        %v3630 = vmul.f32 %v3367, %v3571
        %v3631 = vmul.f32 %v3368, %v3571
        %v3632 = vmul.f32 %v3369, %v3571
        %v3633 = vmul.f32 %v3370, %v3571
        %v3634 = vmul.f32 %v3371, %v3571
        %v3635 = vmul.f32 %v3372, %v3571
        %v3636 = vmul.f32 %v3373, %v3571
        %v3637 = vmul.f32 %v3374, %v3571
        %v3638 = vmul.f32 %v3375, %v3571
        %v3639 = vmul.f32 %v3376, %v3571
        %v3640 = vmul.f32 %v3377, %v3571
        %v3641 = vmul.f32 %v3378, %v3571
        %v3642 = vmul.f32 %v3379, %v3571
        %v3643 = vmul.f32 %v3380, %v3571
        %v3644 = vmul.f32 %v3381, %v3571
        %v3645 = vmul.f32 %v3382, %v3571
        %v3646 = vmul.f32 %v3383, %v3571
        %v3647 = vmul.f32 %v3384, %v3571
        %v3648 = vmul.f32 %v3385, %v3571
        %v3649 = vmul.f32 %v3386, %v3571
        %v3650 = vmul.f32 %v3387, %v3571
        %v3651 = vmul.f32 %v3388, %v3571
        %v3652 = vmul.f32 %v3389, %v3571
        %v3653 = vmul.f32 %v3390, %v3571
        %v3654 = vmul.f32 %v3391, %v3571
        %v3655 = vmul.f32 %v3392, %v3571
        %v3656 = vmul.f32 %v3393, %v3571
        %v3657 = vmul.f32 %v3394, %v3571
        %v3658 = vmul.f32 %v3395, %v3571
        %v3659 = vmul.f32 %v3396, %v3571
        %v3660 = vmul.f32 %v3397, %v3571
        %v3661 = vmul.f32 %v3398, %v3571
        %v3662 = vmul.f32 %v3399, %v3571
        %v3663 = vmul.f32 %v3400, %v3571
        %v3664 = vmul.f32 %v3401, %v3571
        %v3665 = vmul.f32 %v3402, %v3571
        %v3666 = vmul.f32 %v3403, %v3571
        %v3667 = vmul.f32 %v3404, %v3571
        %v3668 = vmul.f32 %v3405, %v3571
        %v3669 = vmul.f32 %v3406, %v3571
        %v3670 = vmul.f32 %v3407, %v3571
        %v3671 = vmul.f32 %v3408, %v3571
        %v3672 = vmul.f32 %v3409, %v3571
        %v3673 = vmul.f32 %v3410, %v3571
        %v3674 = vmul.f32 %v3411, %v3571
        %v3675 = vmul.f32 %v3412, %v3571
        %v3676 = vmul.f32 %v3413, %v3571
        %v3677 = vmul.f32 %v3414, %v3571
        %v3678 = vmul.f32 %v3415, %v3571
        %v3679 = vmul.f32 %v3416, %v3571
        %v3680 = vmul.f32 %v3417, %v3571
        %v3681 = vmul.f32 %v3418, %v3571
        %v3682 = vmul.f32 %v3419, %v3571
        %v3683 = vmul.f32 %v3420, %v3571
        %v3684 = vmul.f32 %v3421, %v3571
        %v3685 = vmul.f32 %v3422, %v3571
        %v3686 = vmul.f32 %v3423, %v3571
        %v3687 = vmul.f32 %v3424, %v3571
        %v3688 = vmul.f32 %v3425, %v3571
        %v3689 = vmul.f32 %v3426, %v3571
        %v3690 = vmul.f32 %v3427, %v3571
        %v3691 = vmul.f32 %v3428, %v3571
        %v3692 = vmul.f32 %v3429, %v3571
        %v3693 = vmul.f32 %v3430, %v3571
        %v3694 = vmul.f32 %v3431, %v3571
        %v3695 = vmul.f32 %v3432, %v3571
        %v3696 = vmul.f32 %v3433, %v3571
        %v3697 = vmul.f32 %v3434, %v3571
        %v3698 = vmul.f32 %v3435, %v3571
        %v3699 = vmul.f32 %v3436, %v3571
        %v3700 = vmul.f32 %v3437, %v3571
        %v3701 = vmul.f32 %v3438, %v3571
        %v3702 = vmul.f32 %v3439, %v3571
        %v3703 = vmul.f32 %v3440, %v3571
        %v3704 = vmul.f32 %v3441, %v3571
        %v3705 = vmul.f32 %v3442, %v3571
        %v3706 = vmul.f32 %v3443, %v3571
        %v3707 = vmul.f32 %v3444, %v3571
        %v3708 = vmul.f32 %v3445, %v3571
        %v3709 = vmul.f32 %v3446, %v3571
        %v3710 = vmul.f32 %v3447, %v3571
        %v3711 = vmul.f32 %v3448, %v3571
        %v3712 = vmul.f32 %v3449, %v3571
        %v3713 = vmul.f32 %v3450, %v3571
        %v3714 = vmul.f32 %v3451, %v3571
        %v3715 = vmul.f32 %v3452, %v3571
        %v3716 = vmul.f32 %v3453, %v3571
        %v3717 = vmul.f32 %v3454, %v3571
        %v3718 = vmul.f32 %v3455, %v3571
        %v3719 = vmul.f32 %v3456, %v3571
        %v3720 = vmul.f32 %v3457, %v3571
        %v3721 = vmul.f32 %v3458, %v3571
        %v3722 = vmul.f32 %v3459, %v3571
        %v3723 = vmul.f32 %v3460, %v3571
        %v3724 = vmul.f32 %v3461, %v3571
        %v3725 = vmul.f32 %v3462, %v3571
        %v3726 = vmul.f32 %v3463, %v3571
        %v3727 = vmul.f32 %v3464, %v3571
        %v3728 = vmul.f32 %v3465, %v3571
        %v3729 = vmul.f32 %v3466, %v3571
        %v3730 = vmul.f32 %v3467, %v3571
        %v3731 = vmul.f32 %v3468, %v3571
        %v3732 = vmul.f32 %v3469, %v3571
        %v3733 = vmul.f32 %v3470, %v3571
        %v3734 = vmul.f32 %v3471, %v3571
        %v3735 = vmul.f32 %v3472, %v3571
        %v3736 = vmul.f32 %v3473, %v3571
        %v3737 = vmul.f32 %v3474, %v3571
        %v3738 = vmul.f32 %v3475, %v3571
        %v3739 = vmul.f32 %v3476, %v3571
        %v3740 = vmul.f32 %v3477, %v3571
        %v3741 = vmul.f32 %v3478, %v3571
        %v3742 = vmul.f32 %v3479, %v3571
        %v3743 = vmul.f32 %v3480, %v3571
        %v3744 = vmul.f32 %v3481, %v3571
        %v3745 = vmul.f32 %v3482, %v3571
        %v3746 = vmul.f32 %v3483, %v3571
        %v3747 = vmul.f32 %v3484, %v3571
        %v3748 = vmul.f32 %v3485, %v3571
        %v3749 = vmul.f32 %v3486, %v3571
        %v3750 = vmul.f32 %v3487, %v3571
        %v3751 = vmul.f32 %v3488, %v3571
        %v3752 = vmul.f32 %v3489, %v3571
        %v3753 = vmul.f32 %v3490, %v3571
        %v3754 = vmul.f32 %v3491, %v3571
        %v3755 = vmul.f32 %v3492, %v3571
        %v3756 = vmul.f32 %v3493, %v3571
        %v3757 = vmul.f32 %v3494, %v3571
        %v3758 = vmul.f32 %v3495, %v3571
        %v3759 = vmul.f32 %v3496, %v3571
        %v3760 = vmul.f32 %v3497, %v3571
        %v3761 = vmul.f32 %v3498, %v3571
        %v3762 = vmul.f32 %v3499, %v3571
        %v3763 = vmul.f32 %v3500, %v3571
        %v3764 = vmul.f32 %v3501, %v3571
        %v3765 = vmul.f32 %v3502, %v3571
        %v3766 = vmul.f32 %v3503, %v3571
        %v3767 = vmul.f32 %v3504, %v3571
        %v3768 = vmul.f32 %v3505, %v3571
        %v3769 = vmul.f32 %v3506, %v3571
        %v3770 = vmul.f32 %v3507, %v3571
        %v3771 = vmul.f32 %v3508, %v3571
        %v3772 = vmul.f32 %v3509, %v3571
        %v3773 = vmul.f32 %v3510, %v3571
        %v3774 = vmul.f32 %v3511, %v3571
        %v3775 = vmul.f32 %v3512, %v3571
        %v3776 = vmul.f32 %v3513, %v3571
        %v3777 = vmul.f32 %v3514, %v3571
        %v3778 = vmul.f32 %v3515, %v3571
        %v3779 = vmul.f32 %v3516, %v3571
        %v3780 = vmul.f32 %v3517, %v3571
        %v3781 = vmul.f32 %v3518, %v3571
        %v3782 = vmul.f32 %v3519, %v3571
        %v3783 = vmul.f32 %v3520, %v3571
        %v3784 = vmul.f32 %v3521, %v3571
        %v3785 = vmul.f32 %v3522, %v3571
        %v3786 = vmul.f32 %v3523, %v3571
        %v3787 = vmul.f32 %v3524, %v3571
        %v3788 = vmul.f32 %v3525, %v3571
        %v3789 = vmul.f32 %v3526, %v3571
        %v3790 = vmul.f32 %v3527, %v3571
        %v3791 = vmul.f32 %v3528, %v3571
        %v3792 = vmul.f32 %v3529, %v3571
        %v3793 = vmul.f32 %v3530, %v3571
        %v3794 = vmul.f32 %v3531, %v3571
        %v3795 = vmul.f32 %v3532, %v3571
        %v3796 = vmul.f32 %v3533, %v3571
        %v3797 = vmul.f32 %v3534, %v3571
        %v3798 = vmul.f32 %v3535, %v3571
        %v3799 = vmul.f32 %v3536, %v3571
        %v3800 = vmul.f32 %v3537, %v3571
        %v3801 = vmul.f32 %v3538, %v3571
        %v3802 = vmul.f32 %v3539, %v3571
        %v3803 = vmul.f32 %v3540, %v3571
        %v3804 = vmul.f32 %v3541, %v3571
        %v3805 = vmul.f32 %v3542, %v3571
        %v3806 = vmul.f32 %v3543, %v3571
        %v3807 = vmul.f32 %v3544, %v3571
        %v3808 = vmul.f32 %v3545, %v3571
        %v3809 = vmul.f32 %v3546, %v3571
        %v3810 = vmul.f32 %v3547, %v3571
        %v3811 = vmul.f32 %v3548, %v3571
        %v3812 = vmul.f32 %v3549, %v3571
        %v3813 = vmul.f32 %v3550, %v3571
        %v3814 = vmul.f32 %v3551, %v3571
        %v3815 = vmul.f32 %v3552, %v3571
        %v3816 = vmul.f32 %v3553, %v3571
        %v3817 = vmul.f32 %v3554, %v3571
        %v3818 = vmul.f32 %v3555, %v3571
        %v3819 = vmul.f32 %v3556, %v3571
        %v3820 = vmul.f32 %v3557, %v3571
        %v3821 = vmul.f32 %v3558, %v3571
        %v3822 = vmul.f32 %v3559, %v3571
        %v3823 = vmul.f32 %v3560, %v3571
        %v3824 = vmul.f32 %v3561, %v3571
        %v3825 = vmul.f32 %v3562, %v3571
        %v3826 = vmul.f32 %v3563, %v3571
        %v3827 = vmul.f32 %v3564, %v3571
        %v3828 = vmul.f32 %v3565, %v3571
        %v3829 = vsel %vm1868, %v3573, 0.0
        %3830 = vadd.xlane.f32.xlu0 %v3829
        %v3831 = vpop.xlane.xlu0 %3830
        %v3832 = vsel %vm1868, %v3574, 0.0
        %3833 = vadd.xlane.f32.xlu0 %v3832
        %v3834 = vpop.xlane.xlu0 %3833
        %v3835 = vsel %vm1868, %v3575, 0.0
        %3836 = vadd.xlane.f32.xlu0 %v3835
        %v3837 = vpop.xlane.xlu0 %3836
        %v3838 = vsel %vm1868, %v3576, 0.0
        %3839 = vadd.xlane.f32.xlu0 %v3838
        %v3840 = vpop.xlane.xlu0 %3839
        %v3841 = vsel %vm1868, %v3577, 0.0
        %3842 = vadd.xlane.f32.xlu0 %v3841
        %v3843 = vpop.xlane.xlu0 %3842
        %v3844 = vsel %vm1868, %v3578, 0.0
        %3845 = vadd.xlane.f32.xlu0 %v3844
        %v3846 = vpop.xlane.xlu0 %3845
        %v3847 = vsel %vm1868, %v3579, 0.0
        %3848 = vadd.xlane.f32.xlu0 %v3847
        %v3849 = vpop.xlane.xlu0 %3848
        %v3850 = vsel %vm1868, %v3580, 0.0
        %3851 = vadd.xlane.f32.xlu0 %v3850
        %v3852 = vpop.xlane.xlu0 %3851
        %v3853 = vsel %vm1868, %v3581, 0.0
        %3854 = vadd.xlane.f32.xlu0 %v3853
        %v3855 = vpop.xlane.xlu0 %3854
        %v3856 = vsel %vm1868, %v3582, 0.0
        %3857 = vadd.xlane.f32.xlu0 %v3856
        %v3858 = vpop.xlane.xlu0 %3857
        %v3859 = vsel %vm1868, %v3583, 0.0
        %3860 = vadd.xlane.f32.xlu0 %v3859
        %v3861 = vpop.xlane.xlu0 %3860
        %v3862 = vsel %vm1868, %v3584, 0.0
        %3863 = vadd.xlane.f32.xlu0 %v3862
        %v3864 = vpop.xlane.xlu0 %3863
        %v3865 = vsel %vm1868, %v3585, 0.0
        %3866 = vadd.xlane.f32.xlu0 %v3865
        %v3867 = vpop.xlane.xlu0 %3866
        %v3868 = vsel %vm1868, %v3586, 0.0
        %3869 = vadd.xlane.f32.xlu0 %v3868
        %v3870 = vpop.xlane.xlu0 %3869
        %v3871 = vsel %vm1868, %v3587, 0.0
        %3872 = vadd.xlane.f32.xlu0 %v3871
        %v3873 = vpop.xlane.xlu0 %3872
        %v3874 = vsel %vm1868, %v3588, 0.0
        %3875 = vadd.xlane.f32.xlu0 %v3874
        %v3876 = vpop.xlane.xlu0 %3875
        %v3877 = vsel %vm1868, %v3589, 0.0
        %3878 = vadd.xlane.f32.xlu0 %v3877
        %v3879 = vpop.xlane.xlu0 %3878
        %v3880 = vsel %vm1868, %v3590, 0.0
        %3881 = vadd.xlane.f32.xlu0 %v3880
        %v3882 = vpop.xlane.xlu0 %3881
        %v3883 = vsel %vm1868, %v3591, 0.0
        %3884 = vadd.xlane.f32.xlu0 %v3883
        %v3885 = vpop.xlane.xlu0 %3884
        %v3886 = vsel %vm1868, %v3592, 0.0
        %3887 = vadd.xlane.f32.xlu0 %v3886
        %v3888 = vpop.xlane.xlu0 %3887
        %v3889 = vsel %vm1868, %v3593, 0.0
        %3890 = vadd.xlane.f32.xlu0 %v3889
        %v3891 = vpop.xlane.xlu0 %3890
        %v3892 = vsel %vm1868, %v3594, 0.0
        %3893 = vadd.xlane.f32.xlu0 %v3892
        %v3894 = vpop.xlane.xlu0 %3893
        %v3895 = vsel %vm1868, %v3595, 0.0
        %3896 = vadd.xlane.f32.xlu0 %v3895
        %v3897 = vpop.xlane.xlu0 %3896
        %v3898 = vsel %vm1868, %v3596, 0.0
        %3899 = vadd.xlane.f32.xlu0 %v3898
        %v3900 = vpop.xlane.xlu0 %3899
        %v3901 = vsel %vm1868, %v3597, 0.0
        %3902 = vadd.xlane.f32.xlu0 %v3901
        %v3903 = vpop.xlane.xlu0 %3902
        %v3904 = vsel %vm1868, %v3598, 0.0
        %3905 = vadd.xlane.f32.xlu0 %v3904
        %v3906 = vpop.xlane.xlu0 %3905
        %v3907 = vsel %vm1868, %v3599, 0.0
        %3908 = vadd.xlane.f32.xlu0 %v3907
        %v3909 = vpop.xlane.xlu0 %3908
        %v3910 = vsel %vm1868, %v3600, 0.0
        %3911 = vadd.xlane.f32.xlu0 %v3910
        %v3912 = vpop.xlane.xlu0 %3911
        %v3913 = vsel %vm1868, %v3601, 0.0
        %3914 = vadd.xlane.f32.xlu0 %v3913
        %v3915 = vpop.xlane.xlu0 %3914
        %v3916 = vsel %vm1868, %v3602, 0.0
        %3917 = vadd.xlane.f32.xlu0 %v3916
        %v3918 = vpop.xlane.xlu0 %3917
        %v3919 = vsel %vm1868, %v3603, 0.0
        %3920 = vadd.xlane.f32.xlu0 %v3919
        %v3921 = vpop.xlane.xlu0 %3920
        %v3922 = vsel %vm1868, %v3604, 0.0
        %3923 = vadd.xlane.f32.xlu0 %v3922
        %v3924 = vpop.xlane.xlu0 %3923
        %v3925 = vsel %vm1868, %v3605, 0.0
        %3926 = vadd.xlane.f32.xlu0 %v3925
        %v3927 = vpop.xlane.xlu0 %3926
        %v3928 = vsel %vm1868, %v3606, 0.0
        %3929 = vadd.xlane.f32.xlu0 %v3928
        %v3930 = vpop.xlane.xlu0 %3929
        %v3931 = vsel %vm1868, %v3607, 0.0
        %3932 = vadd.xlane.f32.xlu0 %v3931
        %v3933 = vpop.xlane.xlu0 %3932
        %v3934 = vsel %vm1868, %v3608, 0.0
        %3935 = vadd.xlane.f32.xlu0 %v3934
        %v3936 = vpop.xlane.xlu0 %3935
        %v3937 = vsel %vm1868, %v3609, 0.0
        %3938 = vadd.xlane.f32.xlu0 %v3937
        %v3939 = vpop.xlane.xlu0 %3938
        %v3940 = vsel %vm1868, %v3610, 0.0
        %3941 = vadd.xlane.f32.xlu0 %v3940
        %v3942 = vpop.xlane.xlu0 %3941
        %v3943 = vsel %vm1868, %v3611, 0.0
        %3944 = vadd.xlane.f32.xlu0 %v3943
        %v3945 = vpop.xlane.xlu0 %3944
        %v3946 = vsel %vm1868, %v3612, 0.0
        %3947 = vadd.xlane.f32.xlu0 %v3946
        %v3948 = vpop.xlane.xlu0 %3947
        %v3949 = vsel %vm1868, %v3613, 0.0
        %3950 = vadd.xlane.f32.xlu0 %v3949
        %v3951 = vpop.xlane.xlu0 %3950
        %v3952 = vsel %vm1868, %v3614, 0.0
        %3953 = vadd.xlane.f32.xlu0 %v3952
        %v3954 = vpop.xlane.xlu0 %3953
        %v3955 = vsel %vm1868, %v3615, 0.0
        %3956 = vadd.xlane.f32.xlu0 %v3955
        %v3957 = vpop.xlane.xlu0 %3956
        %v3958 = vsel %vm1868, %v3616, 0.0
        %3959 = vadd.xlane.f32.xlu0 %v3958
        %v3960 = vpop.xlane.xlu0 %3959
        %v3961 = vsel %vm1868, %v3617, 0.0
        %3962 = vadd.xlane.f32.xlu0 %v3961
        %v3963 = vpop.xlane.xlu0 %3962
        %v3964 = vsel %vm1868, %v3618, 0.0
        %3965 = vadd.xlane.f32.xlu0 %v3964
        %v3966 = vpop.xlane.xlu0 %3965
        %v3967 = vsel %vm1868, %v3619, 0.0
        %3968 = vadd.xlane.f32.xlu0 %v3967
        %v3969 = vpop.xlane.xlu0 %3968
        %v3970 = vsel %vm1868, %v3620, 0.0
        %3971 = vadd.xlane.f32.xlu0 %v3970
        %v3972 = vpop.xlane.xlu0 %3971
        %v3973 = vsel %vm1868, %v3621, 0.0
        %3974 = vadd.xlane.f32.xlu0 %v3973
        %v3975 = vpop.xlane.xlu0 %3974
        %v3976 = vsel %vm1868, %v3622, 0.0
        %3977 = vadd.xlane.f32.xlu0 %v3976
        %v3978 = vpop.xlane.xlu0 %3977
        %v3979 = vsel %vm1868, %v3623, 0.0
        %3980 = vadd.xlane.f32.xlu0 %v3979
        %v3981 = vpop.xlane.xlu0 %3980
        %v3982 = vsel %vm1868, %v3624, 0.0
        %3983 = vadd.xlane.f32.xlu0 %v3982
        %v3984 = vpop.xlane.xlu0 %3983
        %v3985 = vsel %vm1868, %v3625, 0.0
        %3986 = vadd.xlane.f32.xlu0 %v3985
        %v3987 = vpop.xlane.xlu0 %3986
        %v3988 = vsel %vm1868, %v3626, 0.0
        %3989 = vadd.xlane.f32.xlu0 %v3988
        %v3990 = vpop.xlane.xlu0 %3989
        %v3991 = vsel %vm1868, %v3627, 0.0
        %3992 = vadd.xlane.f32.xlu0 %v3991
        %v3993 = vpop.xlane.xlu0 %3992
        %v3994 = vsel %vm1868, %v3628, 0.0
        %3995 = vadd.xlane.f32.xlu0 %v3994
        %v3996 = vpop.xlane.xlu0 %3995
        %v3997 = vsel %vm1868, %v3629, 0.0
        %3998 = vadd.xlane.f32.xlu0 %v3997
        %v3999 = vpop.xlane.xlu0 %3998
        %v4000 = vsel %vm1868, %v3630, 0.0
        %4001 = vadd.xlane.f32.xlu0 %v4000
        %v4002 = vpop.xlane.xlu0 %4001
        %v4003 = vsel %vm1868, %v3631, 0.0
        %4004 = vadd.xlane.f32.xlu0 %v4003
        %v4005 = vpop.xlane.xlu0 %4004
        %v4006 = vsel %vm1868, %v3632, 0.0
        %4007 = vadd.xlane.f32.xlu0 %v4006
        %v4008 = vpop.xlane.xlu0 %4007
        %v4009 = vsel %vm1868, %v3633, 0.0
        %4010 = vadd.xlane.f32.xlu0 %v4009
        %v4011 = vpop.xlane.xlu0 %4010
        %v4012 = vsel %vm1868, %v3634, 0.0
        %4013 = vadd.xlane.f32.xlu0 %v4012
        %v4014 = vpop.xlane.xlu0 %4013
        %v4015 = vsel %vm1868, %v3635, 0.0
        %4016 = vadd.xlane.f32.xlu0 %v4015
        %v4017 = vpop.xlane.xlu0 %4016
        %v4018 = vsel %vm1868, %v3636, 0.0
        %4019 = vadd.xlane.f32.xlu0 %v4018
        %v4020 = vpop.xlane.xlu0 %4019
        %v4021 = vsel %vm1868, %v3637, 0.0
        %4022 = vadd.xlane.f32.xlu0 %v4021
        %v4023 = vpop.xlane.xlu0 %4022
        %v4024 = vsel %vm1868, %v3638, 0.0
        %4025 = vadd.xlane.f32.xlu0 %v4024
        %v4026 = vpop.xlane.xlu0 %4025
        %v4027 = vsel %vm1868, %v3639, 0.0
        %4028 = vadd.xlane.f32.xlu0 %v4027
        %v4029 = vpop.xlane.xlu0 %4028
        %v4030 = vsel %vm1868, %v3640, 0.0
        %4031 = vadd.xlane.f32.xlu0 %v4030
        %v4032 = vpop.xlane.xlu0 %4031
        %v4033 = vsel %vm1868, %v3641, 0.0
        %4034 = vadd.xlane.f32.xlu0 %v4033
        %v4035 = vpop.xlane.xlu0 %4034
        %v4036 = vsel %vm1868, %v3642, 0.0
        %4037 = vadd.xlane.f32.xlu0 %v4036
        %v4038 = vpop.xlane.xlu0 %4037
        %v4039 = vsel %vm1868, %v3643, 0.0
        %4040 = vadd.xlane.f32.xlu0 %v4039
        %v4041 = vpop.xlane.xlu0 %4040
        %v4042 = vsel %vm1868, %v3644, 0.0
        %4043 = vadd.xlane.f32.xlu0 %v4042
        %v4044 = vpop.xlane.xlu0 %4043
        %v4045 = vsel %vm1868, %v3645, 0.0
        %4046 = vadd.xlane.f32.xlu0 %v4045
        %v4047 = vpop.xlane.xlu0 %4046
        %v4048 = vsel %vm1868, %v3646, 0.0
        %4049 = vadd.xlane.f32.xlu0 %v4048
        %v4050 = vpop.xlane.xlu0 %4049
        %v4051 = vsel %vm1868, %v3647, 0.0
        %4052 = vadd.xlane.f32.xlu0 %v4051
        %v4053 = vpop.xlane.xlu0 %4052
        %v4054 = vsel %vm1868, %v3648, 0.0
        %4055 = vadd.xlane.f32.xlu0 %v4054
        %v4056 = vpop.xlane.xlu0 %4055
        %v4057 = vsel %vm1868, %v3649, 0.0
        %4058 = vadd.xlane.f32.xlu0 %v4057
        %v4059 = vpop.xlane.xlu0 %4058
        %v4060 = vsel %vm1868, %v3650, 0.0
        %4061 = vadd.xlane.f32.xlu0 %v4060
        %v4062 = vpop.xlane.xlu0 %4061
        %v4063 = vsel %vm1868, %v3651, 0.0
        %4064 = vadd.xlane.f32.xlu0 %v4063
        %v4065 = vpop.xlane.xlu0 %4064
        %v4066 = vsel %vm1868, %v3652, 0.0
        %4067 = vadd.xlane.f32.xlu0 %v4066
        %v4068 = vpop.xlane.xlu0 %4067
        %v4069 = vsel %vm1868, %v3653, 0.0
        %4070 = vadd.xlane.f32.xlu0 %v4069
        %v4071 = vpop.xlane.xlu0 %4070
        %v4072 = vsel %vm1868, %v3654, 0.0
        %4073 = vadd.xlane.f32.xlu0 %v4072
        %v4074 = vpop.xlane.xlu0 %4073
        %v4075 = vsel %vm1868, %v3655, 0.0
        %4076 = vadd.xlane.f32.xlu0 %v4075
        %v4077 = vpop.xlane.xlu0 %4076
        %v4078 = vsel %vm1868, %v3656, 0.0
        %4079 = vadd.xlane.f32.xlu0 %v4078
        %v4080 = vpop.xlane.xlu0 %4079
        %v4081 = vsel %vm1868, %v3657, 0.0
        %4082 = vadd.xlane.f32.xlu0 %v4081
        %v4083 = vpop.xlane.xlu0 %4082
        %v4084 = vsel %vm1868, %v3658, 0.0
        %4085 = vadd.xlane.f32.xlu0 %v4084
        %v4086 = vpop.xlane.xlu0 %4085
        %v4087 = vsel %vm1868, %v3659, 0.0
        %4088 = vadd.xlane.f32.xlu0 %v4087
        %v4089 = vpop.xlane.xlu0 %4088
        %v4090 = vsel %vm1868, %v3660, 0.0
        %4091 = vadd.xlane.f32.xlu0 %v4090
        %v4092 = vpop.xlane.xlu0 %4091
        %v4093 = vsel %vm1868, %v3661, 0.0
        %4094 = vadd.xlane.f32.xlu0 %v4093
        %v4095 = vpop.xlane.xlu0 %4094
        %v4096 = vsel %vm1868, %v3662, 0.0
        %4097 = vadd.xlane.f32.xlu0 %v4096
        %v4098 = vpop.xlane.xlu0 %4097
        %v4099 = vsel %vm1868, %v3663, 0.0
        %4100 = vadd.xlane.f32.xlu0 %v4099
        %v4101 = vpop.xlane.xlu0 %4100
        %v4102 = vsel %vm1868, %v3664, 0.0
        %4103 = vadd.xlane.f32.xlu0 %v4102
        %v4104 = vpop.xlane.xlu0 %4103
        %v4105 = vsel %vm1868, %v3665, 0.0
        %4106 = vadd.xlane.f32.xlu0 %v4105
        %v4107 = vpop.xlane.xlu0 %4106
        %v4108 = vsel %vm1868, %v3666, 0.0
        %4109 = vadd.xlane.f32.xlu0 %v4108
        %v4110 = vpop.xlane.xlu0 %4109
        %v4111 = vsel %vm1868, %v3667, 0.0
        %4112 = vadd.xlane.f32.xlu0 %v4111
        %v4113 = vpop.xlane.xlu0 %4112
        %v4114 = vsel %vm1868, %v3668, 0.0
        %4115 = vadd.xlane.f32.xlu0 %v4114
        %v4116 = vpop.xlane.xlu0 %4115
        %v4117 = vsel %vm1868, %v3669, 0.0
        %4118 = vadd.xlane.f32.xlu0 %v4117
        %v4119 = vpop.xlane.xlu0 %4118
        %v4120 = vsel %vm1868, %v3670, 0.0
        %4121 = vadd.xlane.f32.xlu0 %v4120
        %v4122 = vpop.xlane.xlu0 %4121
        %v4123 = vsel %vm1868, %v3671, 0.0
        %4124 = vadd.xlane.f32.xlu0 %v4123
        %v4125 = vpop.xlane.xlu0 %4124
        %v4126 = vsel %vm1868, %v3672, 0.0
        %4127 = vadd.xlane.f32.xlu0 %v4126
        %v4128 = vpop.xlane.xlu0 %4127
        %v4129 = vsel %vm1868, %v3673, 0.0
        %4130 = vadd.xlane.f32.xlu0 %v4129
        %v4131 = vpop.xlane.xlu0 %4130
        %v4132 = vsel %vm1868, %v3674, 0.0
        %4133 = vadd.xlane.f32.xlu0 %v4132
        %v4134 = vpop.xlane.xlu0 %4133
        %v4135 = vsel %vm1868, %v3675, 0.0
        %4136 = vadd.xlane.f32.xlu0 %v4135
        %v4137 = vpop.xlane.xlu0 %4136
        %v4138 = vsel %vm1868, %v3676, 0.0
        %4139 = vadd.xlane.f32.xlu0 %v4138
        %v4140 = vpop.xlane.xlu0 %4139
        %v4141 = vsel %vm1868, %v3677, 0.0
        %4142 = vadd.xlane.f32.xlu0 %v4141
        %v4143 = vpop.xlane.xlu0 %4142
        %v4144 = vsel %vm1868, %v3678, 0.0
        %4145 = vadd.xlane.f32.xlu0 %v4144
        %v4146 = vpop.xlane.xlu0 %4145
        %v4147 = vsel %vm1868, %v3679, 0.0
        %4148 = vadd.xlane.f32.xlu0 %v4147
        %v4149 = vpop.xlane.xlu0 %4148
        %v4150 = vsel %vm1868, %v3680, 0.0
        %4151 = vadd.xlane.f32.xlu0 %v4150
        %v4152 = vpop.xlane.xlu0 %4151
        %v4153 = vsel %vm1868, %v3681, 0.0
        %4154 = vadd.xlane.f32.xlu0 %v4153
        %v4155 = vpop.xlane.xlu0 %4154
        %v4156 = vsel %vm1868, %v3682, 0.0
        %4157 = vadd.xlane.f32.xlu0 %v4156
        %v4158 = vpop.xlane.xlu0 %4157
        %v4159 = vsel %vm1868, %v3683, 0.0
        %4160 = vadd.xlane.f32.xlu0 %v4159
        %v4161 = vpop.xlane.xlu0 %4160
        %v4162 = vsel %vm1868, %v3684, 0.0
        %4163 = vadd.xlane.f32.xlu0 %v4162
        %v4164 = vpop.xlane.xlu0 %4163
        %v4165 = vsel %vm1868, %v3685, 0.0
        %4166 = vadd.xlane.f32.xlu0 %v4165
        %v4167 = vpop.xlane.xlu0 %4166
        %v4168 = vsel %vm1868, %v3686, 0.0
        %4169 = vadd.xlane.f32.xlu0 %v4168
        %v4170 = vpop.xlane.xlu0 %4169
        %v4171 = vsel %vm1868, %v3687, 0.0
        %4172 = vadd.xlane.f32.xlu0 %v4171
        %v4173 = vpop.xlane.xlu0 %4172
        %v4174 = vsel %vm1868, %v3688, 0.0
        %4175 = vadd.xlane.f32.xlu0 %v4174
        %v4176 = vpop.xlane.xlu0 %4175
        %v4177 = vsel %vm1868, %v3689, 0.0
        %4178 = vadd.xlane.f32.xlu0 %v4177
        %v4179 = vpop.xlane.xlu0 %4178
        %v4180 = vsel %vm1868, %v3690, 0.0
        %4181 = vadd.xlane.f32.xlu0 %v4180
        %v4182 = vpop.xlane.xlu0 %4181
        %v4183 = vsel %vm1868, %v3691, 0.0
        %4184 = vadd.xlane.f32.xlu0 %v4183
        %v4185 = vpop.xlane.xlu0 %4184
        %v4186 = vsel %vm1868, %v3692, 0.0
        %4187 = vadd.xlane.f32.xlu0 %v4186
        %v4188 = vpop.xlane.xlu0 %4187
        %v4189 = vsel %vm1868, %v3693, 0.0
        %4190 = vadd.xlane.f32.xlu0 %v4189
        %v4191 = vpop.xlane.xlu0 %4190
        %v4192 = vsel %vm1868, %v3694, 0.0
        %4193 = vadd.xlane.f32.xlu0 %v4192
        %v4194 = vpop.xlane.xlu0 %4193
        %v4195 = vsel %vm1868, %v3695, 0.0
        %4196 = vadd.xlane.f32.xlu0 %v4195
        %v4197 = vpop.xlane.xlu0 %4196
        %v4198 = vsel %vm1868, %v3696, 0.0
        %4199 = vadd.xlane.f32.xlu0 %v4198
        %v4200 = vpop.xlane.xlu0 %4199
        %v4201 = vsel %vm1868, %v3697, 0.0
        %4202 = vadd.xlane.f32.xlu0 %v4201
        %v4203 = vpop.xlane.xlu0 %4202
        %v4204 = vsel %vm1868, %v3698, 0.0
        %4205 = vadd.xlane.f32.xlu0 %v4204
        %v4206 = vpop.xlane.xlu0 %4205
        %v4207 = vsel %vm1868, %v3699, 0.0
        %4208 = vadd.xlane.f32.xlu0 %v4207
        %v4209 = vpop.xlane.xlu0 %4208
        %v4210 = vsel %vm1868, %v3700, 0.0
        %4211 = vadd.xlane.f32.xlu0 %v4210
        %v4212 = vpop.xlane.xlu0 %4211
        %v4213 = vsel %vm1868, %v3701, 0.0
        %4214 = vadd.xlane.f32.xlu0 %v4213
        %v4215 = vpop.xlane.xlu0 %4214
        %v4216 = vsel %vm1868, %v3702, 0.0
        %4217 = vadd.xlane.f32.xlu0 %v4216
        %v4218 = vpop.xlane.xlu0 %4217
        %v4219 = vsel %vm1868, %v3703, 0.0
        %4220 = vadd.xlane.f32.xlu0 %v4219
        %v4221 = vpop.xlane.xlu0 %4220
        %v4222 = vsel %vm1868, %v3704, 0.0
        %4223 = vadd.xlane.f32.xlu0 %v4222
        %v4224 = vpop.xlane.xlu0 %4223
        %v4225 = vsel %vm1868, %v3705, 0.0
        %4226 = vadd.xlane.f32.xlu0 %v4225
        %v4227 = vpop.xlane.xlu0 %4226
        %v4228 = vsel %vm1868, %v3706, 0.0
        %4229 = vadd.xlane.f32.xlu0 %v4228
        %v4230 = vpop.xlane.xlu0 %4229
        %v4231 = vsel %vm1868, %v3707, 0.0
        %4232 = vadd.xlane.f32.xlu0 %v4231
        %v4233 = vpop.xlane.xlu0 %4232
        %v4234 = vsel %vm1868, %v3708, 0.0
        %4235 = vadd.xlane.f32.xlu0 %v4234
        %v4236 = vpop.xlane.xlu0 %4235
        %v4237 = vsel %vm1868, %v3709, 0.0
        %4238 = vadd.xlane.f32.xlu0 %v4237
        %v4239 = vpop.xlane.xlu0 %4238
        %v4240 = vsel %vm1868, %v3710, 0.0
        %4241 = vadd.xlane.f32.xlu0 %v4240
        %v4242 = vpop.xlane.xlu0 %4241
        %v4243 = vsel %vm1868, %v3711, 0.0
        %4244 = vadd.xlane.f32.xlu0 %v4243
        %v4245 = vpop.xlane.xlu0 %4244
        %v4246 = vsel %vm1868, %v3712, 0.0
        %4247 = vadd.xlane.f32.xlu0 %v4246
        %v4248 = vpop.xlane.xlu0 %4247
        %v4249 = vsel %vm1868, %v3713, 0.0
        %4250 = vadd.xlane.f32.xlu0 %v4249
        %v4251 = vpop.xlane.xlu0 %4250
        %v4252 = vsel %vm1868, %v3714, 0.0
        %4253 = vadd.xlane.f32.xlu0 %v4252
        %v4254 = vpop.xlane.xlu0 %4253
        %v4255 = vsel %vm1868, %v3715, 0.0
        %4256 = vadd.xlane.f32.xlu0 %v4255
        %v4257 = vpop.xlane.xlu0 %4256
        %v4258 = vsel %vm1868, %v3716, 0.0
        %4259 = vadd.xlane.f32.xlu0 %v4258
        %v4260 = vpop.xlane.xlu0 %4259
        %v4261 = vsel %vm1868, %v3717, 0.0
        %4262 = vadd.xlane.f32.xlu0 %v4261
        %v4263 = vpop.xlane.xlu0 %4262
        %v4264 = vsel %vm1868, %v3718, 0.0
        %4265 = vadd.xlane.f32.xlu0 %v4264
        %v4266 = vpop.xlane.xlu0 %4265
        %v4267 = vsel %vm1868, %v3719, 0.0
        %4268 = vadd.xlane.f32.xlu0 %v4267
        %v4269 = vpop.xlane.xlu0 %4268
        %v4270 = vsel %vm1868, %v3720, 0.0
        %4271 = vadd.xlane.f32.xlu0 %v4270
        %v4272 = vpop.xlane.xlu0 %4271
        %v4273 = vsel %vm1868, %v3721, 0.0
        %4274 = vadd.xlane.f32.xlu0 %v4273
        %v4275 = vpop.xlane.xlu0 %4274
        %v4276 = vsel %vm1868, %v3722, 0.0
        %4277 = vadd.xlane.f32.xlu0 %v4276
        %v4278 = vpop.xlane.xlu0 %4277
        %v4279 = vsel %vm1868, %v3723, 0.0
        %4280 = vadd.xlane.f32.xlu0 %v4279
        %v4281 = vpop.xlane.xlu0 %4280
        %v4282 = vsel %vm1868, %v3724, 0.0
        %4283 = vadd.xlane.f32.xlu0 %v4282
        %v4284 = vpop.xlane.xlu0 %4283
        %v4285 = vsel %vm1868, %v3725, 0.0
        %4286 = vadd.xlane.f32.xlu0 %v4285
        %v4287 = vpop.xlane.xlu0 %4286
        %v4288 = vsel %vm1868, %v3726, 0.0
        %4289 = vadd.xlane.f32.xlu0 %v4288
        %v4290 = vpop.xlane.xlu0 %4289
        %v4291 = vsel %vm1868, %v3727, 0.0
        %4292 = vadd.xlane.f32.xlu0 %v4291
        %v4293 = vpop.xlane.xlu0 %4292
        %v4294 = vsel %vm1868, %v3728, 0.0
        %4295 = vadd.xlane.f32.xlu0 %v4294
        %v4296 = vpop.xlane.xlu0 %4295
        %v4297 = vsel %vm1868, %v3729, 0.0
        %4298 = vadd.xlane.f32.xlu0 %v4297
        %v4299 = vpop.xlane.xlu0 %4298
        %v4300 = vsel %vm1868, %v3730, 0.0
        %4301 = vadd.xlane.f32.xlu0 %v4300
        %v4302 = vpop.xlane.xlu0 %4301
        %v4303 = vsel %vm1868, %v3731, 0.0
        %4304 = vadd.xlane.f32.xlu0 %v4303
        %v4305 = vpop.xlane.xlu0 %4304
        %v4306 = vsel %vm1868, %v3732, 0.0
        %4307 = vadd.xlane.f32.xlu0 %v4306
        %v4308 = vpop.xlane.xlu0 %4307
        %v4309 = vsel %vm1868, %v3733, 0.0
        %4310 = vadd.xlane.f32.xlu0 %v4309
        %v4311 = vpop.xlane.xlu0 %4310
        %v4312 = vsel %vm1868, %v3734, 0.0
        %4313 = vadd.xlane.f32.xlu0 %v4312
        %v4314 = vpop.xlane.xlu0 %4313
        %v4315 = vsel %vm1868, %v3735, 0.0
        %4316 = vadd.xlane.f32.xlu0 %v4315
        %v4317 = vpop.xlane.xlu0 %4316
        %v4318 = vsel %vm1868, %v3736, 0.0
        %4319 = vadd.xlane.f32.xlu0 %v4318
        %v4320 = vpop.xlane.xlu0 %4319
        %v4321 = vsel %vm1868, %v3737, 0.0
        %4322 = vadd.xlane.f32.xlu0 %v4321
        %v4323 = vpop.xlane.xlu0 %4322
        %v4324 = vsel %vm1868, %v3738, 0.0
        %4325 = vadd.xlane.f32.xlu0 %v4324
        %v4326 = vpop.xlane.xlu0 %4325
        %v4327 = vsel %vm1868, %v3739, 0.0
        %4328 = vadd.xlane.f32.xlu0 %v4327
        %v4329 = vpop.xlane.xlu0 %4328
        %v4330 = vsel %vm1868, %v3740, 0.0
        %4331 = vadd.xlane.f32.xlu0 %v4330
        %v4332 = vpop.xlane.xlu0 %4331
        %v4333 = vsel %vm1868, %v3741, 0.0
        %4334 = vadd.xlane.f32.xlu0 %v4333
        %v4335 = vpop.xlane.xlu0 %4334
        %v4336 = vsel %vm1868, %v3742, 0.0
        %4337 = vadd.xlane.f32.xlu0 %v4336
        %v4338 = vpop.xlane.xlu0 %4337
        %v4339 = vsel %vm1868, %v3743, 0.0
        %4340 = vadd.xlane.f32.xlu0 %v4339
        %v4341 = vpop.xlane.xlu0 %4340
        %v4342 = vsel %vm1868, %v3744, 0.0
        %4343 = vadd.xlane.f32.xlu0 %v4342
        %v4344 = vpop.xlane.xlu0 %4343
        %v4345 = vsel %vm1868, %v3745, 0.0
        %4346 = vadd.xlane.f32.xlu0 %v4345
        %v4347 = vpop.xlane.xlu0 %4346
        %v4348 = vsel %vm1868, %v3746, 0.0
        %4349 = vadd.xlane.f32.xlu0 %v4348
        %v4350 = vpop.xlane.xlu0 %4349
        %v4351 = vsel %vm1868, %v3747, 0.0
        %4352 = vadd.xlane.f32.xlu0 %v4351
        %v4353 = vpop.xlane.xlu0 %4352
        %v4354 = vsel %vm1868, %v3748, 0.0
        %4355 = vadd.xlane.f32.xlu0 %v4354
        %v4356 = vpop.xlane.xlu0 %4355
        %v4357 = vsel %vm1868, %v3749, 0.0
        %4358 = vadd.xlane.f32.xlu0 %v4357
        %v4359 = vpop.xlane.xlu0 %4358
        %v4360 = vsel %vm1868, %v3750, 0.0
        %4361 = vadd.xlane.f32.xlu0 %v4360
        %v4362 = vpop.xlane.xlu0 %4361
        %v4363 = vsel %vm1868, %v3751, 0.0
        %4364 = vadd.xlane.f32.xlu0 %v4363
        %v4365 = vpop.xlane.xlu0 %4364
        %v4366 = vsel %vm1868, %v3752, 0.0
        %4367 = vadd.xlane.f32.xlu0 %v4366
        %v4368 = vpop.xlane.xlu0 %4367
        %v4369 = vsel %vm1868, %v3753, 0.0
        %4370 = vadd.xlane.f32.xlu0 %v4369
        %v4371 = vpop.xlane.xlu0 %4370
        %v4372 = vsel %vm1868, %v3754, 0.0
        %4373 = vadd.xlane.f32.xlu0 %v4372
        %v4374 = vpop.xlane.xlu0 %4373
        %v4375 = vsel %vm1868, %v3755, 0.0
        %4376 = vadd.xlane.f32.xlu0 %v4375
        %v4377 = vpop.xlane.xlu0 %4376
        %v4378 = vsel %vm1868, %v3756, 0.0
        %4379 = vadd.xlane.f32.xlu0 %v4378
        %v4380 = vpop.xlane.xlu0 %4379
        %v4381 = vsel %vm1868, %v3757, 0.0
        %4382 = vadd.xlane.f32.xlu0 %v4381
        %v4383 = vpop.xlane.xlu0 %4382
        %v4384 = vsel %vm1868, %v3758, 0.0
        %4385 = vadd.xlane.f32.xlu0 %v4384
        %v4386 = vpop.xlane.xlu0 %4385
        %v4387 = vsel %vm1868, %v3759, 0.0
        %4388 = vadd.xlane.f32.xlu0 %v4387
        %v4389 = vpop.xlane.xlu0 %4388
        %v4390 = vsel %vm1868, %v3760, 0.0
        %4391 = vadd.xlane.f32.xlu0 %v4390
        %v4392 = vpop.xlane.xlu0 %4391
        %v4393 = vsel %vm1868, %v3761, 0.0
        %4394 = vadd.xlane.f32.xlu0 %v4393
        %v4395 = vpop.xlane.xlu0 %4394
        %v4396 = vsel %vm1868, %v3762, 0.0
        %4397 = vadd.xlane.f32.xlu0 %v4396
        %v4398 = vpop.xlane.xlu0 %4397
        %v4399 = vsel %vm1868, %v3763, 0.0
        %4400 = vadd.xlane.f32.xlu0 %v4399
        %v4401 = vpop.xlane.xlu0 %4400
        %v4402 = vsel %vm1868, %v3764, 0.0
        %4403 = vadd.xlane.f32.xlu0 %v4402
        %v4404 = vpop.xlane.xlu0 %4403
        %v4405 = vsel %vm1868, %v3765, 0.0
        %4406 = vadd.xlane.f32.xlu0 %v4405
        %v4407 = vpop.xlane.xlu0 %4406
        %v4408 = vsel %vm1868, %v3766, 0.0
        %4409 = vadd.xlane.f32.xlu0 %v4408
        %v4410 = vpop.xlane.xlu0 %4409
        %v4411 = vsel %vm1868, %v3767, 0.0
        %4412 = vadd.xlane.f32.xlu0 %v4411
        %v4413 = vpop.xlane.xlu0 %4412
        %v4414 = vsel %vm1868, %v3768, 0.0
        %4415 = vadd.xlane.f32.xlu0 %v4414
        %v4416 = vpop.xlane.xlu0 %4415
        %v4417 = vsel %vm1868, %v3769, 0.0
        %4418 = vadd.xlane.f32.xlu0 %v4417
        %v4419 = vpop.xlane.xlu0 %4418
        %v4420 = vsel %vm1868, %v3770, 0.0
        %4421 = vadd.xlane.f32.xlu0 %v4420
        %v4422 = vpop.xlane.xlu0 %4421
        %v4423 = vsel %vm1868, %v3771, 0.0
        %4424 = vadd.xlane.f32.xlu0 %v4423
        %v4425 = vpop.xlane.xlu0 %4424
        %v4426 = vsel %vm1868, %v3772, 0.0
        %4427 = vadd.xlane.f32.xlu0 %v4426
        %v4428 = vpop.xlane.xlu0 %4427
        %v4429 = vsel %vm1868, %v3773, 0.0
        %4430 = vadd.xlane.f32.xlu0 %v4429
        %v4431 = vpop.xlane.xlu0 %4430
        %v4432 = vsel %vm1868, %v3774, 0.0
        %4433 = vadd.xlane.f32.xlu0 %v4432
        %v4434 = vpop.xlane.xlu0 %4433
        %v4435 = vsel %vm1868, %v3775, 0.0
        %4436 = vadd.xlane.f32.xlu0 %v4435
        %v4437 = vpop.xlane.xlu0 %4436
        %v4438 = vsel %vm1868, %v3776, 0.0
        %4439 = vadd.xlane.f32.xlu0 %v4438
        %v4440 = vpop.xlane.xlu0 %4439
        %v4441 = vsel %vm1868, %v3777, 0.0
        %4442 = vadd.xlane.f32.xlu0 %v4441
        %v4443 = vpop.xlane.xlu0 %4442
        %v4444 = vsel %vm1868, %v3778, 0.0
        %4445 = vadd.xlane.f32.xlu0 %v4444
        %v4446 = vpop.xlane.xlu0 %4445
        %v4447 = vsel %vm1868, %v3779, 0.0
        %4448 = vadd.xlane.f32.xlu0 %v4447
        %v4449 = vpop.xlane.xlu0 %4448
        %v4450 = vsel %vm1868, %v3780, 0.0
        %4451 = vadd.xlane.f32.xlu0 %v4450
        %v4452 = vpop.xlane.xlu0 %4451
        %v4453 = vsel %vm1868, %v3781, 0.0
        %4454 = vadd.xlane.f32.xlu0 %v4453
        %v4455 = vpop.xlane.xlu0 %4454
        %v4456 = vsel %vm1868, %v3782, 0.0
        %4457 = vadd.xlane.f32.xlu0 %v4456
        %v4458 = vpop.xlane.xlu0 %4457
        %v4459 = vsel %vm1868, %v3783, 0.0
        %4460 = vadd.xlane.f32.xlu0 %v4459
        %v4461 = vpop.xlane.xlu0 %4460
        %v4462 = vsel %vm1868, %v3784, 0.0
        %4463 = vadd.xlane.f32.xlu0 %v4462
        %v4464 = vpop.xlane.xlu0 %4463
        %v4465 = vsel %vm1868, %v3785, 0.0
        %4466 = vadd.xlane.f32.xlu0 %v4465
        %v4467 = vpop.xlane.xlu0 %4466
        %v4468 = vsel %vm1868, %v3786, 0.0
        %4469 = vadd.xlane.f32.xlu0 %v4468
        %v4470 = vpop.xlane.xlu0 %4469
        %v4471 = vsel %vm1868, %v3787, 0.0
        %4472 = vadd.xlane.f32.xlu0 %v4471
        %v4473 = vpop.xlane.xlu0 %4472
        %v4474 = vsel %vm1868, %v3788, 0.0
        %4475 = vadd.xlane.f32.xlu0 %v4474
        %v4476 = vpop.xlane.xlu0 %4475
        %v4477 = vsel %vm1868, %v3789, 0.0
        %4478 = vadd.xlane.f32.xlu0 %v4477
        %v4479 = vpop.xlane.xlu0 %4478
        %v4480 = vsel %vm1868, %v3790, 0.0
        %4481 = vadd.xlane.f32.xlu0 %v4480
        %v4482 = vpop.xlane.xlu0 %4481
        %v4483 = vsel %vm1868, %v3791, 0.0
        %4484 = vadd.xlane.f32.xlu0 %v4483
        %v4485 = vpop.xlane.xlu0 %4484
        %v4486 = vsel %vm1868, %v3792, 0.0
        %4487 = vadd.xlane.f32.xlu0 %v4486
        %v4488 = vpop.xlane.xlu0 %4487
        %v4489 = vsel %vm1868, %v3793, 0.0
        %4490 = vadd.xlane.f32.xlu0 %v4489
        %v4491 = vpop.xlane.xlu0 %4490
        %v4492 = vsel %vm1868, %v3794, 0.0
        %4493 = vadd.xlane.f32.xlu0 %v4492
        %v4494 = vpop.xlane.xlu0 %4493
        %v4495 = vsel %vm1868, %v3795, 0.0
        %4496 = vadd.xlane.f32.xlu0 %v4495
        %v4497 = vpop.xlane.xlu0 %4496
        %v4498 = vsel %vm1868, %v3796, 0.0
        %4499 = vadd.xlane.f32.xlu0 %v4498
        %v4500 = vpop.xlane.xlu0 %4499
        %v4501 = vsel %vm1868, %v3797, 0.0
        %4502 = vadd.xlane.f32.xlu0 %v4501
        %v4503 = vpop.xlane.xlu0 %4502
        %v4504 = vsel %vm1868, %v3798, 0.0
        %4505 = vadd.xlane.f32.xlu0 %v4504
        %v4506 = vpop.xlane.xlu0 %4505
        %v4507 = vsel %vm1868, %v3799, 0.0
        %4508 = vadd.xlane.f32.xlu0 %v4507
        %v4509 = vpop.xlane.xlu0 %4508
        %v4510 = vsel %vm1868, %v3800, 0.0
        %4511 = vadd.xlane.f32.xlu0 %v4510
        %v4512 = vpop.xlane.xlu0 %4511
        %v4513 = vsel %vm1868, %v3801, 0.0
        %4514 = vadd.xlane.f32.xlu0 %v4513
        %v4515 = vpop.xlane.xlu0 %4514
        %v4516 = vsel %vm1868, %v3802, 0.0
        %4517 = vadd.xlane.f32.xlu0 %v4516
        %v4518 = vpop.xlane.xlu0 %4517
        %v4519 = vsel %vm1868, %v3803, 0.0
        %4520 = vadd.xlane.f32.xlu0 %v4519
        %v4521 = vpop.xlane.xlu0 %4520
        %v4522 = vsel %vm1868, %v3804, 0.0
        %4523 = vadd.xlane.f32.xlu0 %v4522
        %v4524 = vpop.xlane.xlu0 %4523
        %v4525 = vsel %vm1868, %v3805, 0.0
        %4526 = vadd.xlane.f32.xlu0 %v4525
        %v4527 = vpop.xlane.xlu0 %4526
        %v4528 = vsel %vm1868, %v3806, 0.0
        %4529 = vadd.xlane.f32.xlu0 %v4528
        %v4530 = vpop.xlane.xlu0 %4529
        %v4531 = vsel %vm1868, %v3807, 0.0
        %4532 = vadd.xlane.f32.xlu0 %v4531
        %v4533 = vpop.xlane.xlu0 %4532
        %v4534 = vsel %vm1868, %v3808, 0.0
        %4535 = vadd.xlane.f32.xlu0 %v4534
        %v4536 = vpop.xlane.xlu0 %4535
        %v4537 = vsel %vm1868, %v3809, 0.0
        %4538 = vadd.xlane.f32.xlu0 %v4537
        %v4539 = vpop.xlane.xlu0 %4538
        %v4540 = vsel %vm1868, %v3810, 0.0
        %4541 = vadd.xlane.f32.xlu0 %v4540
        %v4542 = vpop.xlane.xlu0 %4541
        %v4543 = vsel %vm1868, %v3811, 0.0
        %4544 = vadd.xlane.f32.xlu0 %v4543
        %v4545 = vpop.xlane.xlu0 %4544
        %v4546 = vsel %vm1868, %v3812, 0.0
        %4547 = vadd.xlane.f32.xlu0 %v4546
        %v4548 = vpop.xlane.xlu0 %4547
        %v4549 = vsel %vm1868, %v3813, 0.0
        %4550 = vadd.xlane.f32.xlu0 %v4549
        %v4551 = vpop.xlane.xlu0 %4550
        %v4552 = vsel %vm1868, %v3814, 0.0
        %4553 = vadd.xlane.f32.xlu0 %v4552
        %v4554 = vpop.xlane.xlu0 %4553
        %v4555 = vsel %vm1868, %v3815, 0.0
        %4556 = vadd.xlane.f32.xlu0 %v4555
        %v4557 = vpop.xlane.xlu0 %4556
        %v4558 = vsel %vm1868, %v3816, 0.0
        %4559 = vadd.xlane.f32.xlu0 %v4558
        %v4560 = vpop.xlane.xlu0 %4559
        %v4561 = vsel %vm1868, %v3817, 0.0
        %4562 = vadd.xlane.f32.xlu0 %v4561
        %v4563 = vpop.xlane.xlu0 %4562
        %v4564 = vsel %vm1868, %v3818, 0.0
        %4565 = vadd.xlane.f32.xlu0 %v4564
        %v4566 = vpop.xlane.xlu0 %4565
        %v4567 = vsel %vm1868, %v3819, 0.0
        %4568 = vadd.xlane.f32.xlu0 %v4567
        %v4569 = vpop.xlane.xlu0 %4568
        %v4570 = vsel %vm1868, %v3820, 0.0
        %4571 = vadd.xlane.f32.xlu0 %v4570
        %v4572 = vpop.xlane.xlu0 %4571
        %v4573 = vsel %vm1868, %v3821, 0.0
        %4574 = vadd.xlane.f32.xlu0 %v4573
        %v4575 = vpop.xlane.xlu0 %4574
        %v4576 = vsel %vm1868, %v3822, 0.0
        %4577 = vadd.xlane.f32.xlu0 %v4576
        %v4578 = vpop.xlane.xlu0 %4577
        %v4579 = vsel %vm1868, %v3823, 0.0
        %4580 = vadd.xlane.f32.xlu0 %v4579
        %v4581 = vpop.xlane.xlu0 %4580
        %v4582 = vsel %vm1868, %v3824, 0.0
        %4583 = vadd.xlane.f32.xlu0 %v4582
        %v4584 = vpop.xlane.xlu0 %4583
        %v4585 = vsel %vm1868, %v3825, 0.0
        %4586 = vadd.xlane.f32.xlu0 %v4585
        %v4587 = vpop.xlane.xlu0 %4586
        %v4588 = vsel %vm1868, %v3826, 0.0
        %4589 = vadd.xlane.f32.xlu0 %v4588
        %v4590 = vpop.xlane.xlu0 %4589
        %v4591 = vsel %vm1868, %v3827, 0.0
        %4592 = vadd.xlane.f32.xlu0 %v4591
        %v4593 = vpop.xlane.xlu0 %4592
        %v4594 = vsel %vm1868, %v3828, 0.0
        %4595 = vadd.xlane.f32.xlu0 %v4594
        %v4596 = vpop.xlane.xlu0 %4595
        %v4597 = vld [vmem:[#allocation2] sm:$0x1]
        %v4599 = vlaneseq
        %v4600 = vshrl.u32 %v4599, 7
        %v4601 = vsub.s32 0, %v4600
        %v4602 = vrot.slane %v4597, %v4601
        %4603 = vset.pattern.permute.xlu0 0
        %4604 = vperm.xlu0 %4603, %v4602
        %v4605 = vpop.permute.xlu0 %4604
        %v4607 = vadd.f32 %v3831, %v4605
        %v4608 = vadd.f32 %v3834, %v4605
        %v4609 = vadd.f32 %v3837, %v4605
        %v4610 = vadd.f32 %v3840, %v4605
        %v4611 = vadd.f32 %v3843, %v4605
        %v4612 = vadd.f32 %v3846, %v4605
        %v4613 = vadd.f32 %v3849, %v4605
        %v4614 = vadd.f32 %v3852, %v4605
        %v4615 = vadd.f32 %v3855, %v4605
        %v4616 = vadd.f32 %v3858, %v4605
        %v4617 = vadd.f32 %v3861, %v4605
        %v4618 = vadd.f32 %v3864, %v4605
        %v4619 = vadd.f32 %v3867, %v4605
        %v4620 = vadd.f32 %v3870, %v4605
        %v4621 = vadd.f32 %v3873, %v4605
        %v4622 = vadd.f32 %v3876, %v4605
        %v4623 = vadd.f32 %v3879, %v4605
        %v4624 = vadd.f32 %v3882, %v4605
        %v4625 = vadd.f32 %v3885, %v4605
        %v4626 = vadd.f32 %v3888, %v4605
        %v4627 = vadd.f32 %v3891, %v4605
        %v4628 = vadd.f32 %v3894, %v4605
        %v4629 = vadd.f32 %v3897, %v4605
        %v4630 = vadd.f32 %v3900, %v4605
        %v4631 = vadd.f32 %v3903, %v4605
        %v4632 = vadd.f32 %v3906, %v4605
        %v4633 = vadd.f32 %v3909, %v4605
        %v4634 = vadd.f32 %v3912, %v4605
        %v4635 = vadd.f32 %v3915, %v4605
        %v4636 = vadd.f32 %v3918, %v4605
        %v4637 = vadd.f32 %v3921, %v4605
        %v4638 = vadd.f32 %v3924, %v4605
        %v4639 = vadd.f32 %v3927, %v4605
        %v4640 = vadd.f32 %v3930, %v4605
        %v4641 = vadd.f32 %v3933, %v4605
        %v4642 = vadd.f32 %v3936, %v4605
        %v4643 = vadd.f32 %v3939, %v4605
        %v4644 = vadd.f32 %v3942, %v4605
        %v4645 = vadd.f32 %v3945, %v4605
        %v4646 = vadd.f32 %v3948, %v4605
        %v4647 = vadd.f32 %v3951, %v4605
        %v4648 = vadd.f32 %v3954, %v4605
        %v4649 = vadd.f32 %v3957, %v4605
        %v4650 = vadd.f32 %v3960, %v4605
        %v4651 = vadd.f32 %v3963, %v4605
        %v4652 = vadd.f32 %v3966, %v4605
        %v4653 = vadd.f32 %v3969, %v4605
        %v4654 = vadd.f32 %v3972, %v4605
        %v4655 = vadd.f32 %v3975, %v4605
        %v4656 = vadd.f32 %v3978, %v4605
        %v4657 = vadd.f32 %v3981, %v4605
        %v4658 = vadd.f32 %v3984, %v4605
        %v4659 = vadd.f32 %v3987, %v4605
        %v4660 = vadd.f32 %v3990, %v4605
        %v4661 = vadd.f32 %v3993, %v4605
        %v4662 = vadd.f32 %v3996, %v4605
        %v4663 = vadd.f32 %v3999, %v4605
        %v4664 = vadd.f32 %v4002, %v4605
        %v4665 = vadd.f32 %v4005, %v4605
        %v4666 = vadd.f32 %v4008, %v4605
        %v4667 = vadd.f32 %v4011, %v4605
        %v4668 = vadd.f32 %v4014, %v4605
        %v4669 = vadd.f32 %v4017, %v4605
        %v4670 = vadd.f32 %v4020, %v4605
        %v4671 = vadd.f32 %v4023, %v4605
        %v4672 = vadd.f32 %v4026, %v4605
        %v4673 = vadd.f32 %v4029, %v4605
        %v4674 = vadd.f32 %v4032, %v4605
        %v4675 = vadd.f32 %v4035, %v4605
        %v4676 = vadd.f32 %v4038, %v4605
        %v4677 = vadd.f32 %v4041, %v4605
        %v4678 = vadd.f32 %v4044, %v4605
        %v4679 = vadd.f32 %v4047, %v4605
        %v4680 = vadd.f32 %v4050, %v4605
        %v4681 = vadd.f32 %v4053, %v4605
        %v4682 = vadd.f32 %v4056, %v4605
        %v4683 = vadd.f32 %v4059, %v4605
        %v4684 = vadd.f32 %v4062, %v4605
        %v4685 = vadd.f32 %v4065, %v4605
        %v4686 = vadd.f32 %v4068, %v4605
        %v4687 = vadd.f32 %v4071, %v4605
        %v4688 = vadd.f32 %v4074, %v4605
        %v4689 = vadd.f32 %v4077, %v4605
        %v4690 = vadd.f32 %v4080, %v4605
        %v4691 = vadd.f32 %v4083, %v4605
        %v4692 = vadd.f32 %v4086, %v4605
        %v4693 = vadd.f32 %v4089, %v4605
        %v4694 = vadd.f32 %v4092, %v4605
        %v4695 = vadd.f32 %v4095, %v4605
        %v4696 = vadd.f32 %v4098, %v4605
        %v4697 = vadd.f32 %v4101, %v4605
        %v4698 = vadd.f32 %v4104, %v4605
        %v4699 = vadd.f32 %v4107, %v4605
        %v4700 = vadd.f32 %v4110, %v4605
        %v4701 = vadd.f32 %v4113, %v4605
        %v4702 = vadd.f32 %v4116, %v4605
        %v4703 = vadd.f32 %v4119, %v4605
        %v4704 = vadd.f32 %v4122, %v4605
        %v4705 = vadd.f32 %v4125, %v4605
        %v4706 = vadd.f32 %v4128, %v4605
        %v4707 = vadd.f32 %v4131, %v4605
        %v4708 = vadd.f32 %v4134, %v4605
        %v4709 = vadd.f32 %v4137, %v4605
        %v4710 = vadd.f32 %v4140, %v4605
        %v4711 = vadd.f32 %v4143, %v4605
        %v4712 = vadd.f32 %v4146, %v4605
        %v4713 = vadd.f32 %v4149, %v4605
        %v4714 = vadd.f32 %v4152, %v4605
        %v4715 = vadd.f32 %v4155, %v4605
        %v4716 = vadd.f32 %v4158, %v4605
        %v4717 = vadd.f32 %v4161, %v4605
        %v4718 = vadd.f32 %v4164, %v4605
        %v4719 = vadd.f32 %v4167, %v4605
        %v4720 = vadd.f32 %v4170, %v4605
        %v4721 = vadd.f32 %v4173, %v4605
        %v4722 = vadd.f32 %v4176, %v4605
        %v4723 = vadd.f32 %v4179, %v4605
        %v4724 = vadd.f32 %v4182, %v4605
        %v4725 = vadd.f32 %v4185, %v4605
        %v4726 = vadd.f32 %v4188, %v4605
        %v4727 = vadd.f32 %v4191, %v4605
        %v4728 = vadd.f32 %v4194, %v4605
        %v4729 = vadd.f32 %v4197, %v4605
        %v4730 = vadd.f32 %v4200, %v4605
        %v4731 = vadd.f32 %v4203, %v4605
        %v4732 = vadd.f32 %v4206, %v4605
        %v4733 = vadd.f32 %v4209, %v4605
        %v4734 = vadd.f32 %v4212, %v4605
        %v4735 = vadd.f32 %v4215, %v4605
        %v4736 = vadd.f32 %v4218, %v4605
        %v4737 = vadd.f32 %v4221, %v4605
        %v4738 = vadd.f32 %v4224, %v4605
        %v4739 = vadd.f32 %v4227, %v4605
        %v4740 = vadd.f32 %v4230, %v4605
        %v4741 = vadd.f32 %v4233, %v4605
        %v4742 = vadd.f32 %v4236, %v4605
        %v4743 = vadd.f32 %v4239, %v4605
        %v4744 = vadd.f32 %v4242, %v4605
        %v4745 = vadd.f32 %v4245, %v4605
        %v4746 = vadd.f32 %v4248, %v4605
        %v4747 = vadd.f32 %v4251, %v4605
        %v4748 = vadd.f32 %v4254, %v4605
        %v4749 = vadd.f32 %v4257, %v4605
        %v4750 = vadd.f32 %v4260, %v4605
        %v4751 = vadd.f32 %v4263, %v4605
        %v4752 = vadd.f32 %v4266, %v4605
        %v4753 = vadd.f32 %v4269, %v4605
        %v4754 = vadd.f32 %v4272, %v4605
        %v4755 = vadd.f32 %v4275, %v4605
        %v4756 = vadd.f32 %v4278, %v4605
        %v4757 = vadd.f32 %v4281, %v4605
        %v4758 = vadd.f32 %v4284, %v4605
        %v4759 = vadd.f32 %v4287, %v4605
        %v4760 = vadd.f32 %v4290, %v4605
        %v4761 = vadd.f32 %v4293, %v4605
        %v4762 = vadd.f32 %v4296, %v4605
        %v4763 = vadd.f32 %v4299, %v4605
        %v4764 = vadd.f32 %v4302, %v4605
        %v4765 = vadd.f32 %v4305, %v4605
        %v4766 = vadd.f32 %v4308, %v4605
        %v4767 = vadd.f32 %v4311, %v4605
        %v4768 = vadd.f32 %v4314, %v4605
        %v4769 = vadd.f32 %v4317, %v4605
        %v4770 = vadd.f32 %v4320, %v4605
        %v4771 = vadd.f32 %v4323, %v4605
        %v4772 = vadd.f32 %v4326, %v4605
        %v4773 = vadd.f32 %v4329, %v4605
        %v4774 = vadd.f32 %v4332, %v4605
        %v4775 = vadd.f32 %v4335, %v4605
        %v4776 = vadd.f32 %v4338, %v4605
        %v4777 = vadd.f32 %v4341, %v4605
        %v4778 = vadd.f32 %v4344, %v4605
        %v4779 = vadd.f32 %v4347, %v4605
        %v4780 = vadd.f32 %v4350, %v4605
        %v4781 = vadd.f32 %v4353, %v4605
        %v4782 = vadd.f32 %v4356, %v4605
        %v4783 = vadd.f32 %v4359, %v4605
        %v4784 = vadd.f32 %v4362, %v4605
        %v4785 = vadd.f32 %v4365, %v4605
        %v4786 = vadd.f32 %v4368, %v4605
        %v4787 = vadd.f32 %v4371, %v4605
        %v4788 = vadd.f32 %v4374, %v4605
        %v4789 = vadd.f32 %v4377, %v4605
        %v4790 = vadd.f32 %v4380, %v4605
        %v4791 = vadd.f32 %v4383, %v4605
        %v4792 = vadd.f32 %v4386, %v4605
        %v4793 = vadd.f32 %v4389, %v4605
        %v4794 = vadd.f32 %v4392, %v4605
        %v4795 = vadd.f32 %v4395, %v4605
        %v4796 = vadd.f32 %v4398, %v4605
        %v4797 = vadd.f32 %v4401, %v4605
        %v4798 = vadd.f32 %v4404, %v4605
        %v4799 = vadd.f32 %v4407, %v4605
        %v4800 = vadd.f32 %v4410, %v4605
        %v4801 = vadd.f32 %v4413, %v4605
        %v4802 = vadd.f32 %v4416, %v4605
        %v4803 = vadd.f32 %v4419, %v4605
        %v4804 = vadd.f32 %v4422, %v4605
        %v4805 = vadd.f32 %v4425, %v4605
        %v4806 = vadd.f32 %v4428, %v4605
        %v4807 = vadd.f32 %v4431, %v4605
        %v4808 = vadd.f32 %v4434, %v4605
        %v4809 = vadd.f32 %v4437, %v4605
        %v4810 = vadd.f32 %v4440, %v4605
        %v4811 = vadd.f32 %v4443, %v4605
        %v4812 = vadd.f32 %v4446, %v4605
        %v4813 = vadd.f32 %v4449, %v4605
        %v4814 = vadd.f32 %v4452, %v4605
        %v4815 = vadd.f32 %v4455, %v4605
        %v4816 = vadd.f32 %v4458, %v4605
        %v4817 = vadd.f32 %v4461, %v4605
        %v4818 = vadd.f32 %v4464, %v4605
        %v4819 = vadd.f32 %v4467, %v4605
        %v4820 = vadd.f32 %v4470, %v4605
        %v4821 = vadd.f32 %v4473, %v4605
        %v4822 = vadd.f32 %v4476, %v4605
        %v4823 = vadd.f32 %v4479, %v4605
        %v4824 = vadd.f32 %v4482, %v4605
        %v4825 = vadd.f32 %v4485, %v4605
        %v4826 = vadd.f32 %v4488, %v4605
        %v4827 = vadd.f32 %v4491, %v4605
        %v4828 = vadd.f32 %v4494, %v4605
        %v4829 = vadd.f32 %v4497, %v4605
        %v4830 = vadd.f32 %v4500, %v4605
        %v4831 = vadd.f32 %v4503, %v4605
        %v4832 = vadd.f32 %v4506, %v4605
        %v4833 = vadd.f32 %v4509, %v4605
        %v4834 = vadd.f32 %v4512, %v4605
        %v4835 = vadd.f32 %v4515, %v4605
        %v4836 = vadd.f32 %v4518, %v4605
        %v4837 = vadd.f32 %v4521, %v4605
        %v4838 = vadd.f32 %v4524, %v4605
        %v4839 = vadd.f32 %v4527, %v4605
        %v4840 = vadd.f32 %v4530, %v4605
        %v4841 = vadd.f32 %v4533, %v4605
        %v4842 = vadd.f32 %v4536, %v4605
        %v4843 = vadd.f32 %v4539, %v4605
        %v4844 = vadd.f32 %v4542, %v4605
        %v4845 = vadd.f32 %v4545, %v4605
        %v4846 = vadd.f32 %v4548, %v4605
        %v4847 = vadd.f32 %v4551, %v4605
        %v4848 = vadd.f32 %v4554, %v4605
        %v4849 = vadd.f32 %v4557, %v4605
        %v4850 = vadd.f32 %v4560, %v4605
        %v4851 = vadd.f32 %v4563, %v4605
        %v4852 = vadd.f32 %v4566, %v4605
        %v4853 = vadd.f32 %v4569, %v4605
        %v4854 = vadd.f32 %v4572, %v4605
        %v4855 = vadd.f32 %v4575, %v4605
        %v4856 = vadd.f32 %v4578, %v4605
        %v4857 = vadd.f32 %v4581, %v4605
        %v4858 = vadd.f32 %v4584, %v4605
        %v4859 = vadd.f32 %v4587, %v4605
        %v4860 = vadd.f32 %v4590, %v4605
        %v4861 = vadd.f32 %v4593, %v4605
        %v4862 = vadd.f32 %v4596, %v4605
        %v4863 = vld [vmem:[%s322] sm:$0x1]
        %v4864 = vmin.f32 %v4607, %v4623
        %v4865 = vmin.f32 %v4864, %v4639
        %v4866 = vmin.f32 %v4865, %v4655
        %v4867 = vmin.f32 %v4866, %v4671
        %v4868 = vmin.f32 %v4867, %v4687
        %v4869 = vmin.f32 %v4868, %v4703
        %v4870 = vmin.f32 %v4869, %v4719
        %v4871 = vmin.f32 %v4870, %v4735
        %v4872 = vmin.f32 %v4871, %v4751
        %v4873 = vmin.f32 %v4872, %v4767
        %v4874 = vmin.f32 %v4873, %v4783
        %v4875 = vmin.f32 %v4874, %v4799
        %v4876 = vmin.f32 %v4875, %v4815
        %v4877 = vmin.f32 %v4876, %v4831
        %v4878 = vmin.f32 %v4877, %v4847
        %v4879 = vmin.f32 %v4608, %v4624
        %v4880 = vmin.f32 %v4879, %v4640
        %v4881 = vmin.f32 %v4880, %v4656
        %v4882 = vmin.f32 %v4881, %v4672
        %v4883 = vmin.f32 %v4882, %v4688
        %v4884 = vmin.f32 %v4883, %v4704
        %v4885 = vmin.f32 %v4884, %v4720
        %v4886 = vmin.f32 %v4885, %v4736
        %v4887 = vmin.f32 %v4886, %v4752
        %v4888 = vmin.f32 %v4887, %v4768
        %v4889 = vmin.f32 %v4888, %v4784
        %v4890 = vmin.f32 %v4889, %v4800
        %v4891 = vmin.f32 %v4890, %v4816
        %v4892 = vmin.f32 %v4891, %v4832
        %v4893 = vmin.f32 %v4892, %v4848
        %v4894 = vmin.f32 %v4609, %v4625
        %v4895 = vmin.f32 %v4894, %v4641
        %v4896 = vmin.f32 %v4895, %v4657
        %v4897 = vmin.f32 %v4896, %v4673
        %v4898 = vmin.f32 %v4897, %v4689
        %v4899 = vmin.f32 %v4898, %v4705
        %v4900 = vmin.f32 %v4899, %v4721
        %v4901 = vmin.f32 %v4900, %v4737
        %v4902 = vmin.f32 %v4901, %v4753
        %v4903 = vmin.f32 %v4902, %v4769
        %v4904 = vmin.f32 %v4903, %v4785
        %v4905 = vmin.f32 %v4904, %v4801
        %v4906 = vmin.f32 %v4905, %v4817
        %v4907 = vmin.f32 %v4906, %v4833
        %v4908 = vmin.f32 %v4907, %v4849
        %v4909 = vmin.f32 %v4610, %v4626
        %v4910 = vmin.f32 %v4909, %v4642
        %v4911 = vmin.f32 %v4910, %v4658
        %v4912 = vmin.f32 %v4911, %v4674
        %v4913 = vmin.f32 %v4912, %v4690
        %v4914 = vmin.f32 %v4913, %v4706
        %v4915 = vmin.f32 %v4914, %v4722
        %v4916 = vmin.f32 %v4915, %v4738
        %v4917 = vmin.f32 %v4916, %v4754
        %v4918 = vmin.f32 %v4917, %v4770
        %v4919 = vmin.f32 %v4918, %v4786
        %v4920 = vmin.f32 %v4919, %v4802
        %v4921 = vmin.f32 %v4920, %v4818
        %v4922 = vmin.f32 %v4921, %v4834
        %v4923 = vmin.f32 %v4922, %v4850
        %v4924 = vmin.f32 %v4611, %v4627
        %v4925 = vmin.f32 %v4924, %v4643
        %v4926 = vmin.f32 %v4925, %v4659
        %v4927 = vmin.f32 %v4926, %v4675
        %v4928 = vmin.f32 %v4927, %v4691
        %v4929 = vmin.f32 %v4928, %v4707
        %v4930 = vmin.f32 %v4929, %v4723
        %v4931 = vmin.f32 %v4930, %v4739
        %v4932 = vmin.f32 %v4931, %v4755
        %v4933 = vmin.f32 %v4932, %v4771
        %v4934 = vmin.f32 %v4933, %v4787
        %v4935 = vmin.f32 %v4934, %v4803
        %v4936 = vmin.f32 %v4935, %v4819
        %v4937 = vmin.f32 %v4936, %v4835
        %v4938 = vmin.f32 %v4937, %v4851
        %v4939 = vmin.f32 %v4612, %v4628
        %v4940 = vmin.f32 %v4939, %v4644
        %v4941 = vmin.f32 %v4940, %v4660
        %v4942 = vmin.f32 %v4941, %v4676
        %v4943 = vmin.f32 %v4942, %v4692
        %v4944 = vmin.f32 %v4943, %v4708
        %v4945 = vmin.f32 %v4944, %v4724
        %v4946 = vmin.f32 %v4945, %v4740
        %v4947 = vmin.f32 %v4946, %v4756
        %v4948 = vmin.f32 %v4947, %v4772
        %v4949 = vmin.f32 %v4948, %v4788
        %v4950 = vmin.f32 %v4949, %v4804
        %v4951 = vmin.f32 %v4950, %v4820
        %v4952 = vmin.f32 %v4951, %v4836
        %v4953 = vmin.f32 %v4952, %v4852
        %v4954 = vmin.f32 %v4613, %v4629
        %v4955 = vmin.f32 %v4954, %v4645
        %v4956 = vmin.f32 %v4955, %v4661
        %v4957 = vmin.f32 %v4956, %v4677
        %v4958 = vmin.f32 %v4957, %v4693
        %v4959 = vmin.f32 %v4958, %v4709
        %v4960 = vmin.f32 %v4959, %v4725
        %v4961 = vmin.f32 %v4960, %v4741
        %v4962 = vmin.f32 %v4961, %v4757
        %v4963 = vmin.f32 %v4962, %v4773
        %v4964 = vmin.f32 %v4963, %v4789
        %v4965 = vmin.f32 %v4964, %v4805
        %v4966 = vmin.f32 %v4965, %v4821
        %v4967 = vmin.f32 %v4966, %v4837
        %v4968 = vmin.f32 %v4967, %v4853
        %v4969 = vmin.f32 %v4614, %v4630
        %v4970 = vmin.f32 %v4969, %v4646
        %v4971 = vmin.f32 %v4970, %v4662
        %v4972 = vmin.f32 %v4971, %v4678
        %v4973 = vmin.f32 %v4972, %v4694
        %v4974 = vmin.f32 %v4973, %v4710
        %v4975 = vmin.f32 %v4974, %v4726
        %v4976 = vmin.f32 %v4975, %v4742
        %v4977 = vmin.f32 %v4976, %v4758
        %v4978 = vmin.f32 %v4977, %v4774
        %v4979 = vmin.f32 %v4978, %v4790
        %v4980 = vmin.f32 %v4979, %v4806
        %v4981 = vmin.f32 %v4980, %v4822
        %v4982 = vmin.f32 %v4981, %v4838
        %v4983 = vmin.f32 %v4982, %v4854
        %v4984 = vmin.f32 %v4615, %v4631
        %v4985 = vmin.f32 %v4984, %v4647
        %v4986 = vmin.f32 %v4985, %v4663
        %v4987 = vmin.f32 %v4986, %v4679
        %v4988 = vmin.f32 %v4987, %v4695
        %v4989 = vmin.f32 %v4988, %v4711
        %v4990 = vmin.f32 %v4989, %v4727
        %v4991 = vmin.f32 %v4990, %v4743
        %v4992 = vmin.f32 %v4991, %v4759
        %v4993 = vmin.f32 %v4992, %v4775
        %v4994 = vmin.f32 %v4993, %v4791
        %v4995 = vmin.f32 %v4994, %v4807
        %v4996 = vmin.f32 %v4995, %v4823
        %v4997 = vmin.f32 %v4996, %v4839
        %v4998 = vmin.f32 %v4997, %v4855
        %v4999 = vmin.f32 %v4616, %v4632
        %v5000 = vmin.f32 %v4999, %v4648
        %v5001 = vmin.f32 %v5000, %v4664
        %v5002 = vmin.f32 %v5001, %v4680
        %v5003 = vmin.f32 %v5002, %v4696
        %v5004 = vmin.f32 %v5003, %v4712
        %v5005 = vmin.f32 %v5004, %v4728
        %v5006 = vmin.f32 %v5005, %v4744
        %v5007 = vmin.f32 %v5006, %v4760
        %v5008 = vmin.f32 %v5007, %v4776
        %v5009 = vmin.f32 %v5008, %v4792
        %v5010 = vmin.f32 %v5009, %v4808
        %v5011 = vmin.f32 %v5010, %v4824
        %v5012 = vmin.f32 %v5011, %v4840
        %v5013 = vmin.f32 %v5012, %v4856
        %v5014 = vmin.f32 %v4617, %v4633
        %v5015 = vmin.f32 %v5014, %v4649
        %v5016 = vmin.f32 %v5015, %v4665
        %v5017 = vmin.f32 %v5016, %v4681
        %v5018 = vmin.f32 %v5017, %v4697
        %v5019 = vmin.f32 %v5018, %v4713
        %v5020 = vmin.f32 %v5019, %v4729
        %v5021 = vmin.f32 %v5020, %v4745
        %v5022 = vmin.f32 %v5021, %v4761
        %v5023 = vmin.f32 %v5022, %v4777
        %v5024 = vmin.f32 %v5023, %v4793
        %v5025 = vmin.f32 %v5024, %v4809
        %v5026 = vmin.f32 %v5025, %v4825
        %v5027 = vmin.f32 %v5026, %v4841
        %v5028 = vmin.f32 %v5027, %v4857
        %v5029 = vmin.f32 %v4618, %v4634
        %v5030 = vmin.f32 %v5029, %v4650
        %v5031 = vmin.f32 %v5030, %v4666
        %v5032 = vmin.f32 %v5031, %v4682
        %v5033 = vmin.f32 %v5032, %v4698
        %v5034 = vmin.f32 %v5033, %v4714
        %v5035 = vmin.f32 %v5034, %v4730
        %v5036 = vmin.f32 %v5035, %v4746
        %v5037 = vmin.f32 %v5036, %v4762
        %v5038 = vmin.f32 %v5037, %v4778
        %v5039 = vmin.f32 %v5038, %v4794
        %v5040 = vmin.f32 %v5039, %v4810
        %v5041 = vmin.f32 %v5040, %v4826
        %v5042 = vmin.f32 %v5041, %v4842
        %v5043 = vmin.f32 %v5042, %v4858
        %v5044 = vmin.f32 %v4619, %v4635
        %v5045 = vmin.f32 %v5044, %v4651
        %v5046 = vmin.f32 %v5045, %v4667
        %v5047 = vmin.f32 %v5046, %v4683
        %v5048 = vmin.f32 %v5047, %v4699
        %v5049 = vmin.f32 %v5048, %v4715
        %v5050 = vmin.f32 %v5049, %v4731
        %v5051 = vmin.f32 %v5050, %v4747
        %v5052 = vmin.f32 %v5051, %v4763
        %v5053 = vmin.f32 %v5052, %v4779
        %v5054 = vmin.f32 %v5053, %v4795
        %v5055 = vmin.f32 %v5054, %v4811
        %v5056 = vmin.f32 %v5055, %v4827
        %v5057 = vmin.f32 %v5056, %v4843
        %v5058 = vmin.f32 %v5057, %v4859
        %v5059 = vmin.f32 %v4620, %v4636
        %v5060 = vmin.f32 %v5059, %v4652
        %v5061 = vmin.f32 %v5060, %v4668
        %v5062 = vmin.f32 %v5061, %v4684
        %v5063 = vmin.f32 %v5062, %v4700
        %v5064 = vmin.f32 %v5063, %v4716
        %v5065 = vmin.f32 %v5064, %v4732
        %v5066 = vmin.f32 %v5065, %v4748
        %v5067 = vmin.f32 %v5066, %v4764
        %v5068 = vmin.f32 %v5067, %v4780
        %v5069 = vmin.f32 %v5068, %v4796
        %v5070 = vmin.f32 %v5069, %v4812
        %v5071 = vmin.f32 %v5070, %v4828
        %v5072 = vmin.f32 %v5071, %v4844
        %v5073 = vmin.f32 %v5072, %v4860
        %v5074 = vmin.f32 %v4621, %v4637
        %v5075 = vmin.f32 %v5074, %v4653
        %v5076 = vmin.f32 %v5075, %v4669
        %v5077 = vmin.f32 %v5076, %v4685
        %v5078 = vmin.f32 %v5077, %v4701
        %v5079 = vmin.f32 %v5078, %v4717
        %v5080 = vmin.f32 %v5079, %v4733
        %v5081 = vmin.f32 %v5080, %v4749
        %v5082 = vmin.f32 %v5081, %v4765
        %v5083 = vmin.f32 %v5082, %v4781
        %v5084 = vmin.f32 %v5083, %v4797
        %v5085 = vmin.f32 %v5084, %v4813
        %v5086 = vmin.f32 %v5085, %v4829
        %v5087 = vmin.f32 %v5086, %v4845
        %v5088 = vmin.f32 %v5087, %v4861
        %v5089 = vmin.f32 %v4622, %v4638
        %v5090 = vmin.f32 %v5089, %v4654
        %v5091 = vmin.f32 %v5090, %v4670
        %v5092 = vmin.f32 %v5091, %v4686
        %v5093 = vmin.f32 %v5092, %v4702
        %v5094 = vmin.f32 %v5093, %v4718
        %v5095 = vmin.f32 %v5094, %v4734
        %v5096 = vmin.f32 %v5095, %v4750
        %v5097 = vmin.f32 %v5096, %v4766
        %v5098 = vmin.f32 %v5097, %v4782
        %v5099 = vmin.f32 %v5098, %v4798
        %v5100 = vmin.f32 %v5099, %v4814
        %v5101 = vmin.f32 %v5100, %v4830
        %v5102 = vmin.f32 %v5101, %v4846
        %v5103 = vmin.f32 %v5102, %v4862
        %v5120 = vlaneseq
        %v5121 = vshrl.u32 %v5120, 7
        %v5122 = vsub.s32 0, %v5121
        %v5123 = vrot.slane %v4878, %v5122
        %v5124 = vlaneseq
        %v5125 = vshrl.u32 %v5124, 7
        %v5126 = vsub.s32 1, %v5125
        %v5127 = vrot.slane %v4878, %v5126
        %v5128 = vlaneseq
        %v5129 = vshrl.u32 %v5128, 7
        %v5130 = vsub.s32 2, %v5129
        %v5131 = vrot.slane %v4878, %v5130
        %v5132 = vlaneseq
        %v5133 = vshrl.u32 %v5132, 7
        %v5134 = vsub.s32 3, %v5133
        %v5135 = vrot.slane %v4878, %v5134
        %v5136 = vlaneseq
        %v5137 = vshrl.u32 %v5136, 7
        %v5138 = vsub.s32 4, %v5137
        %v5139 = vrot.slane %v4878, %v5138
        %v5140 = vlaneseq
        %v5141 = vshrl.u32 %v5140, 7
        %v5142 = vsub.s32 5, %v5141
        %v5143 = vrot.slane %v4878, %v5142
        %v5144 = vlaneseq
        %v5145 = vshrl.u32 %v5144, 7
        %v5146 = vsub.s32 6, %v5145
        %v5147 = vrot.slane %v4878, %v5146
        %v5148 = vlaneseq
        %v5149 = vshrl.u32 %v5148, 7
        %v5150 = vsub.s32 7, %v5149
        %v5151 = vrot.slane %v4878, %v5150
        %v5152 = vlaneseq
        %v5153 = vshrl.u32 %v5152, 7
        %v5154 = vsub.s32 0, %v5153
        %v5155 = vrot.slane %v4893, %v5154
        %v5156 = vlaneseq
        %v5157 = vshrl.u32 %v5156, 7
        %v5158 = vsub.s32 1, %v5157
        %v5159 = vrot.slane %v4893, %v5158
        %v5160 = vlaneseq
        %v5161 = vshrl.u32 %v5160, 7
        %v5162 = vsub.s32 2, %v5161
        %v5163 = vrot.slane %v4893, %v5162
        %v5164 = vlaneseq
        %v5165 = vshrl.u32 %v5164, 7
        %v5166 = vsub.s32 3, %v5165
        %v5167 = vrot.slane %v4893, %v5166
        %v5168 = vlaneseq
        %v5169 = vshrl.u32 %v5168, 7
        %v5170 = vsub.s32 4, %v5169
        %v5171 = vrot.slane %v4893, %v5170
        %v5172 = vlaneseq
        %v5173 = vshrl.u32 %v5172, 7
        %v5174 = vsub.s32 5, %v5173
        %v5175 = vrot.slane %v4893, %v5174
        %v5176 = vlaneseq
        %v5177 = vshrl.u32 %v5176, 7
        %v5178 = vsub.s32 6, %v5177
        %v5179 = vrot.slane %v4893, %v5178
        %v5180 = vlaneseq
        %v5181 = vshrl.u32 %v5180, 7
        %v5182 = vsub.s32 7, %v5181
        %v5183 = vrot.slane %v4893, %v5182
        %v5184 = vlaneseq
        %v5185 = vshrl.u32 %v5184, 7
        %v5186 = vsub.s32 0, %v5185
        %v5187 = vrot.slane %v4908, %v5186
        %v5188 = vlaneseq
        %v5189 = vshrl.u32 %v5188, 7
        %v5190 = vsub.s32 1, %v5189
        %v5191 = vrot.slane %v4908, %v5190
        %v5192 = vlaneseq
        %v5193 = vshrl.u32 %v5192, 7
        %v5194 = vsub.s32 2, %v5193
        %v5195 = vrot.slane %v4908, %v5194
        %v5196 = vlaneseq
        %v5197 = vshrl.u32 %v5196, 7
        %v5198 = vsub.s32 3, %v5197
        %v5199 = vrot.slane %v4908, %v5198
        %v5200 = vlaneseq
        %v5201 = vshrl.u32 %v5200, 7
        %v5202 = vsub.s32 4, %v5201
        %v5203 = vrot.slane %v4908, %v5202
        %v5204 = vlaneseq
        %v5205 = vshrl.u32 %v5204, 7
        %v5206 = vsub.s32 5, %v5205
        %v5207 = vrot.slane %v4908, %v5206
        %v5208 = vlaneseq
        %v5209 = vshrl.u32 %v5208, 7
        %v5210 = vsub.s32 6, %v5209
        %v5211 = vrot.slane %v4908, %v5210
        %v5212 = vlaneseq
        %v5213 = vshrl.u32 %v5212, 7
        %v5214 = vsub.s32 7, %v5213
        %v5215 = vrot.slane %v4908, %v5214
        %v5216 = vlaneseq
        %v5217 = vshrl.u32 %v5216, 7
        %v5218 = vsub.s32 0, %v5217
        %v5219 = vrot.slane %v4923, %v5218
        %v5220 = vlaneseq
        %v5221 = vshrl.u32 %v5220, 7
        %v5222 = vsub.s32 1, %v5221
        %v5223 = vrot.slane %v4923, %v5222
        %v5224 = vlaneseq
        %v5225 = vshrl.u32 %v5224, 7
        %v5226 = vsub.s32 2, %v5225
        %v5227 = vrot.slane %v4923, %v5226
        %v5228 = vlaneseq
        %v5229 = vshrl.u32 %v5228, 7
        %v5230 = vsub.s32 3, %v5229
        %v5231 = vrot.slane %v4923, %v5230
        %v5232 = vlaneseq
        %v5233 = vshrl.u32 %v5232, 7
        %v5234 = vsub.s32 4, %v5233
        %v5235 = vrot.slane %v4923, %v5234
        %v5236 = vlaneseq
        %v5237 = vshrl.u32 %v5236, 7
        %v5238 = vsub.s32 5, %v5237
        %v5239 = vrot.slane %v4923, %v5238
        %v5240 = vlaneseq
        %v5241 = vshrl.u32 %v5240, 7
        %v5242 = vsub.s32 6, %v5241
        %v5243 = vrot.slane %v4923, %v5242
        %v5244 = vlaneseq
        %v5245 = vshrl.u32 %v5244, 7
        %v5246 = vsub.s32 7, %v5245
        %v5247 = vrot.slane %v4923, %v5246
        %v5248 = vlaneseq
        %v5249 = vshrl.u32 %v5248, 7
        %v5250 = vsub.s32 0, %v5249
        %v5251 = vrot.slane %v4938, %v5250
        %v5252 = vlaneseq
        %v5253 = vshrl.u32 %v5252, 7
        %v5254 = vsub.s32 1, %v5253
        %v5255 = vrot.slane %v4938, %v5254
        %v5256 = vlaneseq
        %v5257 = vshrl.u32 %v5256, 7
        %v5258 = vsub.s32 2, %v5257
        %v5259 = vrot.slane %v4938, %v5258
        %v5260 = vlaneseq
        %v5261 = vshrl.u32 %v5260, 7
        %v5262 = vsub.s32 3, %v5261
        %v5263 = vrot.slane %v4938, %v5262
        %v5264 = vlaneseq
        %v5265 = vshrl.u32 %v5264, 7
        %v5266 = vsub.s32 4, %v5265
        %v5267 = vrot.slane %v4938, %v5266
        %v5268 = vlaneseq
        %v5269 = vshrl.u32 %v5268, 7
        %v5270 = vsub.s32 5, %v5269
        %v5271 = vrot.slane %v4938, %v5270
        %v5272 = vlaneseq
        %v5273 = vshrl.u32 %v5272, 7
        %v5274 = vsub.s32 6, %v5273
        %v5275 = vrot.slane %v4938, %v5274
        %v5276 = vlaneseq
        %v5277 = vshrl.u32 %v5276, 7
        %v5278 = vsub.s32 7, %v5277
        %v5279 = vrot.slane %v4938, %v5278
        %v5280 = vlaneseq
        %v5281 = vshrl.u32 %v5280, 7
        %v5282 = vsub.s32 0, %v5281
        %v5283 = vrot.slane %v4953, %v5282
        %v5284 = vlaneseq
        %v5285 = vshrl.u32 %v5284, 7
        %v5286 = vsub.s32 1, %v5285
        %v5287 = vrot.slane %v4953, %v5286
        %v5288 = vlaneseq
        %v5289 = vshrl.u32 %v5288, 7
        %v5290 = vsub.s32 2, %v5289
        %v5291 = vrot.slane %v4953, %v5290
        %v5292 = vlaneseq
        %v5293 = vshrl.u32 %v5292, 7
        %v5294 = vsub.s32 3, %v5293
        %v5295 = vrot.slane %v4953, %v5294
        %v5296 = vlaneseq
        %v5297 = vshrl.u32 %v5296, 7
        %v5298 = vsub.s32 4, %v5297
        %v5299 = vrot.slane %v4953, %v5298
        %v5300 = vlaneseq
        %v5301 = vshrl.u32 %v5300, 7
        %v5302 = vsub.s32 5, %v5301
        %v5303 = vrot.slane %v4953, %v5302
        %v5304 = vlaneseq
        %v5305 = vshrl.u32 %v5304, 7
        %v5306 = vsub.s32 6, %v5305
        %v5307 = vrot.slane %v4953, %v5306
        %v5308 = vlaneseq
        %v5309 = vshrl.u32 %v5308, 7
        %v5310 = vsub.s32 7, %v5309
        %v5311 = vrot.slane %v4953, %v5310
        %v5312 = vlaneseq
        %v5313 = vshrl.u32 %v5312, 7
        %v5314 = vsub.s32 0, %v5313
        %v5315 = vrot.slane %v4968, %v5314
        %v5316 = vlaneseq
        %v5317 = vshrl.u32 %v5316, 7
        %v5318 = vsub.s32 1, %v5317
        %v5319 = vrot.slane %v4968, %v5318
        %v5320 = vlaneseq
        %v5321 = vshrl.u32 %v5320, 7
        %v5322 = vsub.s32 2, %v5321
        %v5323 = vrot.slane %v4968, %v5322
        %v5324 = vlaneseq
        %v5325 = vshrl.u32 %v5324, 7
        %v5326 = vsub.s32 3, %v5325
        %v5327 = vrot.slane %v4968, %v5326
        %v5328 = vlaneseq
        %v5329 = vshrl.u32 %v5328, 7
        %v5330 = vsub.s32 4, %v5329
        %v5331 = vrot.slane %v4968, %v5330
        %v5332 = vlaneseq
        %v5333 = vshrl.u32 %v5332, 7
        %v5334 = vsub.s32 5, %v5333
        %v5335 = vrot.slane %v4968, %v5334
        %v5336 = vlaneseq
        %v5337 = vshrl.u32 %v5336, 7
        %v5338 = vsub.s32 6, %v5337
        %v5339 = vrot.slane %v4968, %v5338
        %v5340 = vlaneseq
        %v5341 = vshrl.u32 %v5340, 7
        %v5342 = vsub.s32 7, %v5341
        %v5343 = vrot.slane %v4968, %v5342
        %v5344 = vlaneseq
        %v5345 = vshrl.u32 %v5344, 7
        %v5346 = vsub.s32 0, %v5345
        %v5347 = vrot.slane %v4983, %v5346
        %v5348 = vlaneseq
        %v5349 = vshrl.u32 %v5348, 7
        %v5350 = vsub.s32 1, %v5349
        %v5351 = vrot.slane %v4983, %v5350
        %v5352 = vlaneseq
        %v5353 = vshrl.u32 %v5352, 7
        %v5354 = vsub.s32 2, %v5353
        %v5355 = vrot.slane %v4983, %v5354
        %v5356 = vlaneseq
        %v5357 = vshrl.u32 %v5356, 7
        %v5358 = vsub.s32 3, %v5357
        %v5359 = vrot.slane %v4983, %v5358
        %v5360 = vlaneseq
        %v5361 = vshrl.u32 %v5360, 7
        %v5362 = vsub.s32 4, %v5361
        %v5363 = vrot.slane %v4983, %v5362
        %v5364 = vlaneseq
        %v5365 = vshrl.u32 %v5364, 7
        %v5366 = vsub.s32 5, %v5365
        %v5367 = vrot.slane %v4983, %v5366
        %v5368 = vlaneseq
        %v5369 = vshrl.u32 %v5368, 7
        %v5370 = vsub.s32 6, %v5369
        %v5371 = vrot.slane %v4983, %v5370
        %v5372 = vlaneseq
        %v5373 = vshrl.u32 %v5372, 7
        %v5374 = vsub.s32 7, %v5373
        %v5375 = vrot.slane %v4983, %v5374
        %v5376 = vlaneseq
        %v5377 = vshrl.u32 %v5376, 7
        %v5378 = vsub.s32 0, %v5377
        %v5379 = vrot.slane %v4998, %v5378
        %v5380 = vlaneseq
        %v5381 = vshrl.u32 %v5380, 7
        %v5382 = vsub.s32 1, %v5381
        %v5383 = vrot.slane %v4998, %v5382
        %v5384 = vlaneseq
        %v5385 = vshrl.u32 %v5384, 7
        %v5386 = vsub.s32 2, %v5385
        %v5387 = vrot.slane %v4998, %v5386
        %v5388 = vlaneseq
        %v5389 = vshrl.u32 %v5388, 7
        %v5390 = vsub.s32 3, %v5389
        %v5391 = vrot.slane %v4998, %v5390
        %v5392 = vlaneseq
        %v5393 = vshrl.u32 %v5392, 7
        %v5394 = vsub.s32 4, %v5393
        %v5395 = vrot.slane %v4998, %v5394
        %v5396 = vlaneseq
        %v5397 = vshrl.u32 %v5396, 7
        %v5398 = vsub.s32 5, %v5397
        %v5399 = vrot.slane %v4998, %v5398
        %v5400 = vlaneseq
        %v5401 = vshrl.u32 %v5400, 7
        %v5402 = vsub.s32 6, %v5401
        %v5403 = vrot.slane %v4998, %v5402
        %v5404 = vlaneseq
        %v5405 = vshrl.u32 %v5404, 7
        %v5406 = vsub.s32 7, %v5405
        %v5407 = vrot.slane %v4998, %v5406
        %v5408 = vlaneseq
        %v5409 = vshrl.u32 %v5408, 7
        %v5410 = vsub.s32 0, %v5409
        %v5411 = vrot.slane %v5013, %v5410
        %v5412 = vlaneseq
        %v5413 = vshrl.u32 %v5412, 7
        %v5414 = vsub.s32 1, %v5413
        %v5415 = vrot.slane %v5013, %v5414
        %v5416 = vlaneseq
        %v5417 = vshrl.u32 %v5416, 7
        %v5418 = vsub.s32 2, %v5417
        %v5419 = vrot.slane %v5013, %v5418
        %v5420 = vlaneseq
        %v5421 = vshrl.u32 %v5420, 7
        %v5422 = vsub.s32 3, %v5421
        %v5423 = vrot.slane %v5013, %v5422
        %v5424 = vlaneseq
        %v5425 = vshrl.u32 %v5424, 7
        %v5426 = vsub.s32 4, %v5425
        %v5427 = vrot.slane %v5013, %v5426
        %v5428 = vlaneseq
        %v5429 = vshrl.u32 %v5428, 7
        %v5430 = vsub.s32 5, %v5429
        %v5431 = vrot.slane %v5013, %v5430
        %v5432 = vlaneseq
        %v5433 = vshrl.u32 %v5432, 7
        %v5434 = vsub.s32 6, %v5433
        %v5435 = vrot.slane %v5013, %v5434
        %v5436 = vlaneseq
        %v5437 = vshrl.u32 %v5436, 7
        %v5438 = vsub.s32 7, %v5437
        %v5439 = vrot.slane %v5013, %v5438
        %v5440 = vlaneseq
        %v5441 = vshrl.u32 %v5440, 7
        %v5442 = vsub.s32 0, %v5441
        %v5443 = vrot.slane %v5028, %v5442
        %v5444 = vlaneseq
        %v5445 = vshrl.u32 %v5444, 7
        %v5446 = vsub.s32 1, %v5445
        %v5447 = vrot.slane %v5028, %v5446
        %v5448 = vlaneseq
        %v5449 = vshrl.u32 %v5448, 7
        %v5450 = vsub.s32 2, %v5449
        %v5451 = vrot.slane %v5028, %v5450
        %v5452 = vlaneseq
        %v5453 = vshrl.u32 %v5452, 7
        %v5454 = vsub.s32 3, %v5453
        %v5455 = vrot.slane %v5028, %v5454
        %v5456 = vlaneseq
        %v5457 = vshrl.u32 %v5456, 7
        %v5458 = vsub.s32 4, %v5457
        %v5459 = vrot.slane %v5028, %v5458
        %v5460 = vlaneseq
        %v5461 = vshrl.u32 %v5460, 7
        %v5462 = vsub.s32 5, %v5461
        %v5463 = vrot.slane %v5028, %v5462
        %v5464 = vlaneseq
        %v5465 = vshrl.u32 %v5464, 7
        %v5466 = vsub.s32 6, %v5465
        %v5467 = vrot.slane %v5028, %v5466
        %v5468 = vlaneseq
        %v5469 = vshrl.u32 %v5468, 7
        %v5470 = vsub.s32 7, %v5469
        %v5471 = vrot.slane %v5028, %v5470
        %v5472 = vlaneseq
        %v5473 = vshrl.u32 %v5472, 7
        %v5474 = vsub.s32 0, %v5473
        %v5475 = vrot.slane %v5043, %v5474
        %v5476 = vlaneseq
        %v5477 = vshrl.u32 %v5476, 7
        %v5478 = vsub.s32 1, %v5477
        %v5479 = vrot.slane %v5043, %v5478
        %v5480 = vlaneseq
        %v5481 = vshrl.u32 %v5480, 7
        %v5482 = vsub.s32 2, %v5481
        %v5483 = vrot.slane %v5043, %v5482
        %v5484 = vlaneseq
        %v5485 = vshrl.u32 %v5484, 7
        %v5486 = vsub.s32 3, %v5485
        %v5487 = vrot.slane %v5043, %v5486
        %v5488 = vlaneseq
        %v5489 = vshrl.u32 %v5488, 7
        %v5490 = vsub.s32 4, %v5489
        %v5491 = vrot.slane %v5043, %v5490
        %v5492 = vlaneseq
        %v5493 = vshrl.u32 %v5492, 7
        %v5494 = vsub.s32 5, %v5493
        %v5495 = vrot.slane %v5043, %v5494
        %v5496 = vlaneseq
        %v5497 = vshrl.u32 %v5496, 7
        %v5498 = vsub.s32 6, %v5497
        %v5499 = vrot.slane %v5043, %v5498
        %v5500 = vlaneseq
        %v5501 = vshrl.u32 %v5500, 7
        %v5502 = vsub.s32 7, %v5501
        %v5503 = vrot.slane %v5043, %v5502
        %v5504 = vlaneseq
        %v5505 = vshrl.u32 %v5504, 7
        %v5506 = vsub.s32 0, %v5505
        %v5507 = vrot.slane %v5058, %v5506
        %v5508 = vlaneseq
        %v5509 = vshrl.u32 %v5508, 7
        %v5510 = vsub.s32 1, %v5509
        %v5511 = vrot.slane %v5058, %v5510
        %v5512 = vlaneseq
        %v5513 = vshrl.u32 %v5512, 7
        %v5514 = vsub.s32 2, %v5513
        %v5515 = vrot.slane %v5058, %v5514
        %v5516 = vlaneseq
        %v5517 = vshrl.u32 %v5516, 7
        %v5518 = vsub.s32 3, %v5517
        %v5519 = vrot.slane %v5058, %v5518
        %v5520 = vlaneseq
        %v5521 = vshrl.u32 %v5520, 7
        %v5522 = vsub.s32 4, %v5521
        %v5523 = vrot.slane %v5058, %v5522
        %v5524 = vlaneseq
        %v5525 = vshrl.u32 %v5524, 7
        %v5526 = vsub.s32 5, %v5525
        %v5527 = vrot.slane %v5058, %v5526
        %v5528 = vlaneseq
        %v5529 = vshrl.u32 %v5528, 7
        %v5530 = vsub.s32 6, %v5529
        %v5531 = vrot.slane %v5058, %v5530
        %v5532 = vlaneseq
        %v5533 = vshrl.u32 %v5532, 7
        %v5534 = vsub.s32 7, %v5533
        %v5535 = vrot.slane %v5058, %v5534
        %v5536 = vlaneseq
        %v5537 = vshrl.u32 %v5536, 7
        %v5538 = vsub.s32 0, %v5537
        %v5539 = vrot.slane %v5073, %v5538
        %v5540 = vlaneseq
        %v5541 = vshrl.u32 %v5540, 7
        %v5542 = vsub.s32 1, %v5541
        %v5543 = vrot.slane %v5073, %v5542
        %v5544 = vlaneseq
        %v5545 = vshrl.u32 %v5544, 7
        %v5546 = vsub.s32 2, %v5545
        %v5547 = vrot.slane %v5073, %v5546
        %v5548 = vlaneseq
        %v5549 = vshrl.u32 %v5548, 7
        %v5550 = vsub.s32 3, %v5549
        %v5551 = vrot.slane %v5073, %v5550
        %v5552 = vlaneseq
        %v5553 = vshrl.u32 %v5552, 7
        %v5554 = vsub.s32 4, %v5553
        %v5555 = vrot.slane %v5073, %v5554
        %v5556 = vlaneseq
        %v5557 = vshrl.u32 %v5556, 7
        %v5558 = vsub.s32 5, %v5557
        %v5559 = vrot.slane %v5073, %v5558
        %v5560 = vlaneseq
        %v5561 = vshrl.u32 %v5560, 7
        %v5562 = vsub.s32 6, %v5561
        %v5563 = vrot.slane %v5073, %v5562
        %v5564 = vlaneseq
        %v5565 = vshrl.u32 %v5564, 7
        %v5566 = vsub.s32 7, %v5565
        %v5567 = vrot.slane %v5073, %v5566
        %v5568 = vlaneseq
        %v5569 = vshrl.u32 %v5568, 7
        %v5570 = vsub.s32 0, %v5569
        %v5571 = vrot.slane %v5088, %v5570
        %v5572 = vlaneseq
        %v5573 = vshrl.u32 %v5572, 7
        %v5574 = vsub.s32 1, %v5573
        %v5575 = vrot.slane %v5088, %v5574
        %v5576 = vlaneseq
        %v5577 = vshrl.u32 %v5576, 7
        %v5578 = vsub.s32 2, %v5577
        %v5579 = vrot.slane %v5088, %v5578
        %v5580 = vlaneseq
        %v5581 = vshrl.u32 %v5580, 7
        %v5582 = vsub.s32 3, %v5581
        %v5583 = vrot.slane %v5088, %v5582
        %v5584 = vlaneseq
        %v5585 = vshrl.u32 %v5584, 7
        %v5586 = vsub.s32 4, %v5585
        %v5587 = vrot.slane %v5088, %v5586
        %v5588 = vlaneseq
        %v5589 = vshrl.u32 %v5588, 7
        %v5590 = vsub.s32 5, %v5589
        %v5591 = vrot.slane %v5088, %v5590
        %v5592 = vlaneseq
        %v5593 = vshrl.u32 %v5592, 7
        %v5594 = vsub.s32 6, %v5593
        %v5595 = vrot.slane %v5088, %v5594
        %v5596 = vlaneseq
        %v5597 = vshrl.u32 %v5596, 7
        %v5598 = vsub.s32 7, %v5597
        %v5599 = vrot.slane %v5088, %v5598
        %v5600 = vlaneseq
        %v5601 = vshrl.u32 %v5600, 7
        %v5602 = vsub.s32 0, %v5601
        %v5603 = vrot.slane %v5103, %v5602
        %v5604 = vlaneseq
        %v5605 = vshrl.u32 %v5604, 7
        %v5606 = vsub.s32 1, %v5605
        %v5607 = vrot.slane %v5103, %v5606
        %v5608 = vlaneseq
        %v5609 = vshrl.u32 %v5608, 7
        %v5610 = vsub.s32 2, %v5609
        %v5611 = vrot.slane %v5103, %v5610
        %v5612 = vlaneseq
        %v5613 = vshrl.u32 %v5612, 7
        %v5614 = vsub.s32 3, %v5613
        %v5615 = vrot.slane %v5103, %v5614
        %v5616 = vlaneseq
        %v5617 = vshrl.u32 %v5616, 7
        %v5618 = vsub.s32 4, %v5617
        %v5619 = vrot.slane %v5103, %v5618
        %v5620 = vlaneseq
        %v5621 = vshrl.u32 %v5620, 7
        %v5622 = vsub.s32 5, %v5621
        %v5623 = vrot.slane %v5103, %v5622
        %v5624 = vlaneseq
        %v5625 = vshrl.u32 %v5624, 7
        %v5626 = vsub.s32 6, %v5625
        %v5627 = vrot.slane %v5103, %v5626
        %v5628 = vlaneseq
        %v5629 = vshrl.u32 %v5628, 7
        %v5630 = vsub.s32 7, %v5629
        %v5631 = vrot.slane %v5103, %v5630
        %v5632 = vcombine.low %v5123, %v5127
        %v5633 = vcombine.low %v5131, %v5135
        %v5634 = vcombine.low %v5139, %v5143
        %v5635 = vcombine.low %v5147, %v5151
        %v5637 = vunpack.c.l.s4 1966171168
        %v5638 = vunpack.c.0.s8 %v5637
        %v5639 = vlaneseq
        %v5640 = vshrl.u32 %v5639, 7
        %v5641 = vsub.s32 %v5638, %v5640
        %v5642 = vrot.slane %v5632, %v5641
        %v5644 = vunpack.c.l.s4 1966171168
        %v5645 = vunpack.c.0.s8 %v5644
        %v5646 = vlaneseq
        %v5647 = vshrl.u32 %v5646, 7
        %v5648 = vsub.s32 %v5645, %v5647
        %v5649 = vrot.slane %v5633, %v5648
        %v5651 = vunpack.c.l.s4 1966171168
        %v5652 = vunpack.c.0.s8 %v5651
        %v5653 = vlaneseq
        %v5654 = vshrl.u32 %v5653, 7
        %v5655 = vsub.s32 %v5652, %v5654
        %v5656 = vrot.slane %v5634, %v5655
        %v5658 = vunpack.c.l.s4 1966171168
        %v5659 = vunpack.c.0.s8 %v5658
        %v5660 = vlaneseq
        %v5661 = vshrl.u32 %v5660, 7
        %v5662 = vsub.s32 %v5659, %v5661
        %v5663 = vrot.slane %v5635, %v5662
        %v5664 = vcombine.low %v5642, %v5649
        %v5665 = vcombine.low %v5656, %v5663
        %v5667 = vunpack.c.l.s4 1966171168
        %v5668 = vunpack.c.0.s8 %v5667
        %v5669 = vlaneseq
        %v5670 = vshrl.u32 %v5669, 7
        %v5671 = vsub.s32 %v5668, %v5670
        %v5672 = vrot.slane %v5664, %v5671
        %v5674 = vunpack.c.l.s4 1966171168
        %v5675 = vunpack.c.0.s8 %v5674
        %v5676 = vlaneseq
        %v5677 = vshrl.u32 %v5676, 7
        %v5678 = vsub.s32 %v5675, %v5677
        %v5679 = vrot.slane %v5665, %v5678
        %v5680 = vcombine.low %v5672, %v5679
        %v5681 = vcombine.low %v5155, %v5159
        %v5682 = vcombine.low %v5163, %v5167
        %v5683 = vcombine.low %v5171, %v5175
        %v5684 = vcombine.low %v5179, %v5183
        %v5686 = vunpack.c.l.s4 1966171168
        %v5687 = vunpack.c.0.s8 %v5686
        %v5688 = vlaneseq
        %v5689 = vshrl.u32 %v5688, 7
        %v5690 = vsub.s32 %v5687, %v5689
        %v5691 = vrot.slane %v5681, %v5690
        %v5693 = vunpack.c.l.s4 1966171168
        %v5694 = vunpack.c.0.s8 %v5693
        %v5695 = vlaneseq
        %v5696 = vshrl.u32 %v5695, 7
        %v5697 = vsub.s32 %v5694, %v5696
        %v5698 = vrot.slane %v5682, %v5697
        %v5700 = vunpack.c.l.s4 1966171168
        %v5701 = vunpack.c.0.s8 %v5700
        %v5702 = vlaneseq
        %v5703 = vshrl.u32 %v5702, 7
        %v5704 = vsub.s32 %v5701, %v5703
        %v5705 = vrot.slane %v5683, %v5704
        %v5707 = vunpack.c.l.s4 1966171168
        %v5708 = vunpack.c.0.s8 %v5707
        %v5709 = vlaneseq
        %v5710 = vshrl.u32 %v5709, 7
        %v5711 = vsub.s32 %v5708, %v5710
        %v5712 = vrot.slane %v5684, %v5711
        %v5713 = vcombine.low %v5691, %v5698
        %v5714 = vcombine.low %v5705, %v5712
        %v5716 = vunpack.c.l.s4 1966171168
        %v5717 = vunpack.c.0.s8 %v5716
        %v5718 = vlaneseq
        %v5719 = vshrl.u32 %v5718, 7
        %v5720 = vsub.s32 %v5717, %v5719
        %v5721 = vrot.slane %v5713, %v5720
        %v5723 = vunpack.c.l.s4 1966171168
        %v5724 = vunpack.c.0.s8 %v5723
        %v5725 = vlaneseq
        %v5726 = vshrl.u32 %v5725, 7
        %v5727 = vsub.s32 %v5724, %v5726
        %v5728 = vrot.slane %v5714, %v5727
        %v5729 = vcombine.low %v5721, %v5728
        %v5730 = vcombine.low %v5187, %v5191
        %v5731 = vcombine.low %v5195, %v5199
        %v5732 = vcombine.low %v5203, %v5207
        %v5733 = vcombine.low %v5211, %v5215
        %v5735 = vunpack.c.l.s4 1966171168
        %v5736 = vunpack.c.0.s8 %v5735
        %v5737 = vlaneseq
        %v5738 = vshrl.u32 %v5737, 7
        %v5739 = vsub.s32 %v5736, %v5738
        %v5740 = vrot.slane %v5730, %v5739
        %v5742 = vunpack.c.l.s4 1966171168
        %v5743 = vunpack.c.0.s8 %v5742
        %v5744 = vlaneseq
        %v5745 = vshrl.u32 %v5744, 7
        %v5746 = vsub.s32 %v5743, %v5745
        %v5747 = vrot.slane %v5731, %v5746
        %v5749 = vunpack.c.l.s4 1966171168
        %v5750 = vunpack.c.0.s8 %v5749
        %v5751 = vlaneseq
        %v5752 = vshrl.u32 %v5751, 7
        %v5753 = vsub.s32 %v5750, %v5752
        %v5754 = vrot.slane %v5732, %v5753
        %v5756 = vunpack.c.l.s4 1966171168
        %v5757 = vunpack.c.0.s8 %v5756
        %v5758 = vlaneseq
        %v5759 = vshrl.u32 %v5758, 7
        %v5760 = vsub.s32 %v5757, %v5759
        %v5761 = vrot.slane %v5733, %v5760
        %v5762 = vcombine.low %v5740, %v5747
        %v5763 = vcombine.low %v5754, %v5761
        %v5765 = vunpack.c.l.s4 1966171168
        %v5766 = vunpack.c.0.s8 %v5765
        %v5767 = vlaneseq
        %v5768 = vshrl.u32 %v5767, 7
        %v5769 = vsub.s32 %v5766, %v5768
        %v5770 = vrot.slane %v5762, %v5769
        %v5772 = vunpack.c.l.s4 1966171168
        %v5773 = vunpack.c.0.s8 %v5772
        %v5774 = vlaneseq
        %v5775 = vshrl.u32 %v5774, 7
        %v5776 = vsub.s32 %v5773, %v5775
        %v5777 = vrot.slane %v5763, %v5776
        %v5778 = vcombine.low %v5770, %v5777
        %v5779 = vcombine.low %v5219, %v5223
        %v5780 = vcombine.low %v5227, %v5231
        %v5781 = vcombine.low %v5235, %v5239
        %v5782 = vcombine.low %v5243, %v5247
        %v5784 = vunpack.c.l.s4 1966171168
        %v5785 = vunpack.c.0.s8 %v5784
        %v5786 = vlaneseq
        %v5787 = vshrl.u32 %v5786, 7
        %v5788 = vsub.s32 %v5785, %v5787
        %v5789 = vrot.slane %v5779, %v5788
        %v5791 = vunpack.c.l.s4 1966171168
        %v5792 = vunpack.c.0.s8 %v5791
        %v5793 = vlaneseq
        %v5794 = vshrl.u32 %v5793, 7
        %v5795 = vsub.s32 %v5792, %v5794
        %v5796 = vrot.slane %v5780, %v5795
        %v5798 = vunpack.c.l.s4 1966171168
        %v5799 = vunpack.c.0.s8 %v5798
        %v5800 = vlaneseq
        %v5801 = vshrl.u32 %v5800, 7
        %v5802 = vsub.s32 %v5799, %v5801
        %v5803 = vrot.slane %v5781, %v5802
        %v5805 = vunpack.c.l.s4 1966171168
        %v5806 = vunpack.c.0.s8 %v5805
        %v5807 = vlaneseq
        %v5808 = vshrl.u32 %v5807, 7
        %v5809 = vsub.s32 %v5806, %v5808
        %v5810 = vrot.slane %v5782, %v5809
        %v5811 = vcombine.low %v5789, %v5796
        %v5812 = vcombine.low %v5803, %v5810
        %v5814 = vunpack.c.l.s4 1966171168
        %v5815 = vunpack.c.0.s8 %v5814
        %v5816 = vlaneseq
        %v5817 = vshrl.u32 %v5816, 7
        %v5818 = vsub.s32 %v5815, %v5817
        %v5819 = vrot.slane %v5811, %v5818
        %v5821 = vunpack.c.l.s4 1966171168
        %v5822 = vunpack.c.0.s8 %v5821
        %v5823 = vlaneseq
        %v5824 = vshrl.u32 %v5823, 7
        %v5825 = vsub.s32 %v5822, %v5824
        %v5826 = vrot.slane %v5812, %v5825
        %v5827 = vcombine.low %v5819, %v5826
        %v5828 = vcombine.low %v5251, %v5255
        %v5829 = vcombine.low %v5259, %v5263
        %v5830 = vcombine.low %v5267, %v5271
        %v5831 = vcombine.low %v5275, %v5279
        %v5833 = vunpack.c.l.s4 1966171168
        %v5834 = vunpack.c.0.s8 %v5833
        %v5835 = vlaneseq
        %v5836 = vshrl.u32 %v5835, 7
        %v5837 = vsub.s32 %v5834, %v5836
        %v5838 = vrot.slane %v5828, %v5837
        %v5840 = vunpack.c.l.s4 1966171168
        %v5841 = vunpack.c.0.s8 %v5840
        %v5842 = vlaneseq
        %v5843 = vshrl.u32 %v5842, 7
        %v5844 = vsub.s32 %v5841, %v5843
        %v5845 = vrot.slane %v5829, %v5844
        %v5847 = vunpack.c.l.s4 1966171168
        %v5848 = vunpack.c.0.s8 %v5847
        %v5849 = vlaneseq
        %v5850 = vshrl.u32 %v5849, 7
        %v5851 = vsub.s32 %v5848, %v5850
        %v5852 = vrot.slane %v5830, %v5851
        %v5854 = vunpack.c.l.s4 1966171168
        %v5855 = vunpack.c.0.s8 %v5854
        %v5856 = vlaneseq
        %v5857 = vshrl.u32 %v5856, 7
        %v5858 = vsub.s32 %v5855, %v5857
        %v5859 = vrot.slane %v5831, %v5858
        %v5860 = vcombine.low %v5838, %v5845
        %v5861 = vcombine.low %v5852, %v5859
        %v5863 = vunpack.c.l.s4 1966171168
        %v5864 = vunpack.c.0.s8 %v5863
        %v5865 = vlaneseq
        %v5866 = vshrl.u32 %v5865, 7
        %v5867 = vsub.s32 %v5864, %v5866
        %v5868 = vrot.slane %v5860, %v5867
        %v5870 = vunpack.c.l.s4 1966171168
        %v5871 = vunpack.c.0.s8 %v5870
        %v5872 = vlaneseq
        %v5873 = vshrl.u32 %v5872, 7
        %v5874 = vsub.s32 %v5871, %v5873
        %v5875 = vrot.slane %v5861, %v5874
        %v5876 = vcombine.low %v5868, %v5875
        %v5877 = vcombine.low %v5283, %v5287
        %v5878 = vcombine.low %v5291, %v5295
        %v5879 = vcombine.low %v5299, %v5303
        %v5880 = vcombine.low %v5307, %v5311
        %v5882 = vunpack.c.l.s4 1966171168
        %v5883 = vunpack.c.0.s8 %v5882
        %v5884 = vlaneseq
        %v5885 = vshrl.u32 %v5884, 7
        %v5886 = vsub.s32 %v5883, %v5885
        %v5887 = vrot.slane %v5877, %v5886
        %v5889 = vunpack.c.l.s4 1966171168
        %v5890 = vunpack.c.0.s8 %v5889
        %v5891 = vlaneseq
        %v5892 = vshrl.u32 %v5891, 7
        %v5893 = vsub.s32 %v5890, %v5892
        %v5894 = vrot.slane %v5878, %v5893
        %v5896 = vunpack.c.l.s4 1966171168
        %v5897 = vunpack.c.0.s8 %v5896
        %v5898 = vlaneseq
        %v5899 = vshrl.u32 %v5898, 7
        %v5900 = vsub.s32 %v5897, %v5899
        %v5901 = vrot.slane %v5879, %v5900
        %v5903 = vunpack.c.l.s4 1966171168
        %v5904 = vunpack.c.0.s8 %v5903
        %v5905 = vlaneseq
        %v5906 = vshrl.u32 %v5905, 7
        %v5907 = vsub.s32 %v5904, %v5906
        %v5908 = vrot.slane %v5880, %v5907
        %v5909 = vcombine.low %v5887, %v5894
        %v5910 = vcombine.low %v5901, %v5908
        %v5912 = vunpack.c.l.s4 1966171168
        %v5913 = vunpack.c.0.s8 %v5912
        %v5914 = vlaneseq
        %v5915 = vshrl.u32 %v5914, 7
        %v5916 = vsub.s32 %v5913, %v5915
        %v5917 = vrot.slane %v5909, %v5916
        %v5919 = vunpack.c.l.s4 1966171168
        %v5920 = vunpack.c.0.s8 %v5919
        %v5921 = vlaneseq
        %v5922 = vshrl.u32 %v5921, 7
        %v5923 = vsub.s32 %v5920, %v5922
        %v5924 = vrot.slane %v5910, %v5923
        %v5925 = vcombine.low %v5917, %v5924
        %v5926 = vcombine.low %v5315, %v5319
        %v5927 = vcombine.low %v5323, %v5327
        %v5928 = vcombine.low %v5331, %v5335
        %v5929 = vcombine.low %v5339, %v5343
        %v5931 = vunpack.c.l.s4 1966171168
        %v5932 = vunpack.c.0.s8 %v5931
        %v5933 = vlaneseq
        %v5934 = vshrl.u32 %v5933, 7
        %v5935 = vsub.s32 %v5932, %v5934
        %v5936 = vrot.slane %v5926, %v5935
        %v5938 = vunpack.c.l.s4 1966171168
        %v5939 = vunpack.c.0.s8 %v5938
        %v5940 = vlaneseq
        %v5941 = vshrl.u32 %v5940, 7
        %v5942 = vsub.s32 %v5939, %v5941
        %v5943 = vrot.slane %v5927, %v5942
        %v5945 = vunpack.c.l.s4 1966171168
        %v5946 = vunpack.c.0.s8 %v5945
        %v5947 = vlaneseq
        %v5948 = vshrl.u32 %v5947, 7
        %v5949 = vsub.s32 %v5946, %v5948
        %v5950 = vrot.slane %v5928, %v5949
        %v5952 = vunpack.c.l.s4 1966171168
        %v5953 = vunpack.c.0.s8 %v5952
        %v5954 = vlaneseq
        %v5955 = vshrl.u32 %v5954, 7
        %v5956 = vsub.s32 %v5953, %v5955
        %v5957 = vrot.slane %v5929, %v5956
        %v5958 = vcombine.low %v5936, %v5943
        %v5959 = vcombine.low %v5950, %v5957
        %v5961 = vunpack.c.l.s4 1966171168
        %v5962 = vunpack.c.0.s8 %v5961
        %v5963 = vlaneseq
        %v5964 = vshrl.u32 %v5963, 7
        %v5965 = vsub.s32 %v5962, %v5964
        %v5966 = vrot.slane %v5958, %v5965
        %v5968 = vunpack.c.l.s4 1966171168
        %v5969 = vunpack.c.0.s8 %v5968
        %v5970 = vlaneseq
        %v5971 = vshrl.u32 %v5970, 7
        %v5972 = vsub.s32 %v5969, %v5971
        %v5973 = vrot.slane %v5959, %v5972
        %v5974 = vcombine.low %v5966, %v5973
        %v5975 = vcombine.low %v5347, %v5351
        %v5976 = vcombine.low %v5355, %v5359
        %v5977 = vcombine.low %v5363, %v5367
        %v5978 = vcombine.low %v5371, %v5375
        %v5980 = vunpack.c.l.s4 1966171168
        %v5981 = vunpack.c.0.s8 %v5980
        %v5982 = vlaneseq
        %v5983 = vshrl.u32 %v5982, 7
        %v5984 = vsub.s32 %v5981, %v5983
        %v5985 = vrot.slane %v5975, %v5984
        %v5987 = vunpack.c.l.s4 1966171168
        %v5988 = vunpack.c.0.s8 %v5987
        %v5989 = vlaneseq
        %v5990 = vshrl.u32 %v5989, 7
        %v5991 = vsub.s32 %v5988, %v5990
        %v5992 = vrot.slane %v5976, %v5991
        %v5994 = vunpack.c.l.s4 1966171168
        %v5995 = vunpack.c.0.s8 %v5994
        %v5996 = vlaneseq
        %v5997 = vshrl.u32 %v5996, 7
        %v5998 = vsub.s32 %v5995, %v5997
        %v5999 = vrot.slane %v5977, %v5998
        %v6001 = vunpack.c.l.s4 1966171168
        %v6002 = vunpack.c.0.s8 %v6001
        %v6003 = vlaneseq
        %v6004 = vshrl.u32 %v6003, 7
        %v6005 = vsub.s32 %v6002, %v6004
        %v6006 = vrot.slane %v5978, %v6005
        %v6007 = vcombine.low %v5985, %v5992
        %v6008 = vcombine.low %v5999, %v6006
        %v6010 = vunpack.c.l.s4 1966171168
        %v6011 = vunpack.c.0.s8 %v6010
        %v6012 = vlaneseq
        %v6013 = vshrl.u32 %v6012, 7
        %v6014 = vsub.s32 %v6011, %v6013
        %v6015 = vrot.slane %v6007, %v6014
        %v6017 = vunpack.c.l.s4 1966171168
        %v6018 = vunpack.c.0.s8 %v6017
        %v6019 = vlaneseq
        %v6020 = vshrl.u32 %v6019, 7
        %v6021 = vsub.s32 %v6018, %v6020
        %v6022 = vrot.slane %v6008, %v6021
        %v6023 = vcombine.low %v6015, %v6022
        %v6024 = vcombine.low %v5379, %v5383
        %v6025 = vcombine.low %v5387, %v5391
        %v6026 = vcombine.low %v5395, %v5399
        %v6027 = vcombine.low %v5403, %v5407
        %v6029 = vunpack.c.l.s4 1966171168
        %v6030 = vunpack.c.0.s8 %v6029
        %v6031 = vlaneseq
        %v6032 = vshrl.u32 %v6031, 7
        %v6033 = vsub.s32 %v6030, %v6032
        %v6034 = vrot.slane %v6024, %v6033
        %v6036 = vunpack.c.l.s4 1966171168
        %v6037 = vunpack.c.0.s8 %v6036
        %v6038 = vlaneseq
        %v6039 = vshrl.u32 %v6038, 7
        %v6040 = vsub.s32 %v6037, %v6039
        %v6041 = vrot.slane %v6025, %v6040
        %v6043 = vunpack.c.l.s4 1966171168
        %v6044 = vunpack.c.0.s8 %v6043
        %v6045 = vlaneseq
        %v6046 = vshrl.u32 %v6045, 7
        %v6047 = vsub.s32 %v6044, %v6046
        %v6048 = vrot.slane %v6026, %v6047
        %v6050 = vunpack.c.l.s4 1966171168
        %v6051 = vunpack.c.0.s8 %v6050
        %v6052 = vlaneseq
        %v6053 = vshrl.u32 %v6052, 7
        %v6054 = vsub.s32 %v6051, %v6053
        %v6055 = vrot.slane %v6027, %v6054
        %v6056 = vcombine.low %v6034, %v6041
        %v6057 = vcombine.low %v6048, %v6055
        %v6059 = vunpack.c.l.s4 1966171168
        %v6060 = vunpack.c.0.s8 %v6059
        %v6061 = vlaneseq
        %v6062 = vshrl.u32 %v6061, 7
        %v6063 = vsub.s32 %v6060, %v6062
        %v6064 = vrot.slane %v6056, %v6063
        %v6066 = vunpack.c.l.s4 1966171168
        %v6067 = vunpack.c.0.s8 %v6066
        %v6068 = vlaneseq
        %v6069 = vshrl.u32 %v6068, 7
        %v6070 = vsub.s32 %v6067, %v6069
        %v6071 = vrot.slane %v6057, %v6070
        %v6072 = vcombine.low %v6064, %v6071
        %v6073 = vcombine.low %v5411, %v5415
        %v6074 = vcombine.low %v5419, %v5423
        %v6075 = vcombine.low %v5427, %v5431
        %v6076 = vcombine.low %v5435, %v5439
        %v6078 = vunpack.c.l.s4 1966171168
        %v6079 = vunpack.c.0.s8 %v6078
        %v6080 = vlaneseq
        %v6081 = vshrl.u32 %v6080, 7
        %v6082 = vsub.s32 %v6079, %v6081
        %v6083 = vrot.slane %v6073, %v6082
        %v6085 = vunpack.c.l.s4 1966171168
        %v6086 = vunpack.c.0.s8 %v6085
        %v6087 = vlaneseq
        %v6088 = vshrl.u32 %v6087, 7
        %v6089 = vsub.s32 %v6086, %v6088
        %v6090 = vrot.slane %v6074, %v6089
        %v6092 = vunpack.c.l.s4 1966171168
        %v6093 = vunpack.c.0.s8 %v6092
        %v6094 = vlaneseq
        %v6095 = vshrl.u32 %v6094, 7
        %v6096 = vsub.s32 %v6093, %v6095
        %v6097 = vrot.slane %v6075, %v6096
        %v6099 = vunpack.c.l.s4 1966171168
        %v6100 = vunpack.c.0.s8 %v6099
        %v6101 = vlaneseq
        %v6102 = vshrl.u32 %v6101, 7
        %v6103 = vsub.s32 %v6100, %v6102
        %v6104 = vrot.slane %v6076, %v6103
        %v6105 = vcombine.low %v6083, %v6090
        %v6106 = vcombine.low %v6097, %v6104
        %v6108 = vunpack.c.l.s4 1966171168
        %v6109 = vunpack.c.0.s8 %v6108
        %v6110 = vlaneseq
        %v6111 = vshrl.u32 %v6110, 7
        %v6112 = vsub.s32 %v6109, %v6111
        %v6113 = vrot.slane %v6105, %v6112
        %v6115 = vunpack.c.l.s4 1966171168
        %v6116 = vunpack.c.0.s8 %v6115
        %v6117 = vlaneseq
        %v6118 = vshrl.u32 %v6117, 7
        %v6119 = vsub.s32 %v6116, %v6118
        %v6120 = vrot.slane %v6106, %v6119
        %v6121 = vcombine.low %v6113, %v6120
        %v6122 = vcombine.low %v5443, %v5447
        %v6123 = vcombine.low %v5451, %v5455
        %v6124 = vcombine.low %v5459, %v5463
        %v6125 = vcombine.low %v5467, %v5471
        %v6127 = vunpack.c.l.s4 1966171168
        %v6128 = vunpack.c.0.s8 %v6127
        %v6129 = vlaneseq
        %v6130 = vshrl.u32 %v6129, 7
        %v6131 = vsub.s32 %v6128, %v6130
        %v6132 = vrot.slane %v6122, %v6131
        %v6134 = vunpack.c.l.s4 1966171168
        %v6135 = vunpack.c.0.s8 %v6134
        %v6136 = vlaneseq
        %v6137 = vshrl.u32 %v6136, 7
        %v6138 = vsub.s32 %v6135, %v6137
        %v6139 = vrot.slane %v6123, %v6138
        %v6141 = vunpack.c.l.s4 1966171168
        %v6142 = vunpack.c.0.s8 %v6141
        %v6143 = vlaneseq
        %v6144 = vshrl.u32 %v6143, 7
        %v6145 = vsub.s32 %v6142, %v6144
        %v6146 = vrot.slane %v6124, %v6145
        %v6148 = vunpack.c.l.s4 1966171168
        %v6149 = vunpack.c.0.s8 %v6148
        %v6150 = vlaneseq
        %v6151 = vshrl.u32 %v6150, 7
        %v6152 = vsub.s32 %v6149, %v6151
        %v6153 = vrot.slane %v6125, %v6152
        %v6154 = vcombine.low %v6132, %v6139
        %v6155 = vcombine.low %v6146, %v6153
        %v6157 = vunpack.c.l.s4 1966171168
        %v6158 = vunpack.c.0.s8 %v6157
        %v6159 = vlaneseq
        %v6160 = vshrl.u32 %v6159, 7
        %v6161 = vsub.s32 %v6158, %v6160
        %v6162 = vrot.slane %v6154, %v6161
        %v6164 = vunpack.c.l.s4 1966171168
        %v6165 = vunpack.c.0.s8 %v6164
        %v6166 = vlaneseq
        %v6167 = vshrl.u32 %v6166, 7
        %v6168 = vsub.s32 %v6165, %v6167
        %v6169 = vrot.slane %v6155, %v6168
        %v6170 = vcombine.low %v6162, %v6169
        %v6171 = vcombine.low %v5475, %v5479
        %v6172 = vcombine.low %v5483, %v5487
        %v6173 = vcombine.low %v5491, %v5495
        %v6174 = vcombine.low %v5499, %v5503
        %v6176 = vunpack.c.l.s4 1966171168
        %v6177 = vunpack.c.0.s8 %v6176
        %v6178 = vlaneseq
        %v6179 = vshrl.u32 %v6178, 7
        %v6180 = vsub.s32 %v6177, %v6179
        %v6181 = vrot.slane %v6171, %v6180
        %v6183 = vunpack.c.l.s4 1966171168
        %v6184 = vunpack.c.0.s8 %v6183
        %v6185 = vlaneseq
        %v6186 = vshrl.u32 %v6185, 7
        %v6187 = vsub.s32 %v6184, %v6186
        %v6188 = vrot.slane %v6172, %v6187
        %v6190 = vunpack.c.l.s4 1966171168
        %v6191 = vunpack.c.0.s8 %v6190
        %v6192 = vlaneseq
        %v6193 = vshrl.u32 %v6192, 7
        %v6194 = vsub.s32 %v6191, %v6193
        %v6195 = vrot.slane %v6173, %v6194
        %v6197 = vunpack.c.l.s4 1966171168
        %v6198 = vunpack.c.0.s8 %v6197
        %v6199 = vlaneseq
        %v6200 = vshrl.u32 %v6199, 7
        %v6201 = vsub.s32 %v6198, %v6200
        %v6202 = vrot.slane %v6174, %v6201
        %v6203 = vcombine.low %v6181, %v6188
        %v6204 = vcombine.low %v6195, %v6202
        %v6206 = vunpack.c.l.s4 1966171168
        %v6207 = vunpack.c.0.s8 %v6206
        %v6208 = vlaneseq
        %v6209 = vshrl.u32 %v6208, 7
        %v6210 = vsub.s32 %v6207, %v6209
        %v6211 = vrot.slane %v6203, %v6210
        %v6213 = vunpack.c.l.s4 1966171168
        %v6214 = vunpack.c.0.s8 %v6213
        %v6215 = vlaneseq
        %v6216 = vshrl.u32 %v6215, 7
        %v6217 = vsub.s32 %v6214, %v6216
        %v6218 = vrot.slane %v6204, %v6217
        %v6219 = vcombine.low %v6211, %v6218
        %v6220 = vcombine.low %v5507, %v5511
        %v6221 = vcombine.low %v5515, %v5519
        %v6222 = vcombine.low %v5523, %v5527
        %v6223 = vcombine.low %v5531, %v5535
        %v6225 = vunpack.c.l.s4 1966171168
        %v6226 = vunpack.c.0.s8 %v6225
        %v6227 = vlaneseq
        %v6228 = vshrl.u32 %v6227, 7
        %v6229 = vsub.s32 %v6226, %v6228
        %v6230 = vrot.slane %v6220, %v6229
        %v6232 = vunpack.c.l.s4 1966171168
        %v6233 = vunpack.c.0.s8 %v6232
        %v6234 = vlaneseq
        %v6235 = vshrl.u32 %v6234, 7
        %v6236 = vsub.s32 %v6233, %v6235
        %v6237 = vrot.slane %v6221, %v6236
        %v6239 = vunpack.c.l.s4 1966171168
        %v6240 = vunpack.c.0.s8 %v6239
        %v6241 = vlaneseq
        %v6242 = vshrl.u32 %v6241, 7
        %v6243 = vsub.s32 %v6240, %v6242
        %v6244 = vrot.slane %v6222, %v6243
        %v6246 = vunpack.c.l.s4 1966171168
        %v6247 = vunpack.c.0.s8 %v6246
        %v6248 = vlaneseq
        %v6249 = vshrl.u32 %v6248, 7
        %v6250 = vsub.s32 %v6247, %v6249
        %v6251 = vrot.slane %v6223, %v6250
        %v6252 = vcombine.low %v6230, %v6237
        %v6253 = vcombine.low %v6244, %v6251
        %v6255 = vunpack.c.l.s4 1966171168
        %v6256 = vunpack.c.0.s8 %v6255
        %v6257 = vlaneseq
        %v6258 = vshrl.u32 %v6257, 7
        %v6259 = vsub.s32 %v6256, %v6258
        %v6260 = vrot.slane %v6252, %v6259
        %v6262 = vunpack.c.l.s4 1966171168
        %v6263 = vunpack.c.0.s8 %v6262
        %v6264 = vlaneseq
        %v6265 = vshrl.u32 %v6264, 7
        %v6266 = vsub.s32 %v6263, %v6265
        %v6267 = vrot.slane %v6253, %v6266
        %v6268 = vcombine.low %v6260, %v6267
        %v6269 = vcombine.low %v5539, %v5543
        %v6270 = vcombine.low %v5547, %v5551
        %v6271 = vcombine.low %v5555, %v5559
        %v6272 = vcombine.low %v5563, %v5567
        %v6274 = vunpack.c.l.s4 1966171168
        %v6275 = vunpack.c.0.s8 %v6274
        %v6276 = vlaneseq
        %v6277 = vshrl.u32 %v6276, 7
        %v6278 = vsub.s32 %v6275, %v6277
        %v6279 = vrot.slane %v6269, %v6278
        %v6281 = vunpack.c.l.s4 1966171168
        %v6282 = vunpack.c.0.s8 %v6281
        %v6283 = vlaneseq
        %v6284 = vshrl.u32 %v6283, 7
        %v6285 = vsub.s32 %v6282, %v6284
        %v6286 = vrot.slane %v6270, %v6285
        %v6288 = vunpack.c.l.s4 1966171168
        %v6289 = vunpack.c.0.s8 %v6288
        %v6290 = vlaneseq
        %v6291 = vshrl.u32 %v6290, 7
        %v6292 = vsub.s32 %v6289, %v6291
        %v6293 = vrot.slane %v6271, %v6292
        %v6295 = vunpack.c.l.s4 1966171168
        %v6296 = vunpack.c.0.s8 %v6295
        %v6297 = vlaneseq
        %v6298 = vshrl.u32 %v6297, 7
        %v6299 = vsub.s32 %v6296, %v6298
        %v6300 = vrot.slane %v6272, %v6299
        %v6301 = vcombine.low %v6279, %v6286
        %v6302 = vcombine.low %v6293, %v6300
        %v6304 = vunpack.c.l.s4 1966171168
        %v6305 = vunpack.c.0.s8 %v6304
        %v6306 = vlaneseq
        %v6307 = vshrl.u32 %v6306, 7
        %v6308 = vsub.s32 %v6305, %v6307
        %v6309 = vrot.slane %v6301, %v6308
        %v6311 = vunpack.c.l.s4 1966171168
        %v6312 = vunpack.c.0.s8 %v6311
        %v6313 = vlaneseq
        %v6314 = vshrl.u32 %v6313, 7
        %v6315 = vsub.s32 %v6312, %v6314
        %v6316 = vrot.slane %v6302, %v6315
        %v6317 = vcombine.low %v6309, %v6316
        %v6318 = vcombine.low %v5571, %v5575
        %v6319 = vcombine.low %v5579, %v5583
        %v6320 = vcombine.low %v5587, %v5591
        %v6321 = vcombine.low %v5595, %v5599
        %v6323 = vunpack.c.l.s4 1966171168
        %v6324 = vunpack.c.0.s8 %v6323
        %v6325 = vlaneseq
        %v6326 = vshrl.u32 %v6325, 7
        %v6327 = vsub.s32 %v6324, %v6326
        %v6328 = vrot.slane %v6318, %v6327
        %v6330 = vunpack.c.l.s4 1966171168
        %v6331 = vunpack.c.0.s8 %v6330
        %v6332 = vlaneseq
        %v6333 = vshrl.u32 %v6332, 7
        %v6334 = vsub.s32 %v6331, %v6333
        %v6335 = vrot.slane %v6319, %v6334
        %v6337 = vunpack.c.l.s4 1966171168
        %v6338 = vunpack.c.0.s8 %v6337
        %v6339 = vlaneseq
        %v6340 = vshrl.u32 %v6339, 7
        %v6341 = vsub.s32 %v6338, %v6340
        %v6342 = vrot.slane %v6320, %v6341
        %v6344 = vunpack.c.l.s4 1966171168
        %v6345 = vunpack.c.0.s8 %v6344
        %v6346 = vlaneseq
        %v6347 = vshrl.u32 %v6346, 7
        %v6348 = vsub.s32 %v6345, %v6347
        %v6349 = vrot.slane %v6321, %v6348
        %v6350 = vcombine.low %v6328, %v6335
        %v6351 = vcombine.low %v6342, %v6349
        %v6353 = vunpack.c.l.s4 1966171168
        %v6354 = vunpack.c.0.s8 %v6353
        %v6355 = vlaneseq
        %v6356 = vshrl.u32 %v6355, 7
        %v6357 = vsub.s32 %v6354, %v6356
        %v6358 = vrot.slane %v6350, %v6357
        %v6360 = vunpack.c.l.s4 1966171168
        %v6361 = vunpack.c.0.s8 %v6360
        %v6362 = vlaneseq
        %v6363 = vshrl.u32 %v6362, 7
        %v6364 = vsub.s32 %v6361, %v6363
        %v6365 = vrot.slane %v6351, %v6364
        %v6366 = vcombine.low %v6358, %v6365
        %v6367 = vcombine.low %v5603, %v5607
        %v6368 = vcombine.low %v5611, %v5615
        %v6369 = vcombine.low %v5619, %v5623
        %v6370 = vcombine.low %v5627, %v5631
        %v6372 = vunpack.c.l.s4 1966171168
        %v6373 = vunpack.c.0.s8 %v6372
        %v6374 = vlaneseq
        %v6375 = vshrl.u32 %v6374, 7
        %v6376 = vsub.s32 %v6373, %v6375
        %v6377 = vrot.slane %v6367, %v6376
        %v6379 = vunpack.c.l.s4 1966171168
        %v6380 = vunpack.c.0.s8 %v6379
        %v6381 = vlaneseq
        %v6382 = vshrl.u32 %v6381, 7
        %v6383 = vsub.s32 %v6380, %v6382
        %v6384 = vrot.slane %v6368, %v6383
        %v6386 = vunpack.c.l.s4 1966171168
        %v6387 = vunpack.c.0.s8 %v6386
        %v6388 = vlaneseq
        %v6389 = vshrl.u32 %v6388, 7
        %v6390 = vsub.s32 %v6387, %v6389
        %v6391 = vrot.slane %v6369, %v6390
        %v6393 = vunpack.c.l.s4 1966171168
        %v6394 = vunpack.c.0.s8 %v6393
        %v6395 = vlaneseq
        %v6396 = vshrl.u32 %v6395, 7
        %v6397 = vsub.s32 %v6394, %v6396
        %v6398 = vrot.slane %v6370, %v6397
        %v6399 = vcombine.low %v6377, %v6384
        %v6400 = vcombine.low %v6391, %v6398
        %v6402 = vunpack.c.l.s4 1966171168
        %v6403 = vunpack.c.0.s8 %v6402
        %v6404 = vlaneseq
        %v6405 = vshrl.u32 %v6404, 7
        %v6406 = vsub.s32 %v6403, %v6405
        %v6407 = vrot.slane %v6399, %v6406
        %v6409 = vunpack.c.l.s4 1966171168
        %v6410 = vunpack.c.0.s8 %v6409
        %v6411 = vlaneseq
        %v6412 = vshrl.u32 %v6411, 7
        %v6413 = vsub.s32 %v6410, %v6412
        %v6414 = vrot.slane %v6400, %v6413
        %v6415 = vcombine.low %v6407, %v6414
        %6416 = vset.pattern.permute.xlu0 0
        %6417 = vperm.xlu0 %6416, %v5680
        %v6418 = vpop.permute.xlu0 %6417
        %6419 = vset.pattern.permute.xlu0 0
        %6420 = vperm.xlu0 %6419, %v5729
        %v6421 = vpop.permute.xlu0 %6420
        %6422 = vset.pattern.permute.xlu0 0
        %6423 = vperm.xlu0 %6422, %v5778
        %v6424 = vpop.permute.xlu0 %6423
        %6425 = vset.pattern.permute.xlu0 0
        %6426 = vperm.xlu0 %6425, %v5827
        %v6427 = vpop.permute.xlu0 %6426
        %6428 = vset.pattern.permute.xlu0 0
        %6429 = vperm.xlu0 %6428, %v5876
        %v6430 = vpop.permute.xlu0 %6429
        %6431 = vset.pattern.permute.xlu0 0
        %6432 = vperm.xlu0 %6431, %v5925
        %v6433 = vpop.permute.xlu0 %6432
        %6434 = vset.pattern.permute.xlu0 0
        %6435 = vperm.xlu0 %6434, %v5974
        %v6436 = vpop.permute.xlu0 %6435
        %6437 = vset.pattern.permute.xlu0 0
        %6438 = vperm.xlu0 %6437, %v6023
        %v6439 = vpop.permute.xlu0 %6438
        %6440 = vset.pattern.permute.xlu0 0
        %6441 = vperm.xlu0 %6440, %v6072
        %v6442 = vpop.permute.xlu0 %6441
        %6443 = vset.pattern.permute.xlu0 0
        %6444 = vperm.xlu0 %6443, %v6121
        %v6445 = vpop.permute.xlu0 %6444
        %6446 = vset.pattern.permute.xlu0 0
        %6447 = vperm.xlu0 %6446, %v6170
        %v6448 = vpop.permute.xlu0 %6447
        %6449 = vset.pattern.permute.xlu0 0
        %6450 = vperm.xlu0 %6449, %v6219
        %v6451 = vpop.permute.xlu0 %6450
        %6452 = vset.pattern.permute.xlu0 0
        %6453 = vperm.xlu0 %6452, %v6268
        %v6454 = vpop.permute.xlu0 %6453
        %6455 = vset.pattern.permute.xlu0 0
        %6456 = vperm.xlu0 %6455, %v6317
        %v6457 = vpop.permute.xlu0 %6456
        %6458 = vset.pattern.permute.xlu0 0
        %6459 = vperm.xlu0 %6458, %v6366
        %v6460 = vpop.permute.xlu0 %6459
        %6461 = vset.pattern.permute.xlu0 0
        %6462 = vperm.xlu0 %6461, %v6415
        %v6463 = vpop.permute.xlu0 %6462
        %v6464 = vlaneseq
        %v6465 = vand.u32 %v6464, 127
        %v6466 = vlaneseq
        %v6467 = vshrl.u32 %v6466, 7
        %v6468 = vsub.s32 %v6465, %v6467
        %v6469 = vrot.slane %v6418, %v6468
        %v6470 = vadd.s32 %v6465, 4294967288
        %v6471 = vlaneseq
        %v6472 = vshrl.u32 %v6471, 7
        %v6473 = vsub.s32 %v6470, %v6472
        %v6474 = vrot.slane %v6421, %v6473
        %vm6475 = vcmask 130112
        %v6476 = vsel %vm6475, %v6474, %v6469
        %v6477 = vadd.s32 %v6465, 4294967280
        %v6478 = vlaneseq
        %v6479 = vshrl.u32 %v6478, 7
        %v6480 = vsub.s32 %v6477, %v6479
        %v6481 = vrot.slane %v6424, %v6480
        %vm6482 = vcmask 195712
        %v6483 = vsel %vm6482, %v6481, %v6476
        %v6484 = vadd.s32 %v6465, 4294967272
        %v6485 = vlaneseq
        %v6486 = vshrl.u32 %v6485, 7
        %v6487 = vsub.s32 %v6484, %v6486
        %v6488 = vrot.slane %v6427, %v6487
        %vm6489 = vcmask 261312
        %v6490 = vsel %vm6489, %v6488, %v6483
        %v6491 = vadd.s32 %v6465, 4294967264
        %v6492 = vlaneseq
        %v6493 = vshrl.u32 %v6492, 7
        %v6494 = vsub.s32 %v6491, %v6493
        %v6495 = vrot.slane %v6430, %v6494
        %vm6496 = vcmask 326912
        %v6497 = vsel %vm6496, %v6495, %v6490
        %v6498 = vadd.s32 %v6465, 4294967256
        %v6499 = vlaneseq
        %v6500 = vshrl.u32 %v6499, 7
        %v6501 = vsub.s32 %v6498, %v6500
        %v6502 = vrot.slane %v6433, %v6501
        %vm6503 = vcmask 392512
        %v6504 = vsel %vm6503, %v6502, %v6497
        %v6505 = vadd.s32 %v6465, 4294967248
        %v6506 = vlaneseq
        %v6507 = vshrl.u32 %v6506, 7
        %v6508 = vsub.s32 %v6505, %v6507
        %v6509 = vrot.slane %v6436, %v6508
        %vm6510 = vcmask 458112
        %v6511 = vsel %vm6510, %v6509, %v6504
        %v6512 = vadd.s32 %v6465, 4294967240
        %v6513 = vlaneseq
        %v6514 = vshrl.u32 %v6513, 7
        %v6515 = vsub.s32 %v6512, %v6514
        %v6516 = vrot.slane %v6439, %v6515
        %vm6517 = vcmask 523712
        %v6518 = vsel %vm6517, %v6516, %v6511
        %v6519 = vadd.s32 %v6465, 4294967232
        %v6520 = vlaneseq
        %v6521 = vshrl.u32 %v6520, 7
        %v6522 = vsub.s32 %v6519, %v6521
        %v6523 = vrot.slane %v6442, %v6522
        %vm6524 = vcmask 589312
        %v6525 = vsel %vm6524, %v6523, %v6518
        %v6526 = vadd.s32 %v6465, 4294967224
        %v6527 = vlaneseq
        %v6528 = vshrl.u32 %v6527, 7
        %v6529 = vsub.s32 %v6526, %v6528
        %v6530 = vrot.slane %v6445, %v6529
        %vm6531 = vcmask 654912
        %v6532 = vsel %vm6531, %v6530, %v6525
        %v6533 = vadd.s32 %v6465, 4294967216
        %v6534 = vlaneseq
        %v6535 = vshrl.u32 %v6534, 7
        %v6536 = vsub.s32 %v6533, %v6535
        %v6537 = vrot.slane %v6448, %v6536
        %vm6538 = vcmask 720512
        %v6539 = vsel %vm6538, %v6537, %v6532
        %v6540 = vadd.s32 %v6465, 4294967208
        %v6541 = vlaneseq
        %v6542 = vshrl.u32 %v6541, 7
        %v6543 = vsub.s32 %v6540, %v6542
        %v6544 = vrot.slane %v6451, %v6543
        %vm6545 = vcmask 786112
        %v6546 = vsel %vm6545, %v6544, %v6539
        %v6547 = vadd.s32 %v6465, 4294967200
        %v6548 = vlaneseq
        %v6549 = vshrl.u32 %v6548, 7
        %v6550 = vsub.s32 %v6547, %v6549
        %v6551 = vrot.slane %v6454, %v6550
        %vm6552 = vcmask 851712
        %v6553 = vsel %vm6552, %v6551, %v6546
        %v6554 = vadd.s32 %v6465, 4294967192
        %v6555 = vlaneseq
        %v6556 = vshrl.u32 %v6555, 7
        %v6557 = vsub.s32 %v6554, %v6556
        %v6558 = vrot.slane %v6457, %v6557
        %vm6559 = vcmask 917312
        %v6560 = vsel %vm6559, %v6558, %v6553
        %v6561 = vadd.s32 %v6465, 4294967184
        %v6562 = vlaneseq
        %v6563 = vshrl.u32 %v6562, 7
        %v6564 = vsub.s32 %v6561, %v6563
        %v6565 = vrot.slane %v6460, %v6564
        %vm6566 = vcmask 982912
        %v6567 = vsel %vm6566, %v6565, %v6560
        %v6568 = vadd.s32 %v6465, 4294967176
        %v6569 = vlaneseq
        %v6570 = vshrl.u32 %v6569, 7
        %v6571 = vsub.s32 %v6568, %v6570
        %v6572 = vrot.slane %v6463, %v6571
        %vm6573 = vcmask 1048512
        %v6574 = vsel %vm6573, %v6572, %v6567
        %v6576 = vunpack.c.l.s4 1966171168
        %v6577 = vunpack.c.0.s8 %v6576
        %v6578 = vlaneseq
        %v6579 = vshrl.u32 %v6578, 7
        %v6580 = vsub.s32 %v6577, %v6579
        %v6581 = vrot.slane %v6574, %v6580
        %v6583 = vunpack.c.l.s4 1966171168
        %v6584 = vunpack.c.0.s8 %v6583
        %v6585 = vlaneseq
        %v6586 = vshrl.u32 %v6585, 7
        %v6587 = vsub.s32 %v6584, %v6586
        %v6588 = vrot.slane %v6581, %v6587
        %v6590 = vmin.f32 %v4863, %v6588
        %6591 = vst [vmem:[%s322] sm:$0x1] %v6590
        %s6592 = sand.u32 %s202, 1
        %s6593 = scalar_lea.sflag [#allocation4], %s6592
        %s6594 = sand.u32 %s202, 1
        %s6595 = scalar_lea.vmem [#allocation3], %s6594
        // Predicated region
        $region49: #{tpu_custom_call.1} parent=43 // pred_check
          %p6596 = pneg %p212
        $region50: #{tpu_custom_call.1} parent=43 // pred_check_branch
          %6598 = sbr.rel (%p6596) target = $region52
        $region51: #{tpu_custom_call.1} parent=43 // pred_region
          %s6600 = ssub.s32 16, 16
          %6601 = vsyncadd %s6593, %s6600
          %s6602 = sadd.s32 %s29, %s30
          %s6603 = smul.addr %s28, 3
          %s6604 = sadd.s32 %s6602, %s6603
          %s6605 = smul.addr %s6604, 16
          %s6606 = scalar_lea.hbm %s6, %s6605
          %s6608 = sshll.u32 %s6595, 4
          %s6609 = int_to_ptr.vmem [resolvable:$true] %s6608
          %6611 = dma.vmem_to_hbm [thread:$0]  %s6609, 16, %s6606, %s6593
        $region52: #{tpu_custom_call.1} parent=43 // pred_fallthru
          _
      $region44: #{tpu_custom_call.1} parent=5 // pred_fallthru
        _
      %p6612 = scmp.le.s32.totalorder 2, %s17
      // Predicated region
      $region53: #{tpu_custom_call.1} parent=5 // pred_check
        %p6613 = pneg %p6612
      $region54: #{tpu_custom_call.1} parent=5 // pred_check_branch
        %6615 = sbr.rel (%p6613) target = $region56
      $region55: #{tpu_custom_call.1} parent=5 // pred_region
        %s6616 = ssub.s32 %s17, 2
        // Predicated region
        $region57: #{tpu_custom_call.1} parent=55 // pred_check
          %p6617 = pneg %p218
        $region58: #{tpu_custom_call.1} parent=55 // pred_check_branch
          %6619 = sbr.rel (%p6617) target = $region60
        $region59: #{tpu_custom_call.1} parent=55 // pred_region
          %s6620 = sand.u32 %s203, 1
          %s6621 = scalar_lea.sflag [#allocation4], %s6620
          %s6622 = sand.u32 %s203, 1
          %s6623 = scalar_lea.vmem [#allocation3], %s6622
          %6624 = dma.done %s6621, 16
        $region60: #{tpu_custom_call.1} parent=55 // pred_fallthru
          _
      $region56: #{tpu_custom_call.1} parent=5 // pred_fallthru
        _
    $region6: #{tpu_custom_call.1} parent=1 // loop_footer
      %s21 = sadd.s32 1, %s17
    $region7: #{tpu_custom_call.1} parent=1 // loop_footer_branch
      %16 = sbr.rel target = $region3
    $region8: #{tpu_custom_call.1} parent=1 // loop_exit
      _
    %6625 = vsyncpa [#allocation4], 1
    %s6626 = scalar_lea.sflag [#allocation4], 1
    %6627 = vsyncpa %s6626, 1

</llo_original>
